<compile_context>
chip_gen: v6e
topology: v6e:2x2x1
jax: 0.10.0
libtpu: 0.0.40
codegen_flags: <defaults>
</compile_context>

<pallas_src>
import jax
import jax.numpy as jnp
from jax import lax
from jax.experimental import pallas as pl
from jax.experimental.pallas import tpu as pltpu

EPS = 1e-5


def _round_up(x, m):
    return ((x + m - 1) // m) * m


def _elu(x):
    # ELU(alpha=1): x if x > 0 else exp(x) - 1  (select, so the exp branch is safe)
    return jnp.where(x > 0, x, jnp.exp(x) - 1.0)


def _make_encoder_kernel(spec_c, spec_k, t_in, layer_cfgs):
    """Fused encoder kernel.

    Ref order: x, w_spec, b_spec, [w_dw, b_dw, w_pw, b_pw] per bac layer, out.
      x      : (R, t_in)  VMEM   rows = flattened batch*electrode
      w_spec : (spec_c, spec_k) SMEM   (BN2d folded in)
      b_spec : (spec_c,)        SMEM
      w_dw   : (cin, kd)        SMEM   (dw-BN folded in)
      b_dw   : (cin,)           SMEM
      w_pw   : (cout, cin)      SMEM   (pw-BN folded in)
      b_pw   : (cout,)          SMEM
      out    : (R, cout_last)   VMEM
    """
    t1 = t_in - spec_k + 1

    def kernel(x_ref, w_spec_ref, b_spec_ref, *rest):
        o_ref = rest[-1]
        layer_refs = rest[:-1]

        x = x_ref[...].astype(jnp.float32)            # (R, T): rows on sublanes, time on lanes
        r = x.shape[0]

        # ---- spectral temporal conv (valid) + ELU; BatchNorm2d(1) already folded ----
        h = []
        for c in range(spec_c):
            acc = jnp.zeros((r, t1), jnp.float32)
            for k in range(spec_k):                   # unrolled scalar-times-vector FMAs
                acc = acc + w_spec_ref[c, k] * x[:, k:k + t1]
            h.append(_elu(acc + b_spec_ref[c]))

        # ---- bac_layer: separable (depthwise -> pointwise) temporal conv blocks ----
        ridx = 0
        for li, (cin, cout, kd, pad) in enumerate(layer_cfgs):
            w_dw_ref = layer_refs[ridx]
            b_dw_ref = layer_refs[ridx + 1]
            w_pw_ref = layer_refs[ridx + 2]
            b_pw_ref = layer_refs[ridx + 3]
            ridx += 4

            tl = h[0].shape[-1]
            t_out = tl + 2 * pad - kd + 1

            if pad > 0:
                z = jnp.zeros((r, pad), jnp.float32)
                hp = [jnp.concatenate([z, hc, z], axis=-1) for hc in h]
            else:
                hp = h

            # depthwise conv along time (per channel); dw-BN folded into w/b
            dw = []
            for c in range(cin):
                acc = jnp.zeros((r, t_out), jnp.float32)
                for k in range(kd):
                    acc = acc + w_dw_ref[c, k] * hp[c][:, k:k + t_out]
                dw.append(acc + b_dw_ref[c])

            # pointwise 1x1 conv (channel mixing); pw-BN folded into w/b
            new_h = []
            for co in range(cout):
                acc = jnp.zeros((r, t_out), jnp.float32)
                for ci in range(cin):
                    acc = acc + w_pw_ref[co, ci] * dw[ci]
                acc = acc + b_pw_ref[co]
                if li == 0:
                    # Single ELU module in the Sequential (name-collision quirk).
                    acc = _elu(acc)
                new_h.append(acc)
            h = new_h

        # ---- permute + AdaptiveMaxPool2d((None, 1)) + squeeze == max over time ----
        cols = [jnp.max(hc, axis=-1, keepdims=True) for hc in h]
        o_ref[...] = jnp.concatenate(cols, axis=-1).astype(o_ref.dtype)

    return kernel


def fold_params(raw_params):
    """Fold every eval-mode BatchNorm into the adjacent conv weights/biases (exact)."""
    bn0, (w_spec, b_spec), layers = raw_params
    g0, be0, m0, v0 = bn0
    s0 = g0 / jnp.sqrt(v0 + EPS)                     # scalar (shape (1,))
    t0 = be0 - m0 * s0

    spec_c = w_spec.shape[0]
    spec_k = w_spec.shape[-1]
    w2 = w_spec.reshape(spec_c, spec_k)
    w_spec_f = (s0 * w2).astype(jnp.float32)
    b_spec_f = (b_spec + t0 * jnp.sum(w2, axis=-1)).astype(jnp.float32)

    folded_layers = []
    cfgs = []
    for (w_dw, b_dw, bn_dw, w_pw, b_pw, bn_pw, pad) in layers:
        cin, _, _, kd = w_dw.shape
        cout = w_pw.shape[0]

        gd, bd, md, vd = bn_dw
        sd = gd / jnp.sqrt(vd + EPS)
        td = bd - md * sd
        w_dw_f = (w_dw.reshape(cin, kd) * sd[:, None]).astype(jnp.float32)
        b_dw_f = (sd * b_dw + td).astype(jnp.float32)

        gp, bp, mp, vp = bn_pw
        sp = gp / jnp.sqrt(vp + EPS)
        tp = bp - mp * sp
        w_pw_f = (w_pw.reshape(cout, cin) * sp[:, None]).astype(jnp.float32)
        b_pw_f = (sp * b_pw + tp).astype(jnp.float32)

        folded_layers.append((w_dw_f, b_dw_f, w_pw_f, b_pw_f))
        cfgs.append((cin, cout, kd, pad))
    return (w_spec_f, b_spec_f), folded_layers, cfgs


def sbp_1c_encoder_forward(x, raw_params, *, tile_rows=None):
    """x: (batch, electrode, time) array. Returns squeeze of (B, E, C_out, 1)."""
    b, e, t = x.shape
    (w_spec_f, b_spec_f), folded_layers, cfgs = fold_params(raw_params)
    spec_c, spec_k = w_spec_f.shape
    if cfgs:
        assert cfgs[0][0] == spec_c, "first bac layer input_dim must match spectral channels"
    c_out = cfgs[-1][1] if cfgs else spec_c

    rows = b * e
    if tile_rows is None:
        # Big row tiles amortize the ~0.35us per-grid-step overhead; the cap keeps the
        # on-chip live intermediates modest, and cdiv(rows, 2) keeps >=2 grid steps when
        # there are enough rows so both v7x TensorCores get work.
        tile_rows = min(128, _round_up(max(pl.cdiv(rows, 2), 8), 8))
    rows_p = _round_up(rows, tile_rows)

    x2 = x.reshape(rows, t).astype(jnp.float32)
    if rows_p != rows:
        x2 = jnp.pad(x2, ((0, rows_p - rows), (0, 0)))   # padded rows are sliced off below

    kernel = _make_encoder_kernel(spec_c, spec_k, t, cfgs)

    smem = pl.BlockSpec(memory_space=pltpu.MemorySpace.SMEM)
    operands = [x2, w_spec_f, b_spec_f]
    in_specs = [pl.BlockSpec((tile_rows, t), lambda i: (i, 0)), smem, smem]
    for (w_dw_f, b_dw_f, w_pw_f, b_pw_f) in folded_layers:
        operands += [w_dw_f, b_dw_f, w_pw_f, b_pw_f]
        in_specs += [smem, smem, smem, smem]

    out = pl.pallas_call(
        kernel,
        out_shape=jax.ShapeDtypeStruct((rows_p, c_out), jnp.float32),
        grid_spec=pltpu.PrefetchScalarGridSpec(
            num_scalar_prefetch=0,
            grid=(rows_p // tile_rows,),
            in_specs=in_specs,
            out_specs=pl.BlockSpec((tile_rows, c_out), lambda i: (i, 0)),
        ),
        compiler_params=pltpu.CompilerParams(
            dimension_semantics=("parallel",)),
    )(*operands)

    out = out[:rows].reshape(b, e, c_out)
    # torch: AdaptiveMaxPool2d((None,1)) -> (B, E, C, 1), then .squeeze()
    return jnp.squeeze(out[:, :, :, None])


def init_params(key, fs, encode_info):
    """Raw (unfolded) parameters matching the PyTorch module's shapes, eval mode."""
    spec_k = int(fs / 2)
    n_layers = max(len(encode_info), 1)
    keys = jax.random.split(key, 2 + 12 * n_layers)

    # BatchNorm2d(1): non-trivial running stats (as in a trained model) so the folding
    # path is actually exercised.
    bn0 = (jnp.array([1.2], jnp.float32),     # gamma
           jnp.array([-0.3], jnp.float32),    # beta
           jnp.array([0.15], jnp.float32),    # running_mean
           jnp.array([0.8], jnp.float32))     # running_var

    # spectral_layer: Conv2d(1, 8, (1, fs//2)) with xavier_uniform weight
    bound = (6.0 / (1 * spec_k + 8 * spec_k)) ** 0.5
    w_spec = jax.random.uniform(keys[0], (8, 1, 1, spec_k), jnp.float32,
                                minval=-bound, maxval=bound)
    b_spec = 0.1 * jax.random.normal(keys[1], (8,), jnp.float32)

    layers = []
    ki = 2
    for (cin, cout, ksz, padding) in encode_info:
        kd = ksz[1] if isinstance(ksz, (tuple, list)) else int(ksz)
        if isinstance(padding, (tuple, list)):
            assert padding[0] == 0, "electrode-axis padding not supported"
            pad = padding[1]
        else:
            pad = int(padding)
        w_dw = 0.3 * jax.random.normal(keys[ki], (cin, 1, 1, kd), jnp.float32)
        b_dw = 0.1 * jax.random.normal(keys[ki + 1], (cin,), jnp.float32)
        bn_dw = (1.0 + 0.1 * jax.random.normal(keys[ki + 2], (cin,), jnp.float32),
                 0.1 * jax.random.normal(keys[ki + 3], (cin,), jnp.float32),
                 0.1 * jax.random.normal(keys[ki + 4], (cin,), jnp.float32),
                 0.5 + jax.random.uniform(keys[ki + 5], (cin,), jnp.float32))
        w_pw = 0.3 * jax.random.normal(keys[ki + 6], (cout, cin, 1, 1), jnp.float32)
        b_pw = 0.1 * jax.random.normal(keys[ki + 7], (cout,), jnp.float32)
        bn_pw = (1.0 + 0.1 * jax.random.normal(keys[ki + 8], (cout,), jnp.float32),
                 0.1 * jax.random.normal(keys[ki + 9], (cout,), jnp.float32),
                 0.1 * jax.random.normal(keys[ki + 10], (cout,), jnp.float32),
                 0.5 + jax.random.uniform(keys[ki + 11], (cout,), jnp.float32))
        ki += 12
        layers.append((w_dw, b_dw, bn_dw, w_pw, b_pw, bn_pw, pad))
    return (bn0, (w_spec, b_spec), layers)


def _reference(x, raw_params):
    """Independent pure-JAX reference using lax.conv_general_dilated (eval mode)."""
    bn0, (w_spec, b_spec), layers = raw_params
    g0, be0, m0, v0 = bn0
    h = x[:, None, :, :].astype(jnp.float32)                         # (B, 1, E, T)
    h = (h - m0) / jnp.sqrt(v0 + EPS) * g0 + be0
    h = lax.conv_general_dilated(h, w_spec, (1, 1), 'VALID',
                                 dimension_numbers=('NCHW', 'OIHW', 'NCHW'))
    h = h + b_spec[None, :, None, None]
    h = jax.nn.elu(h)
    for li, (w_dw, b_dw, bn_dw, w_pw, b_pw, bn_pw, pad) in enumerate(layers):
        cin = w_dw.shape[0]
        hd = lax.conv_general_dilated(h, w_dw, (1, 1),
                                      padding=((0, 0), (pad, pad)),
                                      dimension_numbers=('NCHW', 'OIHW', 'NCHW'),
                                      feature_group_count=cin)
        hd = hd + b_dw[None, :, None, None]
        gd, bd, md, vd = bn_dw
        hd = ((hd - md[None, :, None, None]) / jnp.sqrt(vd[None, :, None, None] + EPS)
              * gd[None, :, None, None] + bd[None, :, None, None])
        hp = lax.conv_general_dilated(hd, w_pw, (1, 1), 'VALID',
                                      dimension_numbers=('NCHW', 'OIHW', 'NCHW'))
        hp = hp + b_pw[None, :, None, None]
        gp, bp, mp, vp = bn_pw
        hp = ((hp - mp[None, :, None, None]) / jnp.sqrt(vp[None, :, None, None] + EPS)
              * gp[None, :, None, None] + bp[None, :, None, None])
        if li == 0:
            hp = jax.nn.elu(hp)
        h = hp
    h = jnp.transpose(h, (0, 2, 1, 3))                               # (B, E, C, T')
    return jnp.squeeze(jnp.max(h, axis=-1, keepdims=True))


if __name__ == "__main__":
    fs = 16                                     # spectral kernel width = fs // 2 = 8
    batch, electrode, time_len = 2, 8, 64
    # one SeparableConv2d block: (input_dim, output_dim, kernel_size, padding)
    encode_info = [(8, 16, (1, 9), (0, 4))]

    key = jax.random.PRNGKey(0)
    k_x, k_p = jax.random.split(key)
    x = jax.random.normal(k_x, (batch, electrode, time_len), jnp.float32)
    params = init_params(k_p, fs, encode_info)

    out = sbp_1c_encoder_forward(x, params)
    out = jax.block_until_ready(out)

    ref = _reference(x, params)
    assert out.shape == ref.shape == (batch, electrode, 16), (out.shape, ref.shape)
    max_err = float(jnp.max(jnp.abs(out - ref)))
    assert jnp.allclose(out, ref, atol=1e-4, rtol=1e-4), f"mismatch vs reference: {max_err}"

    print("KERNEL_OK")
</pallas_src>

<mosaic_0001>
module attributes {stable_mosaic.version = 11 : i64} {
  func.func @kernel(%arg0: i32, %arg1: memref<8x64xf32, #tpu.memory_space<vmem>>, %arg2: memref<8x8xf32, #tpu.memory_space<smem>>, %arg3: memref<8xf32, #tpu.memory_space<smem>>, %arg4: memref<8x9xf32, #tpu.memory_space<smem>>, %arg5: memref<8xf32, #tpu.memory_space<smem>>, %arg6: memref<16x8xf32, #tpu.memory_space<smem>>, %arg7: memref<16xf32, #tpu.memory_space<smem>>, %arg8: memref<8x16xf32, #tpu.memory_space<vmem>>) attributes {dimension_semantics = [#tpu.dimension_semantics<parallel>], iteration_bounds = array<i64: 2>, scalar_prefetch = 0 : i64, scratch_operands = 0 : i64, tpu.core_type = #tpu.core_type<tc>, window_params = [{transform_indices = @transform_0, window_bounds = array<i64: 8, 64>}, {transform_indices = @transform_1, window_bounds = array<i64: 8, 8>}, {transform_indices = @transform_2, window_bounds = array<i64: 8>}, {transform_indices = @transform_3, window_bounds = array<i64: 8, 9>}, {transform_indices = @transform_4, window_bounds = array<i64: 8>}, {transform_indices = @transform_5, window_bounds = array<i64: 16, 8>}, {transform_indices = @transform_6, window_bounds = array<i64: 16>}, {transform_indices = @transform_7, window_bounds = array<i64: 8, 16>}]} {
    %c0 = arith.constant 0 : index
    %c0_0 = arith.constant 0 : index
    %0 = vector.load %arg1[%c0, %c0_0] : memref<8x64xf32, #tpu.memory_space<vmem>>, vector<8x64xf32>
    %cst = arith.constant 0.000000e+00 : f32
    %1 = vector.broadcast %cst : f32 to vector<8x57xf32>
    %c0_1 = arith.constant 0 : index
    %c0_2 = arith.constant 0 : index
    %2 = memref.load %arg2[%c0_1, %c0_2] : memref<8x8xf32, #tpu.memory_space<smem>>
    %3 = vector.extract_strided_slice %0 {offsets = [0, 0], sizes = [8, 57], strides = [1, 1]} : vector<8x64xf32> to vector<8x57xf32>
    %4 = vector.broadcast %2 : f32 to vector<8x57xf32>
    %5 = arith.mulf %4, %3 : vector<8x57xf32>
    %6 = arith.addf %1, %5 : vector<8x57xf32>
    %c0_3 = arith.constant 0 : index
    %c1 = arith.constant 1 : index
    %7 = memref.load %arg2[%c0_3, %c1] : memref<8x8xf32, #tpu.memory_space<smem>>
    %8 = vector.extract_strided_slice %0 {offsets = [0, 1], sizes = [8, 57], strides = [1, 1]} : vector<8x64xf32> to vector<8x57xf32>
    %9 = vector.broadcast %7 : f32 to vector<8x57xf32>
    %10 = arith.mulf %9, %8 : vector<8x57xf32>
    %11 = arith.addf %6, %10 : vector<8x57xf32>
    %c0_4 = arith.constant 0 : index
    %c2 = arith.constant 2 : index
    %12 = memref.load %arg2[%c0_4, %c2] : memref<8x8xf32, #tpu.memory_space<smem>>
    %13 = vector.extract_strided_slice %0 {offsets = [0, 2], sizes = [8, 57], strides = [1, 1]} : vector<8x64xf32> to vector<8x57xf32>
    %14 = vector.broadcast %12 : f32 to vector<8x57xf32>
    %15 = arith.mulf %14, %13 : vector<8x57xf32>
    %16 = arith.addf %11, %15 : vector<8x57xf32>
    %c0_5 = arith.constant 0 : index
    %c3 = arith.constant 3 : index
    %17 = memref.load %arg2[%c0_5, %c3] : memref<8x8xf32, #tpu.memory_space<smem>>
    %18 = vector.extract_strided_slice %0 {offsets = [0, 3], sizes = [8, 57], strides = [1, 1]} : vector<8x64xf32> to vector<8x57xf32>
    %19 = vector.broadcast %17 : f32 to vector<8x57xf32>
    %20 = arith.mulf %19, %18 : vector<8x57xf32>
    %21 = arith.addf %16, %20 : vector<8x57xf32>
    %c0_6 = arith.constant 0 : index
    %c4 = arith.constant 4 : index
    %22 = memref.load %arg2[%c0_6, %c4] : memref<8x8xf32, #tpu.memory_space<smem>>
    %23 = vector.extract_strided_slice %0 {offsets = [0, 4], sizes = [8, 57], strides = [1, 1]} : vector<8x64xf32> to vector<8x57xf32>
    %24 = vector.broadcast %22 : f32 to vector<8x57xf32>
    %25 = arith.mulf %24, %23 : vector<8x57xf32>
    %26 = arith.addf %21, %25 : vector<8x57xf32>
    %c0_7 = arith.constant 0 : index
    %c5 = arith.constant 5 : index
    %27 = memref.load %arg2[%c0_7, %c5] : memref<8x8xf32, #tpu.memory_space<smem>>
    %28 = vector.extract_strided_slice %0 {offsets = [0, 5], sizes = [8, 57], strides = [1, 1]} : vector<8x64xf32> to vector<8x57xf32>
    %29 = vector.broadcast %27 : f32 to vector<8x57xf32>
    %30 = arith.mulf %29, %28 : vector<8x57xf32>
    %31 = arith.addf %26, %30 : vector<8x57xf32>
    %c0_8 = arith.constant 0 : index
    %c6 = arith.constant 6 : index
    %32 = memref.load %arg2[%c0_8, %c6] : memref<8x8xf32, #tpu.memory_space<smem>>
    %33 = vector.extract_strided_slice %0 {offsets = [0, 6], sizes = [8, 57], strides = [1, 1]} : vector<8x64xf32> to vector<8x57xf32>
    %34 = vector.broadcast %32 : f32 to vector<8x57xf32>
    %35 = arith.mulf %34, %33 : vector<8x57xf32>
    %36 = arith.addf %31, %35 : vector<8x57xf32>
    %c0_9 = arith.constant 0 : index
    %c7 = arith.constant 7 : index
    %37 = memref.load %arg2[%c0_9, %c7] : memref<8x8xf32, #tpu.memory_space<smem>>
    %38 = vector.extract_strided_slice %0 {offsets = [0, 7], sizes = [8, 57], strides = [1, 1]} : vector<8x64xf32> to vector<8x57xf32>
    %39 = vector.broadcast %37 : f32 to vector<8x57xf32>
    %40 = arith.mulf %39, %38 : vector<8x57xf32>
    %41 = arith.addf %36, %40 : vector<8x57xf32>
    %c0_10 = arith.constant 0 : index
    %42 = memref.load %arg3[%c0_10] : memref<8xf32, #tpu.memory_space<smem>>
    %43 = vector.broadcast %42 : f32 to vector<8x57xf32>
    %44 = arith.addf %41, %43 : vector<8x57xf32>
    %cst_11 = arith.constant 0.000000e+00 : f32
    %45 = vector.broadcast %cst_11 : f32 to vector<8x57xf32>
    %46 = arith.cmpf ogt, %44, %45 : vector<8x57xf32>
    %47 = math.exp %44 : vector<8x57xf32>
    %cst_12 = arith.constant 1.000000e+00 : f32
    %48 = vector.broadcast %cst_12 : f32 to vector<8x57xf32>
    %49 = arith.subf %47, %48 : vector<8x57xf32>
    %50 = arith.select %46, %44, %49 : vector<8x57xi1>, vector<8x57xf32>
    %cst_13 = arith.constant 0.000000e+00 : f32
    %51 = vector.broadcast %cst_13 : f32 to vector<8x57xf32>
    %c1_14 = arith.constant 1 : index
    %c0_15 = arith.constant 0 : index
    %52 = memref.load %arg2[%c1_14, %c0_15] : memref<8x8xf32, #tpu.memory_space<smem>>
    %53 = vector.extract_strided_slice %0 {offsets = [0, 0], sizes = [8, 57], strides = [1, 1]} : vector<8x64xf32> to vector<8x57xf32>
    %54 = vector.broadcast %52 : f32 to vector<8x57xf32>
    %55 = arith.mulf %54, %53 : vector<8x57xf32>
    %56 = arith.addf %51, %55 : vector<8x57xf32>
    %c1_16 = arith.constant 1 : index
    %c1_17 = arith.constant 1 : index
    %57 = memref.load %arg2[%c1_16, %c1_17] : memref<8x8xf32, #tpu.memory_space<smem>>
    %58 = vector.extract_strided_slice %0 {offsets = [0, 1], sizes = [8, 57], strides = [1, 1]} : vector<8x64xf32> to vector<8x57xf32>
    %59 = vector.broadcast %57 : f32 to vector<8x57xf32>
    %60 = arith.mulf %59, %58 : vector<8x57xf32>
    %61 = arith.addf %56, %60 : vector<8x57xf32>
    %c1_18 = arith.constant 1 : index
    %c2_19 = arith.constant 2 : index
    %62 = memref.load %arg2[%c1_18, %c2_19] : memref<8x8xf32, #tpu.memory_space<smem>>
    %63 = vector.extract_strided_slice %0 {offsets = [0, 2], sizes = [8, 57], strides = [1, 1]} : vector<8x64xf32> to vector<8x57xf32>
    %64 = vector.broadcast %62 : f32 to vector<8x57xf32>
    %65 = arith.mulf %64, %63 : vector<8x57xf32>
    %66 = arith.addf %61, %65 : vector<8x57xf32>
    %c1_20 = arith.constant 1 : index
    %c3_21 = arith.constant 3 : index
    %67 = memref.load %arg2[%c1_20, %c3_21] : memref<8x8xf32, #tpu.memory_space<smem>>
    %68 = vector.extract_strided_slice %0 {offsets = [0, 3], sizes = [8, 57], strides = [1, 1]} : vector<8x64xf32> to vector<8x57xf32>
    %69 = vector.broadcast %67 : f32 to vector<8x57xf32>
    %70 = arith.mulf %69, %68 : vector<8x57xf32>
    %71 = arith.addf %66, %70 : vector<8x57xf32>
    %c1_22 = arith.constant 1 : index
    %c4_23 = arith.constant 4 : index
    %72 = memref.load %arg2[%c1_22, %c4_23] : memref<8x8xf32, #tpu.memory_space<smem>>
    %73 = vector.extract_strided_slice %0 {offsets = [0, 4], sizes = [8, 57], strides = [1, 1]} : vector<8x64xf32> to vector<8x57xf32>
    %74 = vector.broadcast %72 : f32 to vector<8x57xf32>
    %75 = arith.mulf %74, %73 : vector<8x57xf32>
    %76 = arith.addf %71, %75 : vector<8x57xf32>
    %c1_24 = arith.constant 1 : index
    %c5_25 = arith.constant 5 : index
    %77 = memref.load %arg2[%c1_24, %c5_25] : memref<8x8xf32, #tpu.memory_space<smem>>
    %78 = vector.extract_strided_slice %0 {offsets = [0, 5], sizes = [8, 57], strides = [1, 1]} : vector<8x64xf32> to vector<8x57xf32>
    %79 = vector.broadcast %77 : f32 to vector<8x57xf32>
    %80 = arith.mulf %79, %78 : vector<8x57xf32>
    %81 = arith.addf %76, %80 : vector<8x57xf32>
    %c1_26 = arith.constant 1 : index
    %c6_27 = arith.constant 6 : index
    %82 = memref.load %arg2[%c1_26, %c6_27] : memref<8x8xf32, #tpu.memory_space<smem>>
    %83 = vector.extract_strided_slice %0 {offsets = [0, 6], sizes = [8, 57], strides = [1, 1]} : vector<8x64xf32> to vector<8x57xf32>
    %84 = vector.broadcast %82 : f32 to vector<8x57xf32>
    %85 = arith.mulf %84, %83 : vector<8x57xf32>
    %86 = arith.addf %81, %85 : vector<8x57xf32>
    %c1_28 = arith.constant 1 : index
    %c7_29 = arith.constant 7 : index
    %87 = memref.load %arg2[%c1_28, %c7_29] : memref<8x8xf32, #tpu.memory_space<smem>>
    %88 = vector.extract_strided_slice %0 {offsets = [0, 7], sizes = [8, 57], strides = [1, 1]} : vector<8x64xf32> to vector<8x57xf32>
    %89 = vector.broadcast %87 : f32 to vector<8x57xf32>
    %90 = arith.mulf %89, %88 : vector<8x57xf32>
    %91 = arith.addf %86, %90 : vector<8x57xf32>
    %c1_30 = arith.constant 1 : index
    %92 = memref.load %arg3[%c1_30] : memref<8xf32, #tpu.memory_space<smem>>
    %93 = vector.broadcast %92 : f32 to vector<8x57xf32>
    %94 = arith.addf %91, %93 : vector<8x57xf32>
    %cst_31 = arith.constant 0.000000e+00 : f32
    %95 = vector.broadcast %cst_31 : f32 to vector<8x57xf32>
    %96 = arith.cmpf ogt, %94, %95 : vector<8x57xf32>
    %97 = math.exp %94 : vector<8x57xf32>
    %cst_32 = arith.constant 1.000000e+00 : f32
    %98 = vector.broadcast %cst_32 : f32 to vector<8x57xf32>
    %99 = arith.subf %97, %98 : vector<8x57xf32>
    %100 = arith.select %96, %94, %99 : vector<8x57xi1>, vector<8x57xf32>
    %cst_33 = arith.constant 0.000000e+00 : f32
    %101 = vector.broadcast %cst_33 : f32 to vector<8x57xf32>
    %c2_34 = arith.constant 2 : index
    %c0_35 = arith.constant 0 : index
    %102 = memref.load %arg2[%c2_34, %c0_35] : memref<8x8xf32, #tpu.memory_space<smem>>
    %103 = vector.extract_strided_slice %0 {offsets = [0, 0], sizes = [8, 57], strides = [1, 1]} : vector<8x64xf32> to vector<8x57xf32>
    %104 = vector.broadcast %102 : f32 to vector<8x57xf32>
    %105 = arith.mulf %104, %103 : vector<8x57xf32>
    %106 = arith.addf %101, %105 : vector<8x57xf32>
    %c2_36 = arith.constant 2 : index
    %c1_37 = arith.constant 1 : index
    %107 = memref.load %arg2[%c2_36, %c1_37] : memref<8x8xf32, #tpu.memory_space<smem>>
    %108 = vector.extract_strided_slice %0 {offsets = [0, 1], sizes = [8, 57], strides = [1, 1]} : vector<8x64xf32> to vector<8x57xf32>
    %109 = vector.broadcast %107 : f32 to vector<8x57xf32>
    %110 = arith.mulf %109, %108 : vector<8x57xf32>
    %111 = arith.addf %106, %110 : vector<8x57xf32>
    %c2_38 = arith.constant 2 : index
    %c2_39 = arith.constant 2 : index
    %112 = memref.load %arg2[%c2_38, %c2_39] : memref<8x8xf32, #tpu.memory_space<smem>>
    %113 = vector.extract_strided_slice %0 {offsets = [0, 2], sizes = [8, 57], strides = [1, 1]} : vector<8x64xf32> to vector<8x57xf32>
    %114 = vector.broadcast %112 : f32 to vector<8x57xf32>
    %115 = arith.mulf %114, %113 : vector<8x57xf32>
    %116 = arith.addf %111, %115 : vector<8x57xf32>
    %c2_40 = arith.constant 2 : index
    %c3_41 = arith.constant 3 : index
    %117 = memref.load %arg2[%c2_40, %c3_41] : memref<8x8xf32, #tpu.memory_space<smem>>
    %118 = vector.extract_strided_slice %0 {offsets = [0, 3], sizes = [8, 57], strides = [1, 1]} : vector<8x64xf32> to vector<8x57xf32>
    %119 = vector.broadcast %117 : f32 to vector<8x57xf32>
    %120 = arith.mulf %119, %118 : vector<8x57xf32>
    %121 = arith.addf %116, %120 : vector<8x57xf32>
    %c2_42 = arith.constant 2 : index
    %c4_43 = arith.constant 4 : index
    %122 = memref.load %arg2[%c2_42, %c4_43] : memref<8x8xf32, #tpu.memory_space<smem>>
    %123 = vector.extract_strided_slice %0 {offsets = [0, 4], sizes = [8, 57], strides = [1, 1]} : vector<8x64xf32> to vector<8x57xf32>
    %124 = vector.broadcast %122 : f32 to vector<8x57xf32>
    %125 = arith.mulf %124, %123 : vector<8x57xf32>
    %126 = arith.addf %121, %125 : vector<8x57xf32>
    %c2_44 = arith.constant 2 : index
    %c5_45 = arith.constant 5 : index
    %127 = memref.load %arg2[%c2_44, %c5_45] : memref<8x8xf32, #tpu.memory_space<smem>>
    %128 = vector.extract_strided_slice %0 {offsets = [0, 5], sizes = [8, 57], strides = [1, 1]} : vector<8x64xf32> to vector<8x57xf32>
    %129 = vector.broadcast %127 : f32 to vector<8x57xf32>
    %130 = arith.mulf %129, %128 : vector<8x57xf32>
    %131 = arith.addf %126, %130 : vector<8x57xf32>
    %c2_46 = arith.constant 2 : index
    %c6_47 = arith.constant 6 : index
    %132 = memref.load %arg2[%c2_46, %c6_47] : memref<8x8xf32, #tpu.memory_space<smem>>
    %133 = vector.extract_strided_slice %0 {offsets = [0, 6], sizes = [8, 57], strides = [1, 1]} : vector<8x64xf32> to vector<8x57xf32>
    %134 = vector.broadcast %132 : f32 to vector<8x57xf32>
    %135 = arith.mulf %134, %133 : vector<8x57xf32>
    %136 = arith.addf %131, %135 : vector<8x57xf32>
    %c2_48 = arith.constant 2 : index
    %c7_49 = arith.constant 7 : index
    %137 = memref.load %arg2[%c2_48, %c7_49] : memref<8x8xf32, #tpu.memory_space<smem>>
    %138 = vector.extract_strided_slice %0 {offsets = [0, 7], sizes = [8, 57], strides = [1, 1]} : vector<8x64xf32> to vector<8x57xf32>
    %139 = vector.broadcast %137 : f32 to vector<8x57xf32>
    %140 = arith.mulf %139, %138 : vector<8x57xf32>
    %141 = arith.addf %136, %140 : vector<8x57xf32>
    %c2_50 = arith.constant 2 : index
    %142 = memref.load %arg3[%c2_50] : memref<8xf32, #tpu.memory_space<smem>>
    %143 = vector.broadcast %142 : f32 to vector<8x57xf32>
    %144 = arith.addf %141, %143 : vector<8x57xf32>
    %cst_51 = arith.constant 0.000000e+00 : f32
    %145 = vector.broadcast %cst_51 : f32 to vector<8x57xf32>
    %146 = arith.cmpf ogt, %144, %145 : vector<8x57xf32>
    %147 = math.exp %144 : vector<8x57xf32>
    %cst_52 = arith.constant 1.000000e+00 : f32
    %148 = vector.broadcast %cst_52 : f32 to vector<8x57xf32>
    %149 = arith.subf %147, %148 : vector<8x57xf32>
    %150 = arith.select %146, %144, %149 : vector<8x57xi1>, vector<8x57xf32>
    %cst_53 = arith.constant 0.000000e+00 : f32
    %151 = vector.broadcast %cst_53 : f32 to vector<8x57xf32>
    %c3_54 = arith.constant 3 : index
    %c0_55 = arith.constant 0 : index
    %152 = memref.load %arg2[%c3_54, %c0_55] : memref<8x8xf32, #tpu.memory_space<smem>>
    %153 = vector.extract_strided_slice %0 {offsets = [0, 0], sizes = [8, 57], strides = [1, 1]} : vector<8x64xf32> to vector<8x57xf32>
    %154 = vector.broadcast %152 : f32 to vector<8x57xf32>
    %155 = arith.mulf %154, %153 : vector<8x57xf32>
    %156 = arith.addf %151, %155 : vector<8x57xf32>
    %c3_56 = arith.constant 3 : index
    %c1_57 = arith.constant 1 : index
    %157 = memref.load %arg2[%c3_56, %c1_57] : memref<8x8xf32, #tpu.memory_space<smem>>
    %158 = vector.extract_strided_slice %0 {offsets = [0, 1], sizes = [8, 57], strides = [1, 1]} : vector<8x64xf32> to vector<8x57xf32>
    %159 = vector.broadcast %157 : f32 to vector<8x57xf32>
    %160 = arith.mulf %159, %158 : vector<8x57xf32>
    %161 = arith.addf %156, %160 : vector<8x57xf32>
    %c3_58 = arith.constant 3 : index
    %c2_59 = arith.constant 2 : index
    %162 = memref.load %arg2[%c3_58, %c2_59] : memref<8x8xf32, #tpu.memory_space<smem>>
    %163 = vector.extract_strided_slice %0 {offsets = [0, 2], sizes = [8, 57], strides = [1, 1]} : vector<8x64xf32> to vector<8x57xf32>
    %164 = vector.broadcast %162 : f32 to vector<8x57xf32>
    %165 = arith.mulf %164, %163 : vector<8x57xf32>
    %166 = arith.addf %161, %165 : vector<8x57xf32>
    %c3_60 = arith.constant 3 : index
    %c3_61 = arith.constant 3 : index
    %167 = memref.load %arg2[%c3_60, %c3_61] : memref<8x8xf32, #tpu.memory_space<smem>>
    %168 = vector.extract_strided_slice %0 {offsets = [0, 3], sizes = [8, 57], strides = [1, 1]} : vector<8x64xf32> to vector<8x57xf32>
    %169 = vector.broadcast %167 : f32 to vector<8x57xf32>
    %170 = arith.mulf %169, %168 : vector<8x57xf32>
    %171 = arith.addf %166, %170 : vector<8x57xf32>
    %c3_62 = arith.constant 3 : index
    %c4_63 = arith.constant 4 : index
    %172 = memref.load %arg2[%c3_62, %c4_63] : memref<8x8xf32, #tpu.memory_space<smem>>
    %173 = vector.extract_strided_slice %0 {offsets = [0, 4], sizes = [8, 57], strides = [1, 1]} : vector<8x64xf32> to vector<8x57xf32>
    %174 = vector.broadcast %172 : f32 to vector<8x57xf32>
    %175 = arith.mulf %174, %173 : vector<8x57xf32>
    %176 = arith.addf %171, %175 : vector<8x57xf32>
    %c3_64 = arith.constant 3 : index
    %c5_65 = arith.constant 5 : index
    %177 = memref.load %arg2[%c3_64, %c5_65] : memref<8x8xf32, #tpu.memory_space<smem>>
    %178 = vector.extract_strided_slice %0 {offsets = [0, 5], sizes = [8, 57], strides = [1, 1]} : vector<8x64xf32> to vector<8x57xf32>
    %179 = vector.broadcast %177 : f32 to vector<8x57xf32>
    %180 = arith.mulf %179, %178 : vector<8x57xf32>
    %181 = arith.addf %176, %180 : vector<8x57xf32>
    %c3_66 = arith.constant 3 : index
    %c6_67 = arith.constant 6 : index
    %182 = memref.load %arg2[%c3_66, %c6_67] : memref<8x8xf32, #tpu.memory_space<smem>>
    %183 = vector.extract_strided_slice %0 {offsets = [0, 6], sizes = [8, 57], strides = [1, 1]} : vector<8x64xf32> to vector<8x57xf32>
    %184 = vector.broadcast %182 : f32 to vector<8x57xf32>
    %185 = arith.mulf %184, %183 : vector<8x57xf32>
    %186 = arith.addf %181, %185 : vector<8x57xf32>
    %c3_68 = arith.constant 3 : index
    %c7_69 = arith.constant 7 : index
    %187 = memref.load %arg2[%c3_68, %c7_69] : memref<8x8xf32, #tpu.memory_space<smem>>
    %188 = vector.extract_strided_slice %0 {offsets = [0, 7], sizes = [8, 57], strides = [1, 1]} : vector<8x64xf32> to vector<8x57xf32>
    %189 = vector.broadcast %187 : f32 to vector<8x57xf32>
    %190 = arith.mulf %189, %188 : vector<8x57xf32>
    %191 = arith.addf %186, %190 : vector<8x57xf32>
    %c3_70 = arith.constant 3 : index
    %192 = memref.load %arg3[%c3_70] : memref<8xf32, #tpu.memory_space<smem>>
    %193 = vector.broadcast %192 : f32 to vector<8x57xf32>
    %194 = arith.addf %191, %193 : vector<8x57xf32>
    %cst_71 = arith.constant 0.000000e+00 : f32
    %195 = vector.broadcast %cst_71 : f32 to vector<8x57xf32>
    %196 = arith.cmpf ogt, %194, %195 : vector<8x57xf32>
    %197 = math.exp %194 : vector<8x57xf32>
    %cst_72 = arith.constant 1.000000e+00 : f32
    %198 = vector.broadcast %cst_72 : f32 to vector<8x57xf32>
    %199 = arith.subf %197, %198 : vector<8x57xf32>
    %200 = arith.select %196, %194, %199 : vector<8x57xi1>, vector<8x57xf32>
    %cst_73 = arith.constant 0.000000e+00 : f32
    %201 = vector.broadcast %cst_73 : f32 to vector<8x57xf32>
    %c4_74 = arith.constant 4 : index
    %c0_75 = arith.constant 0 : index
    %202 = memref.load %arg2[%c4_74, %c0_75] : memref<8x8xf32, #tpu.memory_space<smem>>
    %203 = vector.extract_strided_slice %0 {offsets = [0, 0], sizes = [8, 57], strides = [1, 1]} : vector<8x64xf32> to vector<8x57xf32>
    %204 = vector.broadcast %202 : f32 to vector<8x57xf32>
    %205 = arith.mulf %204, %203 : vector<8x57xf32>
    %206 = arith.addf %201, %205 : vector<8x57xf32>
    %c4_76 = arith.constant 4 : index
    %c1_77 = arith.constant 1 : index
    %207 = memref.load %arg2[%c4_76, %c1_77] : memref<8x8xf32, #tpu.memory_space<smem>>
    %208 = vector.extract_strided_slice %0 {offsets = [0, 1], sizes = [8, 57], strides = [1, 1]} : vector<8x64xf32> to vector<8x57xf32>
    %209 = vector.broadcast %207 : f32 to vector<8x57xf32>
    %210 = arith.mulf %209, %208 : vector<8x57xf32>
    %211 = arith.addf %206, %210 : vector<8x57xf32>
    %c4_78 = arith.constant 4 : index
    %c2_79 = arith.constant 2 : index
    %212 = memref.load %arg2[%c4_78, %c2_79] : memref<8x8xf32, #tpu.memory_space<smem>>
    %213 = vector.extract_strided_slice %0 {offsets = [0, 2], sizes = [8, 57], strides = [1, 1]} : vector<8x64xf32> to vector<8x57xf32>
    %214 = vector.broadcast %212 : f32 to vector<8x57xf32>
    %215 = arith.mulf %214, %213 : vector<8x57xf32>
    %216 = arith.addf %211, %215 : vector<8x57xf32>
    %c4_80 = arith.constant 4 : index
    %c3_81 = arith.constant 3 : index
    %217 = memref.load %arg2[%c4_80, %c3_81] : memref<8x8xf32, #tpu.memory_space<smem>>
    %218 = vector.extract_strided_slice %0 {offsets = [0, 3], sizes = [8, 57], strides = [1, 1]} : vector<8x64xf32> to vector<8x57xf32>
    %219 = vector.broadcast %217 : f32 to vector<8x57xf32>
    %220 = arith.mulf %219, %218 : vector<8x57xf32>
    %221 = arith.addf %216, %220 : vector<8x57xf32>
    %c4_82 = arith.constant 4 : index
    %c4_83 = arith.constant 4 : index
    %222 = memref.load %arg2[%c4_82, %c4_83] : memref<8x8xf32, #tpu.memory_space<smem>>
    %223 = vector.extract_strided_slice %0 {offsets = [0, 4], sizes = [8, 57], strides = [1, 1]} : vector<8x64xf32> to vector<8x57xf32>
    %224 = vector.broadcast %222 : f32 to vector<8x57xf32>
    %225 = arith.mulf %224, %223 : vector<8x57xf32>
    %226 = arith.addf %221, %225 : vector<8x57xf32>
    %c4_84 = arith.constant 4 : index
    %c5_85 = arith.constant 5 : index
    %227 = memref.load %arg2[%c4_84, %c5_85] : memref<8x8xf32, #tpu.memory_space<smem>>
    %228 = vector.extract_strided_slice %0 {offsets = [0, 5], sizes = [8, 57], strides = [1, 1]} : vector<8x64xf32> to vector<8x57xf32>
    %229 = vector.broadcast %227 : f32 to vector<8x57xf32>
    %230 = arith.mulf %229, %228 : vector<8x57xf32>
    %231 = arith.addf %226, %230 : vector<8x57xf32>
    %c4_86 = arith.constant 4 : index
    %c6_87 = arith.constant 6 : index
    %232 = memref.load %arg2[%c4_86, %c6_87] : memref<8x8xf32, #tpu.memory_space<smem>>
    %233 = vector.extract_strided_slice %0 {offsets = [0, 6], sizes = [8, 57], strides = [1, 1]} : vector<8x64xf32> to vector<8x57xf32>
    %234 = vector.broadcast %232 : f32 to vector<8x57xf32>
    %235 = arith.mulf %234, %233 : vector<8x57xf32>
    %236 = arith.addf %231, %235 : vector<8x57xf32>
    %c4_88 = arith.constant 4 : index
    %c7_89 = arith.constant 7 : index
    %237 = memref.load %arg2[%c4_88, %c7_89] : memref<8x8xf32, #tpu.memory_space<smem>>
    %238 = vector.extract_strided_slice %0 {offsets = [0, 7], sizes = [8, 57], strides = [1, 1]} : vector<8x64xf32> to vector<8x57xf32>
    %239 = vector.broadcast %237 : f32 to vector<8x57xf32>
    %240 = arith.mulf %239, %238 : vector<8x57xf32>
    %241 = arith.addf %236, %240 : vector<8x57xf32>
    %c4_90 = arith.constant 4 : index
    %242 = memref.load %arg3[%c4_90] : memref<8xf32, #tpu.memory_space<smem>>
    %243 = vector.broadcast %242 : f32 to vector<8x57xf32>
    %244 = arith.addf %241, %243 : vector<8x57xf32>
    %cst_91 = arith.constant 0.000000e+00 : f32
    %245 = vector.broadcast %cst_91 : f32 to vector<8x57xf32>
    %246 = arith.cmpf ogt, %244, %245 : vector<8x57xf32>
    %247 = math.exp %244 : vector<8x57xf32>
    %cst_92 = arith.constant 1.000000e+00 : f32
    %248 = vector.broadcast %cst_92 : f32 to vector<8x57xf32>
    %249 = arith.subf %247, %248 : vector<8x57xf32>
    %250 = arith.select %246, %244, %249 : vector<8x57xi1>, vector<8x57xf32>
    %cst_93 = arith.constant 0.000000e+00 : f32
    %251 = vector.broadcast %cst_93 : f32 to vector<8x57xf32>
    %c5_94 = arith.constant 5 : index
    %c0_95 = arith.constant 0 : index
    %252 = memref.load %arg2[%c5_94, %c0_95] : memref<8x8xf32, #tpu.memory_space<smem>>
    %253 = vector.extract_strided_slice %0 {offsets = [0, 0], sizes = [8, 57], strides = [1, 1]} : vector<8x64xf32> to vector<8x57xf32>
    %254 = vector.broadcast %252 : f32 to vector<8x57xf32>
    %255 = arith.mulf %254, %253 : vector<8x57xf32>
    %256 = arith.addf %251, %255 : vector<8x57xf32>
    %c5_96 = arith.constant 5 : index
    %c1_97 = arith.constant 1 : index
    %257 = memref.load %arg2[%c5_96, %c1_97] : memref<8x8xf32, #tpu.memory_space<smem>>
    %258 = vector.extract_strided_slice %0 {offsets = [0, 1], sizes = [8, 57], strides = [1, 1]} : vector<8x64xf32> to vector<8x57xf32>
    %259 = vector.broadcast %257 : f32 to vector<8x57xf32>
    %260 = arith.mulf %259, %258 : vector<8x57xf32>
    %261 = arith.addf %256, %260 : vector<8x57xf32>
    %c5_98 = arith.constant 5 : index
    %c2_99 = arith.constant 2 : index
    %262 = memref.load %arg2[%c5_98, %c2_99] : memref<8x8xf32, #tpu.memory_space<smem>>
    %263 = vector.extract_strided_slice %0 {offsets = [0, 2], sizes = [8, 57], strides = [1, 1]} : vector<8x64xf32> to vector<8x57xf32>
    %264 = vector.broadcast %262 : f32 to vector<8x57xf32>
    %265 = arith.mulf %264, %263 : vector<8x57xf32>
    %266 = arith.addf %261, %265 : vector<8x57xf32>
    %c5_100 = arith.constant 5 : index
    %c3_101 = arith.constant 3 : index
    %267 = memref.load %arg2[%c5_100, %c3_101] : memref<8x8xf32, #tpu.memory_space<smem>>
    %268 = vector.extract_strided_slice %0 {offsets = [0, 3], sizes = [8, 57], strides = [1, 1]} : vector<8x64xf32> to vector<8x57xf32>
    %269 = vector.broadcast %267 : f32 to vector<8x57xf32>
    %270 = arith.mulf %269, %268 : vector<8x57xf32>
    %271 = arith.addf %266, %270 : vector<8x57xf32>
    %c5_102 = arith.constant 5 : index
    %c4_103 = arith.constant 4 : index
    %272 = memref.load %arg2[%c5_102, %c4_103] : memref<8x8xf32, #tpu.memory_space<smem>>
    %273 = vector.extract_strided_slice %0 {offsets = [0, 4], sizes = [8, 57], strides = [1, 1]} : vector<8x64xf32> to vector<8x57xf32>
    %274 = vector.broadcast %272 : f32 to vector<8x57xf32>
    %275 = arith.mulf %274, %273 : vector<8x57xf32>
    %276 = arith.addf %271, %275 : vector<8x57xf32>
    %c5_104 = arith.constant 5 : index
    %c5_105 = arith.constant 5 : index
    %277 = memref.load %arg2[%c5_104, %c5_105] : memref<8x8xf32, #tpu.memory_space<smem>>
    %278 = vector.extract_strided_slice %0 {offsets = [0, 5], sizes = [8, 57], strides = [1, 1]} : vector<8x64xf32> to vector<8x57xf32>
    %279 = vector.broadcast %277 : f32 to vector<8x57xf32>
    %280 = arith.mulf %279, %278 : vector<8x57xf32>
    %281 = arith.addf %276, %280 : vector<8x57xf32>
    %c5_106 = arith.constant 5 : index
    %c6_107 = arith.constant 6 : index
    %282 = memref.load %arg2[%c5_106, %c6_107] : memref<8x8xf32, #tpu.memory_space<smem>>
    %283 = vector.extract_strided_slice %0 {offsets = [0, 6], sizes = [8, 57], strides = [1, 1]} : vector<8x64xf32> to vector<8x57xf32>
    %284 = vector.broadcast %282 : f32 to vector<8x57xf32>
    %285 = arith.mulf %284, %283 : vector<8x57xf32>
    %286 = arith.addf %281, %285 : vector<8x57xf32>
    %c5_108 = arith.constant 5 : index
    %c7_109 = arith.constant 7 : index
    %287 = memref.load %arg2[%c5_108, %c7_109] : memref<8x8xf32, #tpu.memory_space<smem>>
    %288 = vector.extract_strided_slice %0 {offsets = [0, 7], sizes = [8, 57], strides = [1, 1]} : vector<8x64xf32> to vector<8x57xf32>
    %289 = vector.broadcast %287 : f32 to vector<8x57xf32>
    %290 = arith.mulf %289, %288 : vector<8x57xf32>
    %291 = arith.addf %286, %290 : vector<8x57xf32>
    %c5_110 = arith.constant 5 : index
    %292 = memref.load %arg3[%c5_110] : memref<8xf32, #tpu.memory_space<smem>>
    %293 = vector.broadcast %292 : f32 to vector<8x57xf32>
    %294 = arith.addf %291, %293 : vector<8x57xf32>
    %cst_111 = arith.constant 0.000000e+00 : f32
    %295 = vector.broadcast %cst_111 : f32 to vector<8x57xf32>
    %296 = arith.cmpf ogt, %294, %295 : vector<8x57xf32>
    %297 = math.exp %294 : vector<8x57xf32>
    %cst_112 = arith.constant 1.000000e+00 : f32
    %298 = vector.broadcast %cst_112 : f32 to vector<8x57xf32>
    %299 = arith.subf %297, %298 : vector<8x57xf32>
    %300 = arith.select %296, %294, %299 : vector<8x57xi1>, vector<8x57xf32>
    %cst_113 = arith.constant 0.000000e+00 : f32
    %301 = vector.broadcast %cst_113 : f32 to vector<8x57xf32>
    %c6_114 = arith.constant 6 : index
    %c0_115 = arith.constant 0 : index
    %302 = memref.load %arg2[%c6_114, %c0_115] : memref<8x8xf32, #tpu.memory_space<smem>>
    %303 = vector.extract_strided_slice %0 {offsets = [0, 0], sizes = [8, 57], strides = [1, 1]} : vector<8x64xf32> to vector<8x57xf32>
    %304 = vector.broadcast %302 : f32 to vector<8x57xf32>
    %305 = arith.mulf %304, %303 : vector<8x57xf32>
    %306 = arith.addf %301, %305 : vector<8x57xf32>
    %c6_116 = arith.constant 6 : index
    %c1_117 = arith.constant 1 : index
    %307 = memref.load %arg2[%c6_116, %c1_117] : memref<8x8xf32, #tpu.memory_space<smem>>
    %308 = vector.extract_strided_slice %0 {offsets = [0, 1], sizes = [8, 57], strides = [1, 1]} : vector<8x64xf32> to vector<8x57xf32>
    %309 = vector.broadcast %307 : f32 to vector<8x57xf32>
    %310 = arith.mulf %309, %308 : vector<8x57xf32>
    %311 = arith.addf %306, %310 : vector<8x57xf32>
    %c6_118 = arith.constant 6 : index
    %c2_119 = arith.constant 2 : index
    %312 = memref.load %arg2[%c6_118, %c2_119] : memref<8x8xf32, #tpu.memory_space<smem>>
    %313 = vector.extract_strided_slice %0 {offsets = [0, 2], sizes = [8, 57], strides = [1, 1]} : vector<8x64xf32> to vector<8x57xf32>
    %314 = vector.broadcast %312 : f32 to vector<8x57xf32>
    %315 = arith.mulf %314, %313 : vector<8x57xf32>
    %316 = arith.addf %311, %315 : vector<8x57xf32>
    %c6_120 = arith.constant 6 : index
    %c3_121 = arith.constant 3 : index
    %317 = memref.load %arg2[%c6_120, %c3_121] : memref<8x8xf32, #tpu.memory_space<smem>>
    %318 = vector.extract_strided_slice %0 {offsets = [0, 3], sizes = [8, 57], strides = [1, 1]} : vector<8x64xf32> to vector<8x57xf32>
    %319 = vector.broadcast %317 : f32 to vector<8x57xf32>
    %320 = arith.mulf %319, %318 : vector<8x57xf32>
    %321 = arith.addf %316, %320 : vector<8x57xf32>
    %c6_122 = arith.constant 6 : index
    %c4_123 = arith.constant 4 : index
    %322 = memref.load %arg2[%c6_122, %c4_123] : memref<8x8xf32, #tpu.memory_space<smem>>
    %323 = vector.extract_strided_slice %0 {offsets = [0, 4], sizes = [8, 57], strides = [1, 1]} : vector<8x64xf32> to vector<8x57xf32>
    %324 = vector.broadcast %322 : f32 to vector<8x57xf32>
    %325 = arith.mulf %324, %323 : vector<8x57xf32>
    %326 = arith.addf %321, %325 : vector<8x57xf32>
    %c6_124 = arith.constant 6 : index
    %c5_125 = arith.constant 5 : index
    %327 = memref.load %arg2[%c6_124, %c5_125] : memref<8x8xf32, #tpu.memory_space<smem>>
    %328 = vector.extract_strided_slice %0 {offsets = [0, 5], sizes = [8, 57], strides = [1, 1]} : vector<8x64xf32> to vector<8x57xf32>
    %329 = vector.broadcast %327 : f32 to vector<8x57xf32>
    %330 = arith.mulf %329, %328 : vector<8x57xf32>
    %331 = arith.addf %326, %330 : vector<8x57xf32>
    %c6_126 = arith.constant 6 : index
    %c6_127 = arith.constant 6 : index
    %332 = memref.load %arg2[%c6_126, %c6_127] : memref<8x8xf32, #tpu.memory_space<smem>>
    %333 = vector.extract_strided_slice %0 {offsets = [0, 6], sizes = [8, 57], strides = [1, 1]} : vector<8x64xf32> to vector<8x57xf32>
    %334 = vector.broadcast %332 : f32 to vector<8x57xf32>
    %335 = arith.mulf %334, %333 : vector<8x57xf32>
    %336 = arith.addf %331, %335 : vector<8x57xf32>
    %c6_128 = arith.constant 6 : index
    %c7_129 = arith.constant 7 : index
    %337 = memref.load %arg2[%c6_128, %c7_129] : memref<8x8xf32, #tpu.memory_space<smem>>
    %338 = vector.extract_strided_slice %0 {offsets = [0, 7], sizes = [8, 57], strides = [1, 1]} : vector<8x64xf32> to vector<8x57xf32>
    %339 = vector.broadcast %337 : f32 to vector<8x57xf32>
    %340 = arith.mulf %339, %338 : vector<8x57xf32>
    %341 = arith.addf %336, %340 : vector<8x57xf32>
    %c6_130 = arith.constant 6 : index
    %342 = memref.load %arg3[%c6_130] : memref<8xf32, #tpu.memory_space<smem>>
    %343 = vector.broadcast %342 : f32 to vector<8x57xf32>
    %344 = arith.addf %341, %343 : vector<8x57xf32>
    %cst_131 = arith.constant 0.000000e+00 : f32
    %345 = vector.broadcast %cst_131 : f32 to vector<8x57xf32>
    %346 = arith.cmpf ogt, %344, %345 : vector<8x57xf32>
    %347 = math.exp %344 : vector<8x57xf32>
    %cst_132 = arith.constant 1.000000e+00 : f32
    %348 = vector.broadcast %cst_132 : f32 to vector<8x57xf32>
    %349 = arith.subf %347, %348 : vector<8x57xf32>
    %350 = arith.select %346, %344, %349 : vector<8x57xi1>, vector<8x57xf32>
    %cst_133 = arith.constant 0.000000e+00 : f32
    %351 = vector.broadcast %cst_133 : f32 to vector<8x57xf32>
    %c7_134 = arith.constant 7 : index
    %c0_135 = arith.constant 0 : index
    %352 = memref.load %arg2[%c7_134, %c0_135] : memref<8x8xf32, #tpu.memory_space<smem>>
    %353 = vector.extract_strided_slice %0 {offsets = [0, 0], sizes = [8, 57], strides = [1, 1]} : vector<8x64xf32> to vector<8x57xf32>
    %354 = vector.broadcast %352 : f32 to vector<8x57xf32>
    %355 = arith.mulf %354, %353 : vector<8x57xf32>
    %356 = arith.addf %351, %355 : vector<8x57xf32>
    %c7_136 = arith.constant 7 : index
    %c1_137 = arith.constant 1 : index
    %357 = memref.load %arg2[%c7_136, %c1_137] : memref<8x8xf32, #tpu.memory_space<smem>>
    %358 = vector.extract_strided_slice %0 {offsets = [0, 1], sizes = [8, 57], strides = [1, 1]} : vector<8x64xf32> to vector<8x57xf32>
    %359 = vector.broadcast %357 : f32 to vector<8x57xf32>
    %360 = arith.mulf %359, %358 : vector<8x57xf32>
    %361 = arith.addf %356, %360 : vector<8x57xf32>
    %c7_138 = arith.constant 7 : index
    %c2_139 = arith.constant 2 : index
    %362 = memref.load %arg2[%c7_138, %c2_139] : memref<8x8xf32, #tpu.memory_space<smem>>
    %363 = vector.extract_strided_slice %0 {offsets = [0, 2], sizes = [8, 57], strides = [1, 1]} : vector<8x64xf32> to vector<8x57xf32>
    %364 = vector.broadcast %362 : f32 to vector<8x57xf32>
    %365 = arith.mulf %364, %363 : vector<8x57xf32>
    %366 = arith.addf %361, %365 : vector<8x57xf32>
    %c7_140 = arith.constant 7 : index
    %c3_141 = arith.constant 3 : index
    %367 = memref.load %arg2[%c7_140, %c3_141] : memref<8x8xf32, #tpu.memory_space<smem>>
    %368 = vector.extract_strided_slice %0 {offsets = [0, 3], sizes = [8, 57], strides = [1, 1]} : vector<8x64xf32> to vector<8x57xf32>
    %369 = vector.broadcast %367 : f32 to vector<8x57xf32>
    %370 = arith.mulf %369, %368 : vector<8x57xf32>
    %371 = arith.addf %366, %370 : vector<8x57xf32>
    %c7_142 = arith.constant 7 : index
    %c4_143 = arith.constant 4 : index
    %372 = memref.load %arg2[%c7_142, %c4_143] : memref<8x8xf32, #tpu.memory_space<smem>>
    %373 = vector.extract_strided_slice %0 {offsets = [0, 4], sizes = [8, 57], strides = [1, 1]} : vector<8x64xf32> to vector<8x57xf32>
    %374 = vector.broadcast %372 : f32 to vector<8x57xf32>
    %375 = arith.mulf %374, %373 : vector<8x57xf32>
    %376 = arith.addf %371, %375 : vector<8x57xf32>
    %c7_144 = arith.constant 7 : index
    %c5_145 = arith.constant 5 : index
    %377 = memref.load %arg2[%c7_144, %c5_145] : memref<8x8xf32, #tpu.memory_space<smem>>
    %378 = vector.extract_strided_slice %0 {offsets = [0, 5], sizes = [8, 57], strides = [1, 1]} : vector<8x64xf32> to vector<8x57xf32>
    %379 = vector.broadcast %377 : f32 to vector<8x57xf32>
    %380 = arith.mulf %379, %378 : vector<8x57xf32>
    %381 = arith.addf %376, %380 : vector<8x57xf32>
    %c7_146 = arith.constant 7 : index
    %c6_147 = arith.constant 6 : index
    %382 = memref.load %arg2[%c7_146, %c6_147] : memref<8x8xf32, #tpu.memory_space<smem>>
    %383 = vector.extract_strided_slice %0 {offsets = [0, 6], sizes = [8, 57], strides = [1, 1]} : vector<8x64xf32> to vector<8x57xf32>
    %384 = vector.broadcast %382 : f32 to vector<8x57xf32>
    %385 = arith.mulf %384, %383 : vector<8x57xf32>
    %386 = arith.addf %381, %385 : vector<8x57xf32>
    %c7_148 = arith.constant 7 : index
    %c7_149 = arith.constant 7 : index
    %387 = memref.load %arg2[%c7_148, %c7_149] : memref<8x8xf32, #tpu.memory_space<smem>>
    %388 = vector.extract_strided_slice %0 {offsets = [0, 7], sizes = [8, 57], strides = [1, 1]} : vector<8x64xf32> to vector<8x57xf32>
    %389 = vector.broadcast %387 : f32 to vector<8x57xf32>
    %390 = arith.mulf %389, %388 : vector<8x57xf32>
    %391 = arith.addf %386, %390 : vector<8x57xf32>
    %c7_150 = arith.constant 7 : index
    %392 = memref.load %arg3[%c7_150] : memref<8xf32, #tpu.memory_space<smem>>
    %393 = vector.broadcast %392 : f32 to vector<8x57xf32>
    %394 = arith.addf %391, %393 : vector<8x57xf32>
    %cst_151 = arith.constant 0.000000e+00 : f32
    %395 = vector.broadcast %cst_151 : f32 to vector<8x57xf32>
    %396 = arith.cmpf ogt, %394, %395 : vector<8x57xf32>
    %397 = math.exp %394 : vector<8x57xf32>
    %cst_152 = arith.constant 1.000000e+00 : f32
    %398 = vector.broadcast %cst_152 : f32 to vector<8x57xf32>
    %399 = arith.subf %397, %398 : vector<8x57xf32>
    %400 = arith.select %396, %394, %399 : vector<8x57xi1>, vector<8x57xf32>
    %cst_153 = arith.constant 0.000000e+00 : f32
    %401 = vector.broadcast %cst_153 : f32 to vector<8x4xf32>
    %402 = tpu.concatenate %401, %50, %401 in 1 : vector<8x4xf32>, vector<8x57xf32>, vector<8x4xf32> -> vector<8x65xf32>
    %403 = tpu.concatenate %401, %100, %401 in 1 : vector<8x4xf32>, vector<8x57xf32>, vector<8x4xf32> -> vector<8x65xf32>
    %404 = tpu.concatenate %401, %150, %401 in 1 : vector<8x4xf32>, vector<8x57xf32>, vector<8x4xf32> -> vector<8x65xf32>
    %405 = tpu.concatenate %401, %200, %401 in 1 : vector<8x4xf32>, vector<8x57xf32>, vector<8x4xf32> -> vector<8x65xf32>
    %406 = tpu.concatenate %401, %250, %401 in 1 : vector<8x4xf32>, vector<8x57xf32>, vector<8x4xf32> -> vector<8x65xf32>
    %407 = tpu.concatenate %401, %300, %401 in 1 : vector<8x4xf32>, vector<8x57xf32>, vector<8x4xf32> -> vector<8x65xf32>
    %408 = tpu.concatenate %401, %350, %401 in 1 : vector<8x4xf32>, vector<8x57xf32>, vector<8x4xf32> -> vector<8x65xf32>
    %409 = tpu.concatenate %401, %400, %401 in 1 : vector<8x4xf32>, vector<8x57xf32>, vector<8x4xf32> -> vector<8x65xf32>
    %cst_154 = arith.constant 0.000000e+00 : f32
    %410 = vector.broadcast %cst_154 : f32 to vector<8x57xf32>
    %c0_155 = arith.constant 0 : index
    %c0_156 = arith.constant 0 : index
    %411 = memref.load %arg4[%c0_155, %c0_156] : memref<8x9xf32, #tpu.memory_space<smem>>
    %412 = vector.extract_strided_slice %402 {offsets = [0, 0], sizes = [8, 57], strides = [1, 1]} : vector<8x65xf32> to vector<8x57xf32>
    %413 = vector.broadcast %411 : f32 to vector<8x57xf32>
    %414 = arith.mulf %413, %412 : vector<8x57xf32>
    %415 = arith.addf %410, %414 : vector<8x57xf32>
    %c0_157 = arith.constant 0 : index
    %c1_158 = arith.constant 1 : index
    %416 = memref.load %arg4[%c0_157, %c1_158] : memref<8x9xf32, #tpu.memory_space<smem>>
    %417 = vector.extract_strided_slice %402 {offsets = [0, 1], sizes = [8, 57], strides = [1, 1]} : vector<8x65xf32> to vector<8x57xf32>
    %418 = vector.broadcast %416 : f32 to vector<8x57xf32>
    %419 = arith.mulf %418, %417 : vector<8x57xf32>
    %420 = arith.addf %415, %419 : vector<8x57xf32>
    %c0_159 = arith.constant 0 : index
    %c2_160 = arith.constant 2 : index
    %421 = memref.load %arg4[%c0_159, %c2_160] : memref<8x9xf32, #tpu.memory_space<smem>>
    %422 = vector.extract_strided_slice %402 {offsets = [0, 2], sizes = [8, 57], strides = [1, 1]} : vector<8x65xf32> to vector<8x57xf32>
    %423 = vector.broadcast %421 : f32 to vector<8x57xf32>
    %424 = arith.mulf %423, %422 : vector<8x57xf32>
    %425 = arith.addf %420, %424 : vector<8x57xf32>
    %c0_161 = arith.constant 0 : index
    %c3_162 = arith.constant 3 : index
    %426 = memref.load %arg4[%c0_161, %c3_162] : memref<8x9xf32, #tpu.memory_space<smem>>
    %427 = vector.extract_strided_slice %402 {offsets = [0, 3], sizes = [8, 57], strides = [1, 1]} : vector<8x65xf32> to vector<8x57xf32>
    %428 = vector.broadcast %426 : f32 to vector<8x57xf32>
    %429 = arith.mulf %428, %427 : vector<8x57xf32>
    %430 = arith.addf %425, %429 : vector<8x57xf32>
    %c0_163 = arith.constant 0 : index
    %c4_164 = arith.constant 4 : index
    %431 = memref.load %arg4[%c0_163, %c4_164] : memref<8x9xf32, #tpu.memory_space<smem>>
    %432 = vector.extract_strided_slice %402 {offsets = [0, 4], sizes = [8, 57], strides = [1, 1]} : vector<8x65xf32> to vector<8x57xf32>
    %433 = vector.broadcast %431 : f32 to vector<8x57xf32>
    %434 = arith.mulf %433, %432 : vector<8x57xf32>
    %435 = arith.addf %430, %434 : vector<8x57xf32>
    %c0_165 = arith.constant 0 : index
    %c5_166 = arith.constant 5 : index
    %436 = memref.load %arg4[%c0_165, %c5_166] : memref<8x9xf32, #tpu.memory_space<smem>>
    %437 = vector.extract_strided_slice %402 {offsets = [0, 5], sizes = [8, 57], strides = [1, 1]} : vector<8x65xf32> to vector<8x57xf32>
    %438 = vector.broadcast %436 : f32 to vector<8x57xf32>
    %439 = arith.mulf %438, %437 : vector<8x57xf32>
    %440 = arith.addf %435, %439 : vector<8x57xf32>
    %c0_167 = arith.constant 0 : index
    %c6_168 = arith.constant 6 : index
    %441 = memref.load %arg4[%c0_167, %c6_168] : memref<8x9xf32, #tpu.memory_space<smem>>
    %442 = vector.extract_strided_slice %402 {offsets = [0, 6], sizes = [8, 57], strides = [1, 1]} : vector<8x65xf32> to vector<8x57xf32>
    %443 = vector.broadcast %441 : f32 to vector<8x57xf32>
    %444 = arith.mulf %443, %442 : vector<8x57xf32>
    %445 = arith.addf %440, %444 : vector<8x57xf32>
    %c0_169 = arith.constant 0 : index
    %c7_170 = arith.constant 7 : index
    %446 = memref.load %arg4[%c0_169, %c7_170] : memref<8x9xf32, #tpu.memory_space<smem>>
    %447 = vector.extract_strided_slice %402 {offsets = [0, 7], sizes = [8, 57], strides = [1, 1]} : vector<8x65xf32> to vector<8x57xf32>
    %448 = vector.broadcast %446 : f32 to vector<8x57xf32>
    %449 = arith.mulf %448, %447 : vector<8x57xf32>
    %450 = arith.addf %445, %449 : vector<8x57xf32>
    %c0_171 = arith.constant 0 : index
    %c8 = arith.constant 8 : index
    %451 = memref.load %arg4[%c0_171, %c8] : memref<8x9xf32, #tpu.memory_space<smem>>
    %452 = vector.extract_strided_slice %402 {offsets = [0, 8], sizes = [8, 57], strides = [1, 1]} : vector<8x65xf32> to vector<8x57xf32>
    %453 = vector.broadcast %451 : f32 to vector<8x57xf32>
    %454 = arith.mulf %453, %452 : vector<8x57xf32>
    %455 = arith.addf %450, %454 : vector<8x57xf32>
    %c0_172 = arith.constant 0 : index
    %456 = memref.load %arg5[%c0_172] : memref<8xf32, #tpu.memory_space<smem>>
    %457 = vector.broadcast %456 : f32 to vector<8x57xf32>
    %458 = arith.addf %455, %457 : vector<8x57xf32>
    %cst_173 = arith.constant 0.000000e+00 : f32
    %459 = vector.broadcast %cst_173 : f32 to vector<8x57xf32>
    %c1_174 = arith.constant 1 : index
    %c0_175 = arith.constant 0 : index
    %460 = memref.load %arg4[%c1_174, %c0_175] : memref<8x9xf32, #tpu.memory_space<smem>>
    %461 = vector.extract_strided_slice %403 {offsets = [0, 0], sizes = [8, 57], strides = [1, 1]} : vector<8x65xf32> to vector<8x57xf32>
    %462 = vector.broadcast %460 : f32 to vector<8x57xf32>
    %463 = arith.mulf %462, %461 : vector<8x57xf32>
    %464 = arith.addf %459, %463 : vector<8x57xf32>
    %c1_176 = arith.constant 1 : index
    %c1_177 = arith.constant 1 : index
    %465 = memref.load %arg4[%c1_176, %c1_177] : memref<8x9xf32, #tpu.memory_space<smem>>
    %466 = vector.extract_strided_slice %403 {offsets = [0, 1], sizes = [8, 57], strides = [1, 1]} : vector<8x65xf32> to vector<8x57xf32>
    %467 = vector.broadcast %465 : f32 to vector<8x57xf32>
    %468 = arith.mulf %467, %466 : vector<8x57xf32>
    %469 = arith.addf %464, %468 : vector<8x57xf32>
    %c1_178 = arith.constant 1 : index
    %c2_179 = arith.constant 2 : index
    %470 = memref.load %arg4[%c1_178, %c2_179] : memref<8x9xf32, #tpu.memory_space<smem>>
    %471 = vector.extract_strided_slice %403 {offsets = [0, 2], sizes = [8, 57], strides = [1, 1]} : vector<8x65xf32> to vector<8x57xf32>
    %472 = vector.broadcast %470 : f32 to vector<8x57xf32>
    %473 = arith.mulf %472, %471 : vector<8x57xf32>
    %474 = arith.addf %469, %473 : vector<8x57xf32>
    %c1_180 = arith.constant 1 : index
    %c3_181 = arith.constant 3 : index
    %475 = memref.load %arg4[%c1_180, %c3_181] : memref<8x9xf32, #tpu.memory_space<smem>>
    %476 = vector.extract_strided_slice %403 {offsets = [0, 3], sizes = [8, 57], strides = [1, 1]} : vector<8x65xf32> to vector<8x57xf32>
    %477 = vector.broadcast %475 : f32 to vector<8x57xf32>
    %478 = arith.mulf %477, %476 : vector<8x57xf32>
    %479 = arith.addf %474, %478 : vector<8x57xf32>
    %c1_182 = arith.constant 1 : index
    %c4_183 = arith.constant 4 : index
    %480 = memref.load %arg4[%c1_182, %c4_183] : memref<8x9xf32, #tpu.memory_space<smem>>
    %481 = vector.extract_strided_slice %403 {offsets = [0, 4], sizes = [8, 57], strides = [1, 1]} : vector<8x65xf32> to vector<8x57xf32>
    %482 = vector.broadcast %480 : f32 to vector<8x57xf32>
    %483 = arith.mulf %482, %481 : vector<8x57xf32>
    %484 = arith.addf %479, %483 : vector<8x57xf32>
    %c1_184 = arith.constant 1 : index
    %c5_185 = arith.constant 5 : index
    %485 = memref.load %arg4[%c1_184, %c5_185] : memref<8x9xf32, #tpu.memory_space<smem>>
    %486 = vector.extract_strided_slice %403 {offsets = [0, 5], sizes = [8, 57], strides = [1, 1]} : vector<8x65xf32> to vector<8x57xf32>
    %487 = vector.broadcast %485 : f32 to vector<8x57xf32>
    %488 = arith.mulf %487, %486 : vector<8x57xf32>
    %489 = arith.addf %484, %488 : vector<8x57xf32>
    %c1_186 = arith.constant 1 : index
    %c6_187 = arith.constant 6 : index
    %490 = memref.load %arg4[%c1_186, %c6_187] : memref<8x9xf32, #tpu.memory_space<smem>>
    %491 = vector.extract_strided_slice %403 {offsets = [0, 6], sizes = [8, 57], strides = [1, 1]} : vector<8x65xf32> to vector<8x57xf32>
    %492 = vector.broadcast %490 : f32 to vector<8x57xf32>
    %493 = arith.mulf %492, %491 : vector<8x57xf32>
    %494 = arith.addf %489, %493 : vector<8x57xf32>
    %c1_188 = arith.constant 1 : index
    %c7_189 = arith.constant 7 : index
    %495 = memref.load %arg4[%c1_188, %c7_189] : memref<8x9xf32, #tpu.memory_space<smem>>
    %496 = vector.extract_strided_slice %403 {offsets = [0, 7], sizes = [8, 57], strides = [1, 1]} : vector<8x65xf32> to vector<8x57xf32>
    %497 = vector.broadcast %495 : f32 to vector<8x57xf32>
    %498 = arith.mulf %497, %496 : vector<8x57xf32>
    %499 = arith.addf %494, %498 : vector<8x57xf32>
    %c1_190 = arith.constant 1 : index
    %c8_191 = arith.constant 8 : index
    %500 = memref.load %arg4[%c1_190, %c8_191] : memref<8x9xf32, #tpu.memory_space<smem>>
    %501 = vector.extract_strided_slice %403 {offsets = [0, 8], sizes = [8, 57], strides = [1, 1]} : vector<8x65xf32> to vector<8x57xf32>
    %502 = vector.broadcast %500 : f32 to vector<8x57xf32>
    %503 = arith.mulf %502, %501 : vector<8x57xf32>
    %504 = arith.addf %499, %503 : vector<8x57xf32>
    %c1_192 = arith.constant 1 : index
    %505 = memref.load %arg5[%c1_192] : memref<8xf32, #tpu.memory_space<smem>>
    %506 = vector.broadcast %505 : f32 to vector<8x57xf32>
    %507 = arith.addf %504, %506 : vector<8x57xf32>
    %cst_193 = arith.constant 0.000000e+00 : f32
    %508 = vector.broadcast %cst_193 : f32 to vector<8x57xf32>
    %c2_194 = arith.constant 2 : index
    %c0_195 = arith.constant 0 : index
    %509 = memref.load %arg4[%c2_194, %c0_195] : memref<8x9xf32, #tpu.memory_space<smem>>
    %510 = vector.extract_strided_slice %404 {offsets = [0, 0], sizes = [8, 57], strides = [1, 1]} : vector<8x65xf32> to vector<8x57xf32>
    %511 = vector.broadcast %509 : f32 to vector<8x57xf32>
    %512 = arith.mulf %511, %510 : vector<8x57xf32>
    %513 = arith.addf %508, %512 : vector<8x57xf32>
    %c2_196 = arith.constant 2 : index
    %c1_197 = arith.constant 1 : index
    %514 = memref.load %arg4[%c2_196, %c1_197] : memref<8x9xf32, #tpu.memory_space<smem>>
    %515 = vector.extract_strided_slice %404 {offsets = [0, 1], sizes = [8, 57], strides = [1, 1]} : vector<8x65xf32> to vector<8x57xf32>
    %516 = vector.broadcast %514 : f32 to vector<8x57xf32>
    %517 = arith.mulf %516, %515 : vector<8x57xf32>
    %518 = arith.addf %513, %517 : vector<8x57xf32>
    %c2_198 = arith.constant 2 : index
    %c2_199 = arith.constant 2 : index
    %519 = memref.load %arg4[%c2_198, %c2_199] : memref<8x9xf32, #tpu.memory_space<smem>>
    %520 = vector.extract_strided_slice %404 {offsets = [0, 2], sizes = [8, 57], strides = [1, 1]} : vector<8x65xf32> to vector<8x57xf32>
    %521 = vector.broadcast %519 : f32 to vector<8x57xf32>
    %522 = arith.mulf %521, %520 : vector<8x57xf32>
    %523 = arith.addf %518, %522 : vector<8x57xf32>
    %c2_200 = arith.constant 2 : index
    %c3_201 = arith.constant 3 : index
    %524 = memref.load %arg4[%c2_200, %c3_201] : memref<8x9xf32, #tpu.memory_space<smem>>
    %525 = vector.extract_strided_slice %404 {offsets = [0, 3], sizes = [8, 57], strides = [1, 1]} : vector<8x65xf32> to vector<8x57xf32>
    %526 = vector.broadcast %524 : f32 to vector<8x57xf32>
    %527 = arith.mulf %526, %525 : vector<8x57xf32>
    %528 = arith.addf %523, %527 : vector<8x57xf32>
    %c2_202 = arith.constant 2 : index
    %c4_203 = arith.constant 4 : index
    %529 = memref.load %arg4[%c2_202, %c4_203] : memref<8x9xf32, #tpu.memory_space<smem>>
    %530 = vector.extract_strided_slice %404 {offsets = [0, 4], sizes = [8, 57], strides = [1, 1]} : vector<8x65xf32> to vector<8x57xf32>
    %531 = vector.broadcast %529 : f32 to vector<8x57xf32>
    %532 = arith.mulf %531, %530 : vector<8x57xf32>
    %533 = arith.addf %528, %532 : vector<8x57xf32>
    %c2_204 = arith.constant 2 : index
    %c5_205 = arith.constant 5 : index
    %534 = memref.load %arg4[%c2_204, %c5_205] : memref<8x9xf32, #tpu.memory_space<smem>>
    %535 = vector.extract_strided_slice %404 {offsets = [0, 5], sizes = [8, 57], strides = [1, 1]} : vector<8x65xf32> to vector<8x57xf32>
    %536 = vector.broadcast %534 : f32 to vector<8x57xf32>
    %537 = arith.mulf %536, %535 : vector<8x57xf32>
    %538 = arith.addf %533, %537 : vector<8x57xf32>
    %c2_206 = arith.constant 2 : index
    %c6_207 = arith.constant 6 : index
    %539 = memref.load %arg4[%c2_206, %c6_207] : memref<8x9xf32, #tpu.memory_space<smem>>
    %540 = vector.extract_strided_slice %404 {offsets = [0, 6], sizes = [8, 57], strides = [1, 1]} : vector<8x65xf32> to vector<8x57xf32>
    %541 = vector.broadcast %539 : f32 to vector<8x57xf32>
    %542 = arith.mulf %541, %540 : vector<8x57xf32>
    %543 = arith.addf %538, %542 : vector<8x57xf32>
    %c2_208 = arith.constant 2 : index
    %c7_209 = arith.constant 7 : index
    %544 = memref.load %arg4[%c2_208, %c7_209] : memref<8x9xf32, #tpu.memory_space<smem>>
    %545 = vector.extract_strided_slice %404 {offsets = [0, 7], sizes = [8, 57], strides = [1, 1]} : vector<8x65xf32> to vector<8x57xf32>
    %546 = vector.broadcast %544 : f32 to vector<8x57xf32>
    %547 = arith.mulf %546, %545 : vector<8x57xf32>
    %548 = arith.addf %543, %547 : vector<8x57xf32>
    %c2_210 = arith.constant 2 : index
    %c8_211 = arith.constant 8 : index
    %549 = memref.load %arg4[%c2_210, %c8_211] : memref<8x9xf32, #tpu.memory_space<smem>>
    %550 = vector.extract_strided_slice %404 {offsets = [0, 8], sizes = [8, 57], strides = [1, 1]} : vector<8x65xf32> to vector<8x57xf32>
    %551 = vector.broadcast %549 : f32 to vector<8x57xf32>
    %552 = arith.mulf %551, %550 : vector<8x57xf32>
    %553 = arith.addf %548, %552 : vector<8x57xf32>
    %c2_212 = arith.constant 2 : index
    %554 = memref.load %arg5[%c2_212] : memref<8xf32, #tpu.memory_space<smem>>
    %555 = vector.broadcast %554 : f32 to vector<8x57xf32>
    %556 = arith.addf %553, %555 : vector<8x57xf32>
    %cst_213 = arith.constant 0.000000e+00 : f32
    %557 = vector.broadcast %cst_213 : f32 to vector<8x57xf32>
    %c3_214 = arith.constant 3 : index
    %c0_215 = arith.constant 0 : index
    %558 = memref.load %arg4[%c3_214, %c0_215] : memref<8x9xf32, #tpu.memory_space<smem>>
    %559 = vector.extract_strided_slice %405 {offsets = [0, 0], sizes = [8, 57], strides = [1, 1]} : vector<8x65xf32> to vector<8x57xf32>
    %560 = vector.broadcast %558 : f32 to vector<8x57xf32>
    %561 = arith.mulf %560, %559 : vector<8x57xf32>
    %562 = arith.addf %557, %561 : vector<8x57xf32>
    %c3_216 = arith.constant 3 : index
    %c1_217 = arith.constant 1 : index
    %563 = memref.load %arg4[%c3_216, %c1_217] : memref<8x9xf32, #tpu.memory_space<smem>>
    %564 = vector.extract_strided_slice %405 {offsets = [0, 1], sizes = [8, 57], strides = [1, 1]} : vector<8x65xf32> to vector<8x57xf32>
    %565 = vector.broadcast %563 : f32 to vector<8x57xf32>
    %566 = arith.mulf %565, %564 : vector<8x57xf32>
    %567 = arith.addf %562, %566 : vector<8x57xf32>
    %c3_218 = arith.constant 3 : index
    %c2_219 = arith.constant 2 : index
    %568 = memref.load %arg4[%c3_218, %c2_219] : memref<8x9xf32, #tpu.memory_space<smem>>
    %569 = vector.extract_strided_slice %405 {offsets = [0, 2], sizes = [8, 57], strides = [1, 1]} : vector<8x65xf32> to vector<8x57xf32>
    %570 = vector.broadcast %568 : f32 to vector<8x57xf32>
    %571 = arith.mulf %570, %569 : vector<8x57xf32>
    %572 = arith.addf %567, %571 : vector<8x57xf32>
    %c3_220 = arith.constant 3 : index
    %c3_221 = arith.constant 3 : index
    %573 = memref.load %arg4[%c3_220, %c3_221] : memref<8x9xf32, #tpu.memory_space<smem>>
    %574 = vector.extract_strided_slice %405 {offsets = [0, 3], sizes = [8, 57], strides = [1, 1]} : vector<8x65xf32> to vector<8x57xf32>
    %575 = vector.broadcast %573 : f32 to vector<8x57xf32>
    %576 = arith.mulf %575, %574 : vector<8x57xf32>
    %577 = arith.addf %572, %576 : vector<8x57xf32>
    %c3_222 = arith.constant 3 : index
    %c4_223 = arith.constant 4 : index
    %578 = memref.load %arg4[%c3_222, %c4_223] : memref<8x9xf32, #tpu.memory_space<smem>>
    %579 = vector.extract_strided_slice %405 {offsets = [0, 4], sizes = [8, 57], strides = [1, 1]} : vector<8x65xf32> to vector<8x57xf32>
    %580 = vector.broadcast %578 : f32 to vector<8x57xf32>
    %581 = arith.mulf %580, %579 : vector<8x57xf32>
    %582 = arith.addf %577, %581 : vector<8x57xf32>
    %c3_224 = arith.constant 3 : index
    %c5_225 = arith.constant 5 : index
    %583 = memref.load %arg4[%c3_224, %c5_225] : memref<8x9xf32, #tpu.memory_space<smem>>
    %584 = vector.extract_strided_slice %405 {offsets = [0, 5], sizes = [8, 57], strides = [1, 1]} : vector<8x65xf32> to vector<8x57xf32>
    %585 = vector.broadcast %583 : f32 to vector<8x57xf32>
    %586 = arith.mulf %585, %584 : vector<8x57xf32>
    %587 = arith.addf %582, %586 : vector<8x57xf32>
    %c3_226 = arith.constant 3 : index
    %c6_227 = arith.constant 6 : index
    %588 = memref.load %arg4[%c3_226, %c6_227] : memref<8x9xf32, #tpu.memory_space<smem>>
    %589 = vector.extract_strided_slice %405 {offsets = [0, 6], sizes = [8, 57], strides = [1, 1]} : vector<8x65xf32> to vector<8x57xf32>
    %590 = vector.broadcast %588 : f32 to vector<8x57xf32>
    %591 = arith.mulf %590, %589 : vector<8x57xf32>
    %592 = arith.addf %587, %591 : vector<8x57xf32>
    %c3_228 = arith.constant 3 : index
    %c7_229 = arith.constant 7 : index
    %593 = memref.load %arg4[%c3_228, %c7_229] : memref<8x9xf32, #tpu.memory_space<smem>>
    %594 = vector.extract_strided_slice %405 {offsets = [0, 7], sizes = [8, 57], strides = [1, 1]} : vector<8x65xf32> to vector<8x57xf32>
    %595 = vector.broadcast %593 : f32 to vector<8x57xf32>
    %596 = arith.mulf %595, %594 : vector<8x57xf32>
    %597 = arith.addf %592, %596 : vector<8x57xf32>
    %c3_230 = arith.constant 3 : index
    %c8_231 = arith.constant 8 : index
    %598 = memref.load %arg4[%c3_230, %c8_231] : memref<8x9xf32, #tpu.memory_space<smem>>
    %599 = vector.extract_strided_slice %405 {offsets = [0, 8], sizes = [8, 57], strides = [1, 1]} : vector<8x65xf32> to vector<8x57xf32>
    %600 = vector.broadcast %598 : f32 to vector<8x57xf32>
    %601 = arith.mulf %600, %599 : vector<8x57xf32>
    %602 = arith.addf %597, %601 : vector<8x57xf32>
    %c3_232 = arith.constant 3 : index
    %603 = memref.load %arg5[%c3_232] : memref<8xf32, #tpu.memory_space<smem>>
    %604 = vector.broadcast %603 : f32 to vector<8x57xf32>
    %605 = arith.addf %602, %604 : vector<8x57xf32>
    %cst_233 = arith.constant 0.000000e+00 : f32
    %606 = vector.broadcast %cst_233 : f32 to vector<8x57xf32>
    %c4_234 = arith.constant 4 : index
    %c0_235 = arith.constant 0 : index
    %607 = memref.load %arg4[%c4_234, %c0_235] : memref<8x9xf32, #tpu.memory_space<smem>>
    %608 = vector.extract_strided_slice %406 {offsets = [0, 0], sizes = [8, 57], strides = [1, 1]} : vector<8x65xf32> to vector<8x57xf32>
    %609 = vector.broadcast %607 : f32 to vector<8x57xf32>
    %610 = arith.mulf %609, %608 : vector<8x57xf32>
    %611 = arith.addf %606, %610 : vector<8x57xf32>
    %c4_236 = arith.constant 4 : index
    %c1_237 = arith.constant 1 : index
    %612 = memref.load %arg4[%c4_236, %c1_237] : memref<8x9xf32, #tpu.memory_space<smem>>
    %613 = vector.extract_strided_slice %406 {offsets = [0, 1], sizes = [8, 57], strides = [1, 1]} : vector<8x65xf32> to vector<8x57xf32>
    %614 = vector.broadcast %612 : f32 to vector<8x57xf32>
    %615 = arith.mulf %614, %613 : vector<8x57xf32>
    %616 = arith.addf %611, %615 : vector<8x57xf32>
    %c4_238 = arith.constant 4 : index
    %c2_239 = arith.constant 2 : index
    %617 = memref.load %arg4[%c4_238, %c2_239] : memref<8x9xf32, #tpu.memory_space<smem>>
    %618 = vector.extract_strided_slice %406 {offsets = [0, 2], sizes = [8, 57], strides = [1, 1]} : vector<8x65xf32> to vector<8x57xf32>
    %619 = vector.broadcast %617 : f32 to vector<8x57xf32>
    %620 = arith.mulf %619, %618 : vector<8x57xf32>
    %621 = arith.addf %616, %620 : vector<8x57xf32>
    %c4_240 = arith.constant 4 : index
    %c3_241 = arith.constant 3 : index
    %622 = memref.load %arg4[%c4_240, %c3_241] : memref<8x9xf32, #tpu.memory_space<smem>>
    %623 = vector.extract_strided_slice %406 {offsets = [0, 3], sizes = [8, 57], strides = [1, 1]} : vector<8x65xf32> to vector<8x57xf32>
    %624 = vector.broadcast %622 : f32 to vector<8x57xf32>
    %625 = arith.mulf %624, %623 : vector<8x57xf32>
    %626 = arith.addf %621, %625 : vector<8x57xf32>
    %c4_242 = arith.constant 4 : index
    %c4_243 = arith.constant 4 : index
    %627 = memref.load %arg4[%c4_242, %c4_243] : memref<8x9xf32, #tpu.memory_space<smem>>
    %628 = vector.extract_strided_slice %406 {offsets = [0, 4], sizes = [8, 57], strides = [1, 1]} : vector<8x65xf32> to vector<8x57xf32>
    %629 = vector.broadcast %627 : f32 to vector<8x57xf32>
    %630 = arith.mulf %629, %628 : vector<8x57xf32>
    %631 = arith.addf %626, %630 : vector<8x57xf32>
    %c4_244 = arith.constant 4 : index
    %c5_245 = arith.constant 5 : index
    %632 = memref.load %arg4[%c4_244, %c5_245] : memref<8x9xf32, #tpu.memory_space<smem>>
    %633 = vector.extract_strided_slice %406 {offsets = [0, 5], sizes = [8, 57], strides = [1, 1]} : vector<8x65xf32> to vector<8x57xf32>
    %634 = vector.broadcast %632 : f32 to vector<8x57xf32>
    %635 = arith.mulf %634, %633 : vector<8x57xf32>
    %636 = arith.addf %631, %635 : vector<8x57xf32>
    %c4_246 = arith.constant 4 : index
    %c6_247 = arith.constant 6 : index
    %637 = memref.load %arg4[%c4_246, %c6_247] : memref<8x9xf32, #tpu.memory_space<smem>>
    %638 = vector.extract_strided_slice %406 {offsets = [0, 6], sizes = [8, 57], strides = [1, 1]} : vector<8x65xf32> to vector<8x57xf32>
    %639 = vector.broadcast %637 : f32 to vector<8x57xf32>
    %640 = arith.mulf %639, %638 : vector<8x57xf32>
    %641 = arith.addf %636, %640 : vector<8x57xf32>
    %c4_248 = arith.constant 4 : index
    %c7_249 = arith.constant 7 : index
    %642 = memref.load %arg4[%c4_248, %c7_249] : memref<8x9xf32, #tpu.memory_space<smem>>
    %643 = vector.extract_strided_slice %406 {offsets = [0, 7], sizes = [8, 57], strides = [1, 1]} : vector<8x65xf32> to vector<8x57xf32>
    %644 = vector.broadcast %642 : f32 to vector<8x57xf32>
    %645 = arith.mulf %644, %643 : vector<8x57xf32>
    %646 = arith.addf %641, %645 : vector<8x57xf32>
    %c4_250 = arith.constant 4 : index
    %c8_251 = arith.constant 8 : index
    %647 = memref.load %arg4[%c4_250, %c8_251] : memref<8x9xf32, #tpu.memory_space<smem>>
    %648 = vector.extract_strided_slice %406 {offsets = [0, 8], sizes = [8, 57], strides = [1, 1]} : vector<8x65xf32> to vector<8x57xf32>
    %649 = vector.broadcast %647 : f32 to vector<8x57xf32>
    %650 = arith.mulf %649, %648 : vector<8x57xf32>
    %651 = arith.addf %646, %650 : vector<8x57xf32>
    %c4_252 = arith.constant 4 : index
    %652 = memref.load %arg5[%c4_252] : memref<8xf32, #tpu.memory_space<smem>>
    %653 = vector.broadcast %652 : f32 to vector<8x57xf32>
    %654 = arith.addf %651, %653 : vector<8x57xf32>
    %cst_253 = arith.constant 0.000000e+00 : f32
    %655 = vector.broadcast %cst_253 : f32 to vector<8x57xf32>
    %c5_254 = arith.constant 5 : index
    %c0_255 = arith.constant 0 : index
    %656 = memref.load %arg4[%c5_254, %c0_255] : memref<8x9xf32, #tpu.memory_space<smem>>
    %657 = vector.extract_strided_slice %407 {offsets = [0, 0], sizes = [8, 57], strides = [1, 1]} : vector<8x65xf32> to vector<8x57xf32>
    %658 = vector.broadcast %656 : f32 to vector<8x57xf32>
    %659 = arith.mulf %658, %657 : vector<8x57xf32>
    %660 = arith.addf %655, %659 : vector<8x57xf32>
    %c5_256 = arith.constant 5 : index
    %c1_257 = arith.constant 1 : index
    %661 = memref.load %arg4[%c5_256, %c1_257] : memref<8x9xf32, #tpu.memory_space<smem>>
    %662 = vector.extract_strided_slice %407 {offsets = [0, 1], sizes = [8, 57], strides = [1, 1]} : vector<8x65xf32> to vector<8x57xf32>
    %663 = vector.broadcast %661 : f32 to vector<8x57xf32>
    %664 = arith.mulf %663, %662 : vector<8x57xf32>
    %665 = arith.addf %660, %664 : vector<8x57xf32>
    %c5_258 = arith.constant 5 : index
    %c2_259 = arith.constant 2 : index
    %666 = memref.load %arg4[%c5_258, %c2_259] : memref<8x9xf32, #tpu.memory_space<smem>>
    %667 = vector.extract_strided_slice %407 {offsets = [0, 2], sizes = [8, 57], strides = [1, 1]} : vector<8x65xf32> to vector<8x57xf32>
    %668 = vector.broadcast %666 : f32 to vector<8x57xf32>
    %669 = arith.mulf %668, %667 : vector<8x57xf32>
    %670 = arith.addf %665, %669 : vector<8x57xf32>
    %c5_260 = arith.constant 5 : index
    %c3_261 = arith.constant 3 : index
    %671 = memref.load %arg4[%c5_260, %c3_261] : memref<8x9xf32, #tpu.memory_space<smem>>
    %672 = vector.extract_strided_slice %407 {offsets = [0, 3], sizes = [8, 57], strides = [1, 1]} : vector<8x65xf32> to vector<8x57xf32>
    %673 = vector.broadcast %671 : f32 to vector<8x57xf32>
    %674 = arith.mulf %673, %672 : vector<8x57xf32>
    %675 = arith.addf %670, %674 : vector<8x57xf32>
    %c5_262 = arith.constant 5 : index
    %c4_263 = arith.constant 4 : index
    %676 = memref.load %arg4[%c5_262, %c4_263] : memref<8x9xf32, #tpu.memory_space<smem>>
    %677 = vector.extract_strided_slice %407 {offsets = [0, 4], sizes = [8, 57], strides = [1, 1]} : vector<8x65xf32> to vector<8x57xf32>
    %678 = vector.broadcast %676 : f32 to vector<8x57xf32>
    %679 = arith.mulf %678, %677 : vector<8x57xf32>
    %680 = arith.addf %675, %679 : vector<8x57xf32>
    %c5_264 = arith.constant 5 : index
    %c5_265 = arith.constant 5 : index
    %681 = memref.load %arg4[%c5_264, %c5_265] : memref<8x9xf32, #tpu.memory_space<smem>>
    %682 = vector.extract_strided_slice %407 {offsets = [0, 5], sizes = [8, 57], strides = [1, 1]} : vector<8x65xf32> to vector<8x57xf32>
    %683 = vector.broadcast %681 : f32 to vector<8x57xf32>
    %684 = arith.mulf %683, %682 : vector<8x57xf32>
    %685 = arith.addf %680, %684 : vector<8x57xf32>
    %c5_266 = arith.constant 5 : index
    %c6_267 = arith.constant 6 : index
    %686 = memref.load %arg4[%c5_266, %c6_267] : memref<8x9xf32, #tpu.memory_space<smem>>
    %687 = vector.extract_strided_slice %407 {offsets = [0, 6], sizes = [8, 57], strides = [1, 1]} : vector<8x65xf32> to vector<8x57xf32>
    %688 = vector.broadcast %686 : f32 to vector<8x57xf32>
    %689 = arith.mulf %688, %687 : vector<8x57xf32>
    %690 = arith.addf %685, %689 : vector<8x57xf32>
    %c5_268 = arith.constant 5 : index
    %c7_269 = arith.constant 7 : index
    %691 = memref.load %arg4[%c5_268, %c7_269] : memref<8x9xf32, #tpu.memory_space<smem>>
    %692 = vector.extract_strided_slice %407 {offsets = [0, 7], sizes = [8, 57], strides = [1, 1]} : vector<8x65xf32> to vector<8x57xf32>
    %693 = vector.broadcast %691 : f32 to vector<8x57xf32>
    %694 = arith.mulf %693, %692 : vector<8x57xf32>
    %695 = arith.addf %690, %694 : vector<8x57xf32>
    %c5_270 = arith.constant 5 : index
    %c8_271 = arith.constant 8 : index
    %696 = memref.load %arg4[%c5_270, %c8_271] : memref<8x9xf32, #tpu.memory_space<smem>>
    %697 = vector.extract_strided_slice %407 {offsets = [0, 8], sizes = [8, 57], strides = [1, 1]} : vector<8x65xf32> to vector<8x57xf32>
    %698 = vector.broadcast %696 : f32 to vector<8x57xf32>
    %699 = arith.mulf %698, %697 : vector<8x57xf32>
    %700 = arith.addf %695, %699 : vector<8x57xf32>
    %c5_272 = arith.constant 5 : index
    %701 = memref.load %arg5[%c5_272] : memref<8xf32, #tpu.memory_space<smem>>
    %702 = vector.broadcast %701 : f32 to vector<8x57xf32>
    %703 = arith.addf %700, %702 : vector<8x57xf32>
    %cst_273 = arith.constant 0.000000e+00 : f32
    %704 = vector.broadcast %cst_273 : f32 to vector<8x57xf32>
    %c6_274 = arith.constant 6 : index
    %c0_275 = arith.constant 0 : index
    %705 = memref.load %arg4[%c6_274, %c0_275] : memref<8x9xf32, #tpu.memory_space<smem>>
    %706 = vector.extract_strided_slice %408 {offsets = [0, 0], sizes = [8, 57], strides = [1, 1]} : vector<8x65xf32> to vector<8x57xf32>
    %707 = vector.broadcast %705 : f32 to vector<8x57xf32>
    %708 = arith.mulf %707, %706 : vector<8x57xf32>
    %709 = arith.addf %704, %708 : vector<8x57xf32>
    %c6_276 = arith.constant 6 : index
    %c1_277 = arith.constant 1 : index
    %710 = memref.load %arg4[%c6_276, %c1_277] : memref<8x9xf32, #tpu.memory_space<smem>>
    %711 = vector.extract_strided_slice %408 {offsets = [0, 1], sizes = [8, 57], strides = [1, 1]} : vector<8x65xf32> to vector<8x57xf32>
    %712 = vector.broadcast %710 : f32 to vector<8x57xf32>
    %713 = arith.mulf %712, %711 : vector<8x57xf32>
    %714 = arith.addf %709, %713 : vector<8x57xf32>
    %c6_278 = arith.constant 6 : index
    %c2_279 = arith.constant 2 : index
    %715 = memref.load %arg4[%c6_278, %c2_279] : memref<8x9xf32, #tpu.memory_space<smem>>
    %716 = vector.extract_strided_slice %408 {offsets = [0, 2], sizes = [8, 57], strides = [1, 1]} : vector<8x65xf32> to vector<8x57xf32>
    %717 = vector.broadcast %715 : f32 to vector<8x57xf32>
    %718 = arith.mulf %717, %716 : vector<8x57xf32>
    %719 = arith.addf %714, %718 : vector<8x57xf32>
    %c6_280 = arith.constant 6 : index
    %c3_281 = arith.constant 3 : index
    %720 = memref.load %arg4[%c6_280, %c3_281] : memref<8x9xf32, #tpu.memory_space<smem>>
    %721 = vector.extract_strided_slice %408 {offsets = [0, 3], sizes = [8, 57], strides = [1, 1]} : vector<8x65xf32> to vector<8x57xf32>
    %722 = vector.broadcast %720 : f32 to vector<8x57xf32>
    %723 = arith.mulf %722, %721 : vector<8x57xf32>
    %724 = arith.addf %719, %723 : vector<8x57xf32>
    %c6_282 = arith.constant 6 : index
    %c4_283 = arith.constant 4 : index
    %725 = memref.load %arg4[%c6_282, %c4_283] : memref<8x9xf32, #tpu.memory_space<smem>>
    %726 = vector.extract_strided_slice %408 {offsets = [0, 4], sizes = [8, 57], strides = [1, 1]} : vector<8x65xf32> to vector<8x57xf32>
    %727 = vector.broadcast %725 : f32 to vector<8x57xf32>
    %728 = arith.mulf %727, %726 : vector<8x57xf32>
    %729 = arith.addf %724, %728 : vector<8x57xf32>
    %c6_284 = arith.constant 6 : index
    %c5_285 = arith.constant 5 : index
    %730 = memref.load %arg4[%c6_284, %c5_285] : memref<8x9xf32, #tpu.memory_space<smem>>
    %731 = vector.extract_strided_slice %408 {offsets = [0, 5], sizes = [8, 57], strides = [1, 1]} : vector<8x65xf32> to vector<8x57xf32>
    %732 = vector.broadcast %730 : f32 to vector<8x57xf32>
    %733 = arith.mulf %732, %731 : vector<8x57xf32>
    %734 = arith.addf %729, %733 : vector<8x57xf32>
    %c6_286 = arith.constant 6 : index
    %c6_287 = arith.constant 6 : index
    %735 = memref.load %arg4[%c6_286, %c6_287] : memref<8x9xf32, #tpu.memory_space<smem>>
    %736 = vector.extract_strided_slice %408 {offsets = [0, 6], sizes = [8, 57], strides = [1, 1]} : vector<8x65xf32> to vector<8x57xf32>
    %737 = vector.broadcast %735 : f32 to vector<8x57xf32>
    %738 = arith.mulf %737, %736 : vector<8x57xf32>
    %739 = arith.addf %734, %738 : vector<8x57xf32>
    %c6_288 = arith.constant 6 : index
    %c7_289 = arith.constant 7 : index
    %740 = memref.load %arg4[%c6_288, %c7_289] : memref<8x9xf32, #tpu.memory_space<smem>>
    %741 = vector.extract_strided_slice %408 {offsets = [0, 7], sizes = [8, 57], strides = [1, 1]} : vector<8x65xf32> to vector<8x57xf32>
    %742 = vector.broadcast %740 : f32 to vector<8x57xf32>
    %743 = arith.mulf %742, %741 : vector<8x57xf32>
    %744 = arith.addf %739, %743 : vector<8x57xf32>
    %c6_290 = arith.constant 6 : index
    %c8_291 = arith.constant 8 : index
    %745 = memref.load %arg4[%c6_290, %c8_291] : memref<8x9xf32, #tpu.memory_space<smem>>
    %746 = vector.extract_strided_slice %408 {offsets = [0, 8], sizes = [8, 57], strides = [1, 1]} : vector<8x65xf32> to vector<8x57xf32>
    %747 = vector.broadcast %745 : f32 to vector<8x57xf32>
    %748 = arith.mulf %747, %746 : vector<8x57xf32>
    %749 = arith.addf %744, %748 : vector<8x57xf32>
    %c6_292 = arith.constant 6 : index
    %750 = memref.load %arg5[%c6_292] : memref<8xf32, #tpu.memory_space<smem>>
    %751 = vector.broadcast %750 : f32 to vector<8x57xf32>
    %752 = arith.addf %749, %751 : vector<8x57xf32>
    %cst_293 = arith.constant 0.000000e+00 : f32
    %753 = vector.broadcast %cst_293 : f32 to vector<8x57xf32>
    %c7_294 = arith.constant 7 : index
    %c0_295 = arith.constant 0 : index
    %754 = memref.load %arg4[%c7_294, %c0_295] : memref<8x9xf32, #tpu.memory_space<smem>>
    %755 = vector.extract_strided_slice %409 {offsets = [0, 0], sizes = [8, 57], strides = [1, 1]} : vector<8x65xf32> to vector<8x57xf32>
    %756 = vector.broadcast %754 : f32 to vector<8x57xf32>
    %757 = arith.mulf %756, %755 : vector<8x57xf32>
    %758 = arith.addf %753, %757 : vector<8x57xf32>
    %c7_296 = arith.constant 7 : index
    %c1_297 = arith.constant 1 : index
    %759 = memref.load %arg4[%c7_296, %c1_297] : memref<8x9xf32, #tpu.memory_space<smem>>
    %760 = vector.extract_strided_slice %409 {offsets = [0, 1], sizes = [8, 57], strides = [1, 1]} : vector<8x65xf32> to vector<8x57xf32>
    %761 = vector.broadcast %759 : f32 to vector<8x57xf32>
    %762 = arith.mulf %761, %760 : vector<8x57xf32>
    %763 = arith.addf %758, %762 : vector<8x57xf32>
    %c7_298 = arith.constant 7 : index
    %c2_299 = arith.constant 2 : index
    %764 = memref.load %arg4[%c7_298, %c2_299] : memref<8x9xf32, #tpu.memory_space<smem>>
    %765 = vector.extract_strided_slice %409 {offsets = [0, 2], sizes = [8, 57], strides = [1, 1]} : vector<8x65xf32> to vector<8x57xf32>
    %766 = vector.broadcast %764 : f32 to vector<8x57xf32>
    %767 = arith.mulf %766, %765 : vector<8x57xf32>
    %768 = arith.addf %763, %767 : vector<8x57xf32>
    %c7_300 = arith.constant 7 : index
    %c3_301 = arith.constant 3 : index
    %769 = memref.load %arg4[%c7_300, %c3_301] : memref<8x9xf32, #tpu.memory_space<smem>>
    %770 = vector.extract_strided_slice %409 {offsets = [0, 3], sizes = [8, 57], strides = [1, 1]} : vector<8x65xf32> to vector<8x57xf32>
    %771 = vector.broadcast %769 : f32 to vector<8x57xf32>
    %772 = arith.mulf %771, %770 : vector<8x57xf32>
    %773 = arith.addf %768, %772 : vector<8x57xf32>
    %c7_302 = arith.constant 7 : index
    %c4_303 = arith.constant 4 : index
    %774 = memref.load %arg4[%c7_302, %c4_303] : memref<8x9xf32, #tpu.memory_space<smem>>
    %775 = vector.extract_strided_slice %409 {offsets = [0, 4], sizes = [8, 57], strides = [1, 1]} : vector<8x65xf32> to vector<8x57xf32>
    %776 = vector.broadcast %774 : f32 to vector<8x57xf32>
    %777 = arith.mulf %776, %775 : vector<8x57xf32>
    %778 = arith.addf %773, %777 : vector<8x57xf32>
    %c7_304 = arith.constant 7 : index
    %c5_305 = arith.constant 5 : index
    %779 = memref.load %arg4[%c7_304, %c5_305] : memref<8x9xf32, #tpu.memory_space<smem>>
    %780 = vector.extract_strided_slice %409 {offsets = [0, 5], sizes = [8, 57], strides = [1, 1]} : vector<8x65xf32> to vector<8x57xf32>
    %781 = vector.broadcast %779 : f32 to vector<8x57xf32>
    %782 = arith.mulf %781, %780 : vector<8x57xf32>
    %783 = arith.addf %778, %782 : vector<8x57xf32>
    %c7_306 = arith.constant 7 : index
    %c6_307 = arith.constant 6 : index
    %784 = memref.load %arg4[%c7_306, %c6_307] : memref<8x9xf32, #tpu.memory_space<smem>>
    %785 = vector.extract_strided_slice %409 {offsets = [0, 6], sizes = [8, 57], strides = [1, 1]} : vector<8x65xf32> to vector<8x57xf32>
    %786 = vector.broadcast %784 : f32 to vector<8x57xf32>
    %787 = arith.mulf %786, %785 : vector<8x57xf32>
    %788 = arith.addf %783, %787 : vector<8x57xf32>
    %c7_308 = arith.constant 7 : index
    %c7_309 = arith.constant 7 : index
    %789 = memref.load %arg4[%c7_308, %c7_309] : memref<8x9xf32, #tpu.memory_space<smem>>
    %790 = vector.extract_strided_slice %409 {offsets = [0, 7], sizes = [8, 57], strides = [1, 1]} : vector<8x65xf32> to vector<8x57xf32>
    %791 = vector.broadcast %789 : f32 to vector<8x57xf32>
    %792 = arith.mulf %791, %790 : vector<8x57xf32>
    %793 = arith.addf %788, %792 : vector<8x57xf32>
    %c7_310 = arith.constant 7 : index
    %c8_311 = arith.constant 8 : index
    %794 = memref.load %arg4[%c7_310, %c8_311] : memref<8x9xf32, #tpu.memory_space<smem>>
    %795 = vector.extract_strided_slice %409 {offsets = [0, 8], sizes = [8, 57], strides = [1, 1]} : vector<8x65xf32> to vector<8x57xf32>
    %796 = vector.broadcast %794 : f32 to vector<8x57xf32>
    %797 = arith.mulf %796, %795 : vector<8x57xf32>
    %798 = arith.addf %793, %797 : vector<8x57xf32>
    %c7_312 = arith.constant 7 : index
    %799 = memref.load %arg5[%c7_312] : memref<8xf32, #tpu.memory_space<smem>>
    %800 = vector.broadcast %799 : f32 to vector<8x57xf32>
    %801 = arith.addf %798, %800 : vector<8x57xf32>
    %cst_313 = arith.constant 0.000000e+00 : f32
    %802 = vector.broadcast %cst_313 : f32 to vector<8x57xf32>
    %c0_314 = arith.constant 0 : index
    %c0_315 = arith.constant 0 : index
    %803 = memref.load %arg6[%c0_314, %c0_315] : memref<16x8xf32, #tpu.memory_space<smem>>
    %804 = vector.broadcast %803 : f32 to vector<8x57xf32>
    %805 = arith.mulf %804, %458 : vector<8x57xf32>
    %806 = arith.addf %802, %805 : vector<8x57xf32>
    %c0_316 = arith.constant 0 : index
    %c1_317 = arith.constant 1 : index
    %807 = memref.load %arg6[%c0_316, %c1_317] : memref<16x8xf32, #tpu.memory_space<smem>>
    %808 = vector.broadcast %807 : f32 to vector<8x57xf32>
    %809 = arith.mulf %808, %507 : vector<8x57xf32>
    %810 = arith.addf %806, %809 : vector<8x57xf32>
    %c0_318 = arith.constant 0 : index
    %c2_319 = arith.constant 2 : index
    %811 = memref.load %arg6[%c0_318, %c2_319] : memref<16x8xf32, #tpu.memory_space<smem>>
    %812 = vector.broadcast %811 : f32 to vector<8x57xf32>
    %813 = arith.mulf %812, %556 : vector<8x57xf32>
    %814 = arith.addf %810, %813 : vector<8x57xf32>
    %c0_320 = arith.constant 0 : index
    %c3_321 = arith.constant 3 : index
    %815 = memref.load %arg6[%c0_320, %c3_321] : memref<16x8xf32, #tpu.memory_space<smem>>
    %816 = vector.broadcast %815 : f32 to vector<8x57xf32>
    %817 = arith.mulf %816, %605 : vector<8x57xf32>
    %818 = arith.addf %814, %817 : vector<8x57xf32>
    %c0_322 = arith.constant 0 : index
    %c4_323 = arith.constant 4 : index
    %819 = memref.load %arg6[%c0_322, %c4_323] : memref<16x8xf32, #tpu.memory_space<smem>>
    %820 = vector.broadcast %819 : f32 to vector<8x57xf32>
    %821 = arith.mulf %820, %654 : vector<8x57xf32>
    %822 = arith.addf %818, %821 : vector<8x57xf32>
    %c0_324 = arith.constant 0 : index
    %c5_325 = arith.constant 5 : index
    %823 = memref.load %arg6[%c0_324, %c5_325] : memref<16x8xf32, #tpu.memory_space<smem>>
    %824 = vector.broadcast %823 : f32 to vector<8x57xf32>
    %825 = arith.mulf %824, %703 : vector<8x57xf32>
    %826 = arith.addf %822, %825 : vector<8x57xf32>
    %c0_326 = arith.constant 0 : index
    %c6_327 = arith.constant 6 : index
    %827 = memref.load %arg6[%c0_326, %c6_327] : memref<16x8xf32, #tpu.memory_space<smem>>
    %828 = vector.broadcast %827 : f32 to vector<8x57xf32>
    %829 = arith.mulf %828, %752 : vector<8x57xf32>
    %830 = arith.addf %826, %829 : vector<8x57xf32>
    %c0_328 = arith.constant 0 : index
    %c7_329 = arith.constant 7 : index
    %831 = memref.load %arg6[%c0_328, %c7_329] : memref<16x8xf32, #tpu.memory_space<smem>>
    %832 = vector.broadcast %831 : f32 to vector<8x57xf32>
    %833 = arith.mulf %832, %801 : vector<8x57xf32>
    %834 = arith.addf %830, %833 : vector<8x57xf32>
    %c0_330 = arith.constant 0 : index
    %835 = memref.load %arg7[%c0_330] : memref<16xf32, #tpu.memory_space<smem>>
    %836 = vector.broadcast %835 : f32 to vector<8x57xf32>
    %837 = arith.addf %834, %836 : vector<8x57xf32>
    %cst_331 = arith.constant 0.000000e+00 : f32
    %838 = vector.broadcast %cst_331 : f32 to vector<8x57xf32>
    %839 = arith.cmpf ogt, %837, %838 : vector<8x57xf32>
    %840 = math.exp %837 : vector<8x57xf32>
    %cst_332 = arith.constant 1.000000e+00 : f32
    %841 = vector.broadcast %cst_332 : f32 to vector<8x57xf32>
    %842 = arith.subf %840, %841 : vector<8x57xf32>
    %843 = arith.select %839, %837, %842 : vector<8x57xi1>, vector<8x57xf32>
    %cst_333 = arith.constant 0.000000e+00 : f32
    %844 = vector.broadcast %cst_333 : f32 to vector<8x57xf32>
    %c1_334 = arith.constant 1 : index
    %c0_335 = arith.constant 0 : index
    %845 = memref.load %arg6[%c1_334, %c0_335] : memref<16x8xf32, #tpu.memory_space<smem>>
    %846 = vector.broadcast %845 : f32 to vector<8x57xf32>
    %847 = arith.mulf %846, %458 : vector<8x57xf32>
    %848 = arith.addf %844, %847 : vector<8x57xf32>
    %c1_336 = arith.constant 1 : index
    %c1_337 = arith.constant 1 : index
    %849 = memref.load %arg6[%c1_336, %c1_337] : memref<16x8xf32, #tpu.memory_space<smem>>
    %850 = vector.broadcast %849 : f32 to vector<8x57xf32>
    %851 = arith.mulf %850, %507 : vector<8x57xf32>
    %852 = arith.addf %848, %851 : vector<8x57xf32>
    %c1_338 = arith.constant 1 : index
    %c2_339 = arith.constant 2 : index
    %853 = memref.load %arg6[%c1_338, %c2_339] : memref<16x8xf32, #tpu.memory_space<smem>>
    %854 = vector.broadcast %853 : f32 to vector<8x57xf32>
    %855 = arith.mulf %854, %556 : vector<8x57xf32>
    %856 = arith.addf %852, %855 : vector<8x57xf32>
    %c1_340 = arith.constant 1 : index
    %c3_341 = arith.constant 3 : index
    %857 = memref.load %arg6[%c1_340, %c3_341] : memref<16x8xf32, #tpu.memory_space<smem>>
    %858 = vector.broadcast %857 : f32 to vector<8x57xf32>
    %859 = arith.mulf %858, %605 : vector<8x57xf32>
    %860 = arith.addf %856, %859 : vector<8x57xf32>
    %c1_342 = arith.constant 1 : index
    %c4_343 = arith.constant 4 : index
    %861 = memref.load %arg6[%c1_342, %c4_343] : memref<16x8xf32, #tpu.memory_space<smem>>
    %862 = vector.broadcast %861 : f32 to vector<8x57xf32>
    %863 = arith.mulf %862, %654 : vector<8x57xf32>
    %864 = arith.addf %860, %863 : vector<8x57xf32>
    %c1_344 = arith.constant 1 : index
    %c5_345 = arith.constant 5 : index
    %865 = memref.load %arg6[%c1_344, %c5_345] : memref<16x8xf32, #tpu.memory_space<smem>>
    %866 = vector.broadcast %865 : f32 to vector<8x57xf32>
    %867 = arith.mulf %866, %703 : vector<8x57xf32>
    %868 = arith.addf %864, %867 : vector<8x57xf32>
    %c1_346 = arith.constant 1 : index
    %c6_347 = arith.constant 6 : index
    %869 = memref.load %arg6[%c1_346, %c6_347] : memref<16x8xf32, #tpu.memory_space<smem>>
    %870 = vector.broadcast %869 : f32 to vector<8x57xf32>
    %871 = arith.mulf %870, %752 : vector<8x57xf32>
    %872 = arith.addf %868, %871 : vector<8x57xf32>
    %c1_348 = arith.constant 1 : index
    %c7_349 = arith.constant 7 : index
    %873 = memref.load %arg6[%c1_348, %c7_349] : memref<16x8xf32, #tpu.memory_space<smem>>
    %874 = vector.broadcast %873 : f32 to vector<8x57xf32>
    %875 = arith.mulf %874, %801 : vector<8x57xf32>
    %876 = arith.addf %872, %875 : vector<8x57xf32>
    %c1_350 = arith.constant 1 : index
    %877 = memref.load %arg7[%c1_350] : memref<16xf32, #tpu.memory_space<smem>>
    %878 = vector.broadcast %877 : f32 to vector<8x57xf32>
    %879 = arith.addf %876, %878 : vector<8x57xf32>
    %cst_351 = arith.constant 0.000000e+00 : f32
    %880 = vector.broadcast %cst_351 : f32 to vector<8x57xf32>
    %881 = arith.cmpf ogt, %879, %880 : vector<8x57xf32>
    %882 = math.exp %879 : vector<8x57xf32>
    %cst_352 = arith.constant 1.000000e+00 : f32
    %883 = vector.broadcast %cst_352 : f32 to vector<8x57xf32>
    %884 = arith.subf %882, %883 : vector<8x57xf32>
    %885 = arith.select %881, %879, %884 : vector<8x57xi1>, vector<8x57xf32>
    %cst_353 = arith.constant 0.000000e+00 : f32
    %886 = vector.broadcast %cst_353 : f32 to vector<8x57xf32>
    %c2_354 = arith.constant 2 : index
    %c0_355 = arith.constant 0 : index
    %887 = memref.load %arg6[%c2_354, %c0_355] : memref<16x8xf32, #tpu.memory_space<smem>>
    %888 = vector.broadcast %887 : f32 to vector<8x57xf32>
    %889 = arith.mulf %888, %458 : vector<8x57xf32>
    %890 = arith.addf %886, %889 : vector<8x57xf32>
    %c2_356 = arith.constant 2 : index
    %c1_357 = arith.constant 1 : index
    %891 = memref.load %arg6[%c2_356, %c1_357] : memref<16x8xf32, #tpu.memory_space<smem>>
    %892 = vector.broadcast %891 : f32 to vector<8x57xf32>
    %893 = arith.mulf %892, %507 : vector<8x57xf32>
    %894 = arith.addf %890, %893 : vector<8x57xf32>
    %c2_358 = arith.constant 2 : index
    %c2_359 = arith.constant 2 : index
    %895 = memref.load %arg6[%c2_358, %c2_359] : memref<16x8xf32, #tpu.memory_space<smem>>
    %896 = vector.broadcast %895 : f32 to vector<8x57xf32>
    %897 = arith.mulf %896, %556 : vector<8x57xf32>
    %898 = arith.addf %894, %897 : vector<8x57xf32>
    %c2_360 = arith.constant 2 : index
    %c3_361 = arith.constant 3 : index
    %899 = memref.load %arg6[%c2_360, %c3_361] : memref<16x8xf32, #tpu.memory_space<smem>>
    %900 = vector.broadcast %899 : f32 to vector<8x57xf32>
    %901 = arith.mulf %900, %605 : vector<8x57xf32>
    %902 = arith.addf %898, %901 : vector<8x57xf32>
    %c2_362 = arith.constant 2 : index
    %c4_363 = arith.constant 4 : index
    %903 = memref.load %arg6[%c2_362, %c4_363] : memref<16x8xf32, #tpu.memory_space<smem>>
    %904 = vector.broadcast %903 : f32 to vector<8x57xf32>
    %905 = arith.mulf %904, %654 : vector<8x57xf32>
    %906 = arith.addf %902, %905 : vector<8x57xf32>
    %c2_364 = arith.constant 2 : index
    %c5_365 = arith.constant 5 : index
    %907 = memref.load %arg6[%c2_364, %c5_365] : memref<16x8xf32, #tpu.memory_space<smem>>
    %908 = vector.broadcast %907 : f32 to vector<8x57xf32>
    %909 = arith.mulf %908, %703 : vector<8x57xf32>
    %910 = arith.addf %906, %909 : vector<8x57xf32>
    %c2_366 = arith.constant 2 : index
    %c6_367 = arith.constant 6 : index
    %911 = memref.load %arg6[%c2_366, %c6_367] : memref<16x8xf32, #tpu.memory_space<smem>>
    %912 = vector.broadcast %911 : f32 to vector<8x57xf32>
    %913 = arith.mulf %912, %752 : vector<8x57xf32>
    %914 = arith.addf %910, %913 : vector<8x57xf32>
    %c2_368 = arith.constant 2 : index
    %c7_369 = arith.constant 7 : index
    %915 = memref.load %arg6[%c2_368, %c7_369] : memref<16x8xf32, #tpu.memory_space<smem>>
    %916 = vector.broadcast %915 : f32 to vector<8x57xf32>
    %917 = arith.mulf %916, %801 : vector<8x57xf32>
    %918 = arith.addf %914, %917 : vector<8x57xf32>
    %c2_370 = arith.constant 2 : index
    %919 = memref.load %arg7[%c2_370] : memref<16xf32, #tpu.memory_space<smem>>
    %920 = vector.broadcast %919 : f32 to vector<8x57xf32>
    %921 = arith.addf %918, %920 : vector<8x57xf32>
    %cst_371 = arith.constant 0.000000e+00 : f32
    %922 = vector.broadcast %cst_371 : f32 to vector<8x57xf32>
    %923 = arith.cmpf ogt, %921, %922 : vector<8x57xf32>
    %924 = math.exp %921 : vector<8x57xf32>
    %cst_372 = arith.constant 1.000000e+00 : f32
    %925 = vector.broadcast %cst_372 : f32 to vector<8x57xf32>
    %926 = arith.subf %924, %925 : vector<8x57xf32>
    %927 = arith.select %923, %921, %926 : vector<8x57xi1>, vector<8x57xf32>
    %cst_373 = arith.constant 0.000000e+00 : f32
    %928 = vector.broadcast %cst_373 : f32 to vector<8x57xf32>
    %c3_374 = arith.constant 3 : index
    %c0_375 = arith.constant 0 : index
    %929 = memref.load %arg6[%c3_374, %c0_375] : memref<16x8xf32, #tpu.memory_space<smem>>
    %930 = vector.broadcast %929 : f32 to vector<8x57xf32>
    %931 = arith.mulf %930, %458 : vector<8x57xf32>
    %932 = arith.addf %928, %931 : vector<8x57xf32>
    %c3_376 = arith.constant 3 : index
    %c1_377 = arith.constant 1 : index
    %933 = memref.load %arg6[%c3_376, %c1_377] : memref<16x8xf32, #tpu.memory_space<smem>>
    %934 = vector.broadcast %933 : f32 to vector<8x57xf32>
    %935 = arith.mulf %934, %507 : vector<8x57xf32>
    %936 = arith.addf %932, %935 : vector<8x57xf32>
    %c3_378 = arith.constant 3 : index
    %c2_379 = arith.constant 2 : index
    %937 = memref.load %arg6[%c3_378, %c2_379] : memref<16x8xf32, #tpu.memory_space<smem>>
    %938 = vector.broadcast %937 : f32 to vector<8x57xf32>
    %939 = arith.mulf %938, %556 : vector<8x57xf32>
    %940 = arith.addf %936, %939 : vector<8x57xf32>
    %c3_380 = arith.constant 3 : index
    %c3_381 = arith.constant 3 : index
    %941 = memref.load %arg6[%c3_380, %c3_381] : memref<16x8xf32, #tpu.memory_space<smem>>
    %942 = vector.broadcast %941 : f32 to vector<8x57xf32>
    %943 = arith.mulf %942, %605 : vector<8x57xf32>
    %944 = arith.addf %940, %943 : vector<8x57xf32>
    %c3_382 = arith.constant 3 : index
    %c4_383 = arith.constant 4 : index
    %945 = memref.load %arg6[%c3_382, %c4_383] : memref<16x8xf32, #tpu.memory_space<smem>>
    %946 = vector.broadcast %945 : f32 to vector<8x57xf32>
    %947 = arith.mulf %946, %654 : vector<8x57xf32>
    %948 = arith.addf %944, %947 : vector<8x57xf32>
    %c3_384 = arith.constant 3 : index
    %c5_385 = arith.constant 5 : index
    %949 = memref.load %arg6[%c3_384, %c5_385] : memref<16x8xf32, #tpu.memory_space<smem>>
    %950 = vector.broadcast %949 : f32 to vector<8x57xf32>
    %951 = arith.mulf %950, %703 : vector<8x57xf32>
    %952 = arith.addf %948, %951 : vector<8x57xf32>
    %c3_386 = arith.constant 3 : index
    %c6_387 = arith.constant 6 : index
    %953 = memref.load %arg6[%c3_386, %c6_387] : memref<16x8xf32, #tpu.memory_space<smem>>
    %954 = vector.broadcast %953 : f32 to vector<8x57xf32>
    %955 = arith.mulf %954, %752 : vector<8x57xf32>
    %956 = arith.addf %952, %955 : vector<8x57xf32>
    %c3_388 = arith.constant 3 : index
    %c7_389 = arith.constant 7 : index
    %957 = memref.load %arg6[%c3_388, %c7_389] : memref<16x8xf32, #tpu.memory_space<smem>>
    %958 = vector.broadcast %957 : f32 to vector<8x57xf32>
    %959 = arith.mulf %958, %801 : vector<8x57xf32>
    %960 = arith.addf %956, %959 : vector<8x57xf32>
    %c3_390 = arith.constant 3 : index
    %961 = memref.load %arg7[%c3_390] : memref<16xf32, #tpu.memory_space<smem>>
    %962 = vector.broadcast %961 : f32 to vector<8x57xf32>
    %963 = arith.addf %960, %962 : vector<8x57xf32>
    %cst_391 = arith.constant 0.000000e+00 : f32
    %964 = vector.broadcast %cst_391 : f32 to vector<8x57xf32>
    %965 = arith.cmpf ogt, %963, %964 : vector<8x57xf32>
    %966 = math.exp %963 : vector<8x57xf32>
    %cst_392 = arith.constant 1.000000e+00 : f32
    %967 = vector.broadcast %cst_392 : f32 to vector<8x57xf32>
    %968 = arith.subf %966, %967 : vector<8x57xf32>
    %969 = arith.select %965, %963, %968 : vector<8x57xi1>, vector<8x57xf32>
    %cst_393 = arith.constant 0.000000e+00 : f32
    %970 = vector.broadcast %cst_393 : f32 to vector<8x57xf32>
    %c4_394 = arith.constant 4 : index
    %c0_395 = arith.constant 0 : index
    %971 = memref.load %arg6[%c4_394, %c0_395] : memref<16x8xf32, #tpu.memory_space<smem>>
    %972 = vector.broadcast %971 : f32 to vector<8x57xf32>
    %973 = arith.mulf %972, %458 : vector<8x57xf32>
    %974 = arith.addf %970, %973 : vector<8x57xf32>
    %c4_396 = arith.constant 4 : index
    %c1_397 = arith.constant 1 : index
    %975 = memref.load %arg6[%c4_396, %c1_397] : memref<16x8xf32, #tpu.memory_space<smem>>
    %976 = vector.broadcast %975 : f32 to vector<8x57xf32>
    %977 = arith.mulf %976, %507 : vector<8x57xf32>
    %978 = arith.addf %974, %977 : vector<8x57xf32>
    %c4_398 = arith.constant 4 : index
    %c2_399 = arith.constant 2 : index
    %979 = memref.load %arg6[%c4_398, %c2_399] : memref<16x8xf32, #tpu.memory_space<smem>>
    %980 = vector.broadcast %979 : f32 to vector<8x57xf32>
    %981 = arith.mulf %980, %556 : vector<8x57xf32>
    %982 = arith.addf %978, %981 : vector<8x57xf32>
    %c4_400 = arith.constant 4 : index
    %c3_401 = arith.constant 3 : index
    %983 = memref.load %arg6[%c4_400, %c3_401] : memref<16x8xf32, #tpu.memory_space<smem>>
    %984 = vector.broadcast %983 : f32 to vector<8x57xf32>
    %985 = arith.mulf %984, %605 : vector<8x57xf32>
    %986 = arith.addf %982, %985 : vector<8x57xf32>
    %c4_402 = arith.constant 4 : index
    %c4_403 = arith.constant 4 : index
    %987 = memref.load %arg6[%c4_402, %c4_403] : memref<16x8xf32, #tpu.memory_space<smem>>
    %988 = vector.broadcast %987 : f32 to vector<8x57xf32>
    %989 = arith.mulf %988, %654 : vector<8x57xf32>
    %990 = arith.addf %986, %989 : vector<8x57xf32>
    %c4_404 = arith.constant 4 : index
    %c5_405 = arith.constant 5 : index
    %991 = memref.load %arg6[%c4_404, %c5_405] : memref<16x8xf32, #tpu.memory_space<smem>>
    %992 = vector.broadcast %991 : f32 to vector<8x57xf32>
    %993 = arith.mulf %992, %703 : vector<8x57xf32>
    %994 = arith.addf %990, %993 : vector<8x57xf32>
    %c4_406 = arith.constant 4 : index
    %c6_407 = arith.constant 6 : index
    %995 = memref.load %arg6[%c4_406, %c6_407] : memref<16x8xf32, #tpu.memory_space<smem>>
    %996 = vector.broadcast %995 : f32 to vector<8x57xf32>
    %997 = arith.mulf %996, %752 : vector<8x57xf32>
    %998 = arith.addf %994, %997 : vector<8x57xf32>
    %c4_408 = arith.constant 4 : index
    %c7_409 = arith.constant 7 : index
    %999 = memref.load %arg6[%c4_408, %c7_409] : memref<16x8xf32, #tpu.memory_space<smem>>
    %1000 = vector.broadcast %999 : f32 to vector<8x57xf32>
    %1001 = arith.mulf %1000, %801 : vector<8x57xf32>
    %1002 = arith.addf %998, %1001 : vector<8x57xf32>
    %c4_410 = arith.constant 4 : index
    %1003 = memref.load %arg7[%c4_410] : memref<16xf32, #tpu.memory_space<smem>>
    %1004 = vector.broadcast %1003 : f32 to vector<8x57xf32>
    %1005 = arith.addf %1002, %1004 : vector<8x57xf32>
    %cst_411 = arith.constant 0.000000e+00 : f32
    %1006 = vector.broadcast %cst_411 : f32 to vector<8x57xf32>
    %1007 = arith.cmpf ogt, %1005, %1006 : vector<8x57xf32>
    %1008 = math.exp %1005 : vector<8x57xf32>
    %cst_412 = arith.constant 1.000000e+00 : f32
    %1009 = vector.broadcast %cst_412 : f32 to vector<8x57xf32>
    %1010 = arith.subf %1008, %1009 : vector<8x57xf32>
    %1011 = arith.select %1007, %1005, %1010 : vector<8x57xi1>, vector<8x57xf32>
    %cst_413 = arith.constant 0.000000e+00 : f32
    %1012 = vector.broadcast %cst_413 : f32 to vector<8x57xf32>
    %c5_414 = arith.constant 5 : index
    %c0_415 = arith.constant 0 : index
    %1013 = memref.load %arg6[%c5_414, %c0_415] : memref<16x8xf32, #tpu.memory_space<smem>>
    %1014 = vector.broadcast %1013 : f32 to vector<8x57xf32>
    %1015 = arith.mulf %1014, %458 : vector<8x57xf32>
    %1016 = arith.addf %1012, %1015 : vector<8x57xf32>
    %c5_416 = arith.constant 5 : index
    %c1_417 = arith.constant 1 : index
    %1017 = memref.load %arg6[%c5_416, %c1_417] : memref<16x8xf32, #tpu.memory_space<smem>>
    %1018 = vector.broadcast %1017 : f32 to vector<8x57xf32>
    %1019 = arith.mulf %1018, %507 : vector<8x57xf32>
    %1020 = arith.addf %1016, %1019 : vector<8x57xf32>
    %c5_418 = arith.constant 5 : index
    %c2_419 = arith.constant 2 : index
    %1021 = memref.load %arg6[%c5_418, %c2_419] : memref<16x8xf32, #tpu.memory_space<smem>>
    %1022 = vector.broadcast %1021 : f32 to vector<8x57xf32>
    %1023 = arith.mulf %1022, %556 : vector<8x57xf32>
    %1024 = arith.addf %1020, %1023 : vector<8x57xf32>
    %c5_420 = arith.constant 5 : index
    %c3_421 = arith.constant 3 : index
    %1025 = memref.load %arg6[%c5_420, %c3_421] : memref<16x8xf32, #tpu.memory_space<smem>>
    %1026 = vector.broadcast %1025 : f32 to vector<8x57xf32>
    %1027 = arith.mulf %1026, %605 : vector<8x57xf32>
    %1028 = arith.addf %1024, %1027 : vector<8x57xf32>
    %c5_422 = arith.constant 5 : index
    %c4_423 = arith.constant 4 : index
    %1029 = memref.load %arg6[%c5_422, %c4_423] : memref<16x8xf32, #tpu.memory_space<smem>>
    %1030 = vector.broadcast %1029 : f32 to vector<8x57xf32>
    %1031 = arith.mulf %1030, %654 : vector<8x57xf32>
    %1032 = arith.addf %1028, %1031 : vector<8x57xf32>
    %c5_424 = arith.constant 5 : index
    %c5_425 = arith.constant 5 : index
    %1033 = memref.load %arg6[%c5_424, %c5_425] : memref<16x8xf32, #tpu.memory_space<smem>>
    %1034 = vector.broadcast %1033 : f32 to vector<8x57xf32>
    %1035 = arith.mulf %1034, %703 : vector<8x57xf32>
    %1036 = arith.addf %1032, %1035 : vector<8x57xf32>
    %c5_426 = arith.constant 5 : index
    %c6_427 = arith.constant 6 : index
    %1037 = memref.load %arg6[%c5_426, %c6_427] : memref<16x8xf32, #tpu.memory_space<smem>>
    %1038 = vector.broadcast %1037 : f32 to vector<8x57xf32>
    %1039 = arith.mulf %1038, %752 : vector<8x57xf32>
    %1040 = arith.addf %1036, %1039 : vector<8x57xf32>
    %c5_428 = arith.constant 5 : index
    %c7_429 = arith.constant 7 : index
    %1041 = memref.load %arg6[%c5_428, %c7_429] : memref<16x8xf32, #tpu.memory_space<smem>>
    %1042 = vector.broadcast %1041 : f32 to vector<8x57xf32>
    %1043 = arith.mulf %1042, %801 : vector<8x57xf32>
    %1044 = arith.addf %1040, %1043 : vector<8x57xf32>
    %c5_430 = arith.constant 5 : index
    %1045 = memref.load %arg7[%c5_430] : memref<16xf32, #tpu.memory_space<smem>>
    %1046 = vector.broadcast %1045 : f32 to vector<8x57xf32>
    %1047 = arith.addf %1044, %1046 : vector<8x57xf32>
    %cst_431 = arith.constant 0.000000e+00 : f32
    %1048 = vector.broadcast %cst_431 : f32 to vector<8x57xf32>
    %1049 = arith.cmpf ogt, %1047, %1048 : vector<8x57xf32>
    %1050 = math.exp %1047 : vector<8x57xf32>
    %cst_432 = arith.constant 1.000000e+00 : f32
    %1051 = vector.broadcast %cst_432 : f32 to vector<8x57xf32>
    %1052 = arith.subf %1050, %1051 : vector<8x57xf32>
    %1053 = arith.select %1049, %1047, %1052 : vector<8x57xi1>, vector<8x57xf32>
    %cst_433 = arith.constant 0.000000e+00 : f32
    %1054 = vector.broadcast %cst_433 : f32 to vector<8x57xf32>
    %c6_434 = arith.constant 6 : index
    %c0_435 = arith.constant 0 : index
    %1055 = memref.load %arg6[%c6_434, %c0_435] : memref<16x8xf32, #tpu.memory_space<smem>>
    %1056 = vector.broadcast %1055 : f32 to vector<8x57xf32>
    %1057 = arith.mulf %1056, %458 : vector<8x57xf32>
    %1058 = arith.addf %1054, %1057 : vector<8x57xf32>
    %c6_436 = arith.constant 6 : index
    %c1_437 = arith.constant 1 : index
    %1059 = memref.load %arg6[%c6_436, %c1_437] : memref<16x8xf32, #tpu.memory_space<smem>>
    %1060 = vector.broadcast %1059 : f32 to vector<8x57xf32>
    %1061 = arith.mulf %1060, %507 : vector<8x57xf32>
    %1062 = arith.addf %1058, %1061 : vector<8x57xf32>
    %c6_438 = arith.constant 6 : index
    %c2_439 = arith.constant 2 : index
    %1063 = memref.load %arg6[%c6_438, %c2_439] : memref<16x8xf32, #tpu.memory_space<smem>>
    %1064 = vector.broadcast %1063 : f32 to vector<8x57xf32>
    %1065 = arith.mulf %1064, %556 : vector<8x57xf32>
    %1066 = arith.addf %1062, %1065 : vector<8x57xf32>
    %c6_440 = arith.constant 6 : index
    %c3_441 = arith.constant 3 : index
    %1067 = memref.load %arg6[%c6_440, %c3_441] : memref<16x8xf32, #tpu.memory_space<smem>>
    %1068 = vector.broadcast %1067 : f32 to vector<8x57xf32>
    %1069 = arith.mulf %1068, %605 : vector<8x57xf32>
    %1070 = arith.addf %1066, %1069 : vector<8x57xf32>
    %c6_442 = arith.constant 6 : index
    %c4_443 = arith.constant 4 : index
    %1071 = memref.load %arg6[%c6_442, %c4_443] : memref<16x8xf32, #tpu.memory_space<smem>>
    %1072 = vector.broadcast %1071 : f32 to vector<8x57xf32>
    %1073 = arith.mulf %1072, %654 : vector<8x57xf32>
    %1074 = arith.addf %1070, %1073 : vector<8x57xf32>
    %c6_444 = arith.constant 6 : index
    %c5_445 = arith.constant 5 : index
    %1075 = memref.load %arg6[%c6_444, %c5_445] : memref<16x8xf32, #tpu.memory_space<smem>>
    %1076 = vector.broadcast %1075 : f32 to vector<8x57xf32>
    %1077 = arith.mulf %1076, %703 : vector<8x57xf32>
    %1078 = arith.addf %1074, %1077 : vector<8x57xf32>
    %c6_446 = arith.constant 6 : index
    %c6_447 = arith.constant 6 : index
    %1079 = memref.load %arg6[%c6_446, %c6_447] : memref<16x8xf32, #tpu.memory_space<smem>>
    %1080 = vector.broadcast %1079 : f32 to vector<8x57xf32>
    %1081 = arith.mulf %1080, %752 : vector<8x57xf32>
    %1082 = arith.addf %1078, %1081 : vector<8x57xf32>
    %c6_448 = arith.constant 6 : index
    %c7_449 = arith.constant 7 : index
    %1083 = memref.load %arg6[%c6_448, %c7_449] : memref<16x8xf32, #tpu.memory_space<smem>>
    %1084 = vector.broadcast %1083 : f32 to vector<8x57xf32>
    %1085 = arith.mulf %1084, %801 : vector<8x57xf32>
    %1086 = arith.addf %1082, %1085 : vector<8x57xf32>
    %c6_450 = arith.constant 6 : index
    %1087 = memref.load %arg7[%c6_450] : memref<16xf32, #tpu.memory_space<smem>>
    %1088 = vector.broadcast %1087 : f32 to vector<8x57xf32>
    %1089 = arith.addf %1086, %1088 : vector<8x57xf32>
    %cst_451 = arith.constant 0.000000e+00 : f32
    %1090 = vector.broadcast %cst_451 : f32 to vector<8x57xf32>
    %1091 = arith.cmpf ogt, %1089, %1090 : vector<8x57xf32>
    %1092 = math.exp %1089 : vector<8x57xf32>
    %cst_452 = arith.constant 1.000000e+00 : f32
    %1093 = vector.broadcast %cst_452 : f32 to vector<8x57xf32>
    %1094 = arith.subf %1092, %1093 : vector<8x57xf32>
    %1095 = arith.select %1091, %1089, %1094 : vector<8x57xi1>, vector<8x57xf32>
    %cst_453 = arith.constant 0.000000e+00 : f32
    %1096 = vector.broadcast %cst_453 : f32 to vector<8x57xf32>
    %c7_454 = arith.constant 7 : index
    %c0_455 = arith.constant 0 : index
    %1097 = memref.load %arg6[%c7_454, %c0_455] : memref<16x8xf32, #tpu.memory_space<smem>>
    %1098 = vector.broadcast %1097 : f32 to vector<8x57xf32>
    %1099 = arith.mulf %1098, %458 : vector<8x57xf32>
    %1100 = arith.addf %1096, %1099 : vector<8x57xf32>
    %c7_456 = arith.constant 7 : index
    %c1_457 = arith.constant 1 : index
    %1101 = memref.load %arg6[%c7_456, %c1_457] : memref<16x8xf32, #tpu.memory_space<smem>>
    %1102 = vector.broadcast %1101 : f32 to vector<8x57xf32>
    %1103 = arith.mulf %1102, %507 : vector<8x57xf32>
    %1104 = arith.addf %1100, %1103 : vector<8x57xf32>
    %c7_458 = arith.constant 7 : index
    %c2_459 = arith.constant 2 : index
    %1105 = memref.load %arg6[%c7_458, %c2_459] : memref<16x8xf32, #tpu.memory_space<smem>>
    %1106 = vector.broadcast %1105 : f32 to vector<8x57xf32>
    %1107 = arith.mulf %1106, %556 : vector<8x57xf32>
    %1108 = arith.addf %1104, %1107 : vector<8x57xf32>
    %c7_460 = arith.constant 7 : index
    %c3_461 = arith.constant 3 : index
    %1109 = memref.load %arg6[%c7_460, %c3_461] : memref<16x8xf32, #tpu.memory_space<smem>>
    %1110 = vector.broadcast %1109 : f32 to vector<8x57xf32>
    %1111 = arith.mulf %1110, %605 : vector<8x57xf32>
    %1112 = arith.addf %1108, %1111 : vector<8x57xf32>
    %c7_462 = arith.constant 7 : index
    %c4_463 = arith.constant 4 : index
    %1113 = memref.load %arg6[%c7_462, %c4_463] : memref<16x8xf32, #tpu.memory_space<smem>>
    %1114 = vector.broadcast %1113 : f32 to vector<8x57xf32>
    %1115 = arith.mulf %1114, %654 : vector<8x57xf32>
    %1116 = arith.addf %1112, %1115 : vector<8x57xf32>
    %c7_464 = arith.constant 7 : index
    %c5_465 = arith.constant 5 : index
    %1117 = memref.load %arg6[%c7_464, %c5_465] : memref<16x8xf32, #tpu.memory_space<smem>>
    %1118 = vector.broadcast %1117 : f32 to vector<8x57xf32>
    %1119 = arith.mulf %1118, %703 : vector<8x57xf32>
    %1120 = arith.addf %1116, %1119 : vector<8x57xf32>
    %c7_466 = arith.constant 7 : index
    %c6_467 = arith.constant 6 : index
    %1121 = memref.load %arg6[%c7_466, %c6_467] : memref<16x8xf32, #tpu.memory_space<smem>>
    %1122 = vector.broadcast %1121 : f32 to vector<8x57xf32>
    %1123 = arith.mulf %1122, %752 : vector<8x57xf32>
    %1124 = arith.addf %1120, %1123 : vector<8x57xf32>
    %c7_468 = arith.constant 7 : index
    %c7_469 = arith.constant 7 : index
    %1125 = memref.load %arg6[%c7_468, %c7_469] : memref<16x8xf32, #tpu.memory_space<smem>>
    %1126 = vector.broadcast %1125 : f32 to vector<8x57xf32>
    %1127 = arith.mulf %1126, %801 : vector<8x57xf32>
    %1128 = arith.addf %1124, %1127 : vector<8x57xf32>
    %c7_470 = arith.constant 7 : index
    %1129 = memref.load %arg7[%c7_470] : memref<16xf32, #tpu.memory_space<smem>>
    %1130 = vector.broadcast %1129 : f32 to vector<8x57xf32>
    %1131 = arith.addf %1128, %1130 : vector<8x57xf32>
    %cst_471 = arith.constant 0.000000e+00 : f32
    %1132 = vector.broadcast %cst_471 : f32 to vector<8x57xf32>
    %1133 = arith.cmpf ogt, %1131, %1132 : vector<8x57xf32>
    %1134 = math.exp %1131 : vector<8x57xf32>
    %cst_472 = arith.constant 1.000000e+00 : f32
    %1135 = vector.broadcast %cst_472 : f32 to vector<8x57xf32>
    %1136 = arith.subf %1134, %1135 : vector<8x57xf32>
    %1137 = arith.select %1133, %1131, %1136 : vector<8x57xi1>, vector<8x57xf32>
    %cst_473 = arith.constant 0.000000e+00 : f32
    %1138 = vector.broadcast %cst_473 : f32 to vector<8x57xf32>
    %c8_474 = arith.constant 8 : index
    %c0_475 = arith.constant 0 : index
    %1139 = memref.load %arg6[%c8_474, %c0_475] : memref<16x8xf32, #tpu.memory_space<smem>>
    %1140 = vector.broadcast %1139 : f32 to vector<8x57xf32>
    %1141 = arith.mulf %1140, %458 : vector<8x57xf32>
    %1142 = arith.addf %1138, %1141 : vector<8x57xf32>
    %c8_476 = arith.constant 8 : index
    %c1_477 = arith.constant 1 : index
    %1143 = memref.load %arg6[%c8_476, %c1_477] : memref<16x8xf32, #tpu.memory_space<smem>>
    %1144 = vector.broadcast %1143 : f32 to vector<8x57xf32>
    %1145 = arith.mulf %1144, %507 : vector<8x57xf32>
    %1146 = arith.addf %1142, %1145 : vector<8x57xf32>
    %c8_478 = arith.constant 8 : index
    %c2_479 = arith.constant 2 : index
    %1147 = memref.load %arg6[%c8_478, %c2_479] : memref<16x8xf32, #tpu.memory_space<smem>>
    %1148 = vector.broadcast %1147 : f32 to vector<8x57xf32>
    %1149 = arith.mulf %1148, %556 : vector<8x57xf32>
    %1150 = arith.addf %1146, %1149 : vector<8x57xf32>
    %c8_480 = arith.constant 8 : index
    %c3_481 = arith.constant 3 : index
    %1151 = memref.load %arg6[%c8_480, %c3_481] : memref<16x8xf32, #tpu.memory_space<smem>>
    %1152 = vector.broadcast %1151 : f32 to vector<8x57xf32>
    %1153 = arith.mulf %1152, %605 : vector<8x57xf32>
    %1154 = arith.addf %1150, %1153 : vector<8x57xf32>
    %c8_482 = arith.constant 8 : index
    %c4_483 = arith.constant 4 : index
    %1155 = memref.load %arg6[%c8_482, %c4_483] : memref<16x8xf32, #tpu.memory_space<smem>>
    %1156 = vector.broadcast %1155 : f32 to vector<8x57xf32>
    %1157 = arith.mulf %1156, %654 : vector<8x57xf32>
    %1158 = arith.addf %1154, %1157 : vector<8x57xf32>
    %c8_484 = arith.constant 8 : index
    %c5_485 = arith.constant 5 : index
    %1159 = memref.load %arg6[%c8_484, %c5_485] : memref<16x8xf32, #tpu.memory_space<smem>>
    %1160 = vector.broadcast %1159 : f32 to vector<8x57xf32>
    %1161 = arith.mulf %1160, %703 : vector<8x57xf32>
    %1162 = arith.addf %1158, %1161 : vector<8x57xf32>
    %c8_486 = arith.constant 8 : index
    %c6_487 = arith.constant 6 : index
    %1163 = memref.load %arg6[%c8_486, %c6_487] : memref<16x8xf32, #tpu.memory_space<smem>>
    %1164 = vector.broadcast %1163 : f32 to vector<8x57xf32>
    %1165 = arith.mulf %1164, %752 : vector<8x57xf32>
    %1166 = arith.addf %1162, %1165 : vector<8x57xf32>
    %c8_488 = arith.constant 8 : index
    %c7_489 = arith.constant 7 : index
    %1167 = memref.load %arg6[%c8_488, %c7_489] : memref<16x8xf32, #tpu.memory_space<smem>>
    %1168 = vector.broadcast %1167 : f32 to vector<8x57xf32>
    %1169 = arith.mulf %1168, %801 : vector<8x57xf32>
    %1170 = arith.addf %1166, %1169 : vector<8x57xf32>
    %c8_490 = arith.constant 8 : index
    %1171 = memref.load %arg7[%c8_490] : memref<16xf32, #tpu.memory_space<smem>>
    %1172 = vector.broadcast %1171 : f32 to vector<8x57xf32>
    %1173 = arith.addf %1170, %1172 : vector<8x57xf32>
    %cst_491 = arith.constant 0.000000e+00 : f32
    %1174 = vector.broadcast %cst_491 : f32 to vector<8x57xf32>
    %1175 = arith.cmpf ogt, %1173, %1174 : vector<8x57xf32>
    %1176 = math.exp %1173 : vector<8x57xf32>
    %cst_492 = arith.constant 1.000000e+00 : f32
    %1177 = vector.broadcast %cst_492 : f32 to vector<8x57xf32>
    %1178 = arith.subf %1176, %1177 : vector<8x57xf32>
    %1179 = arith.select %1175, %1173, %1178 : vector<8x57xi1>, vector<8x57xf32>
    %cst_493 = arith.constant 0.000000e+00 : f32
    %1180 = vector.broadcast %cst_493 : f32 to vector<8x57xf32>
    %c9 = arith.constant 9 : index
    %c0_494 = arith.constant 0 : index
    %1181 = memref.load %arg6[%c9, %c0_494] : memref<16x8xf32, #tpu.memory_space<smem>>
    %1182 = vector.broadcast %1181 : f32 to vector<8x57xf32>
    %1183 = arith.mulf %1182, %458 : vector<8x57xf32>
    %1184 = arith.addf %1180, %1183 : vector<8x57xf32>
    %c9_495 = arith.constant 9 : index
    %c1_496 = arith.constant 1 : index
    %1185 = memref.load %arg6[%c9_495, %c1_496] : memref<16x8xf32, #tpu.memory_space<smem>>
    %1186 = vector.broadcast %1185 : f32 to vector<8x57xf32>
    %1187 = arith.mulf %1186, %507 : vector<8x57xf32>
    %1188 = arith.addf %1184, %1187 : vector<8x57xf32>
    %c9_497 = arith.constant 9 : index
    %c2_498 = arith.constant 2 : index
    %1189 = memref.load %arg6[%c9_497, %c2_498] : memref<16x8xf32, #tpu.memory_space<smem>>
    %1190 = vector.broadcast %1189 : f32 to vector<8x57xf32>
    %1191 = arith.mulf %1190, %556 : vector<8x57xf32>
    %1192 = arith.addf %1188, %1191 : vector<8x57xf32>
    %c9_499 = arith.constant 9 : index
    %c3_500 = arith.constant 3 : index
    %1193 = memref.load %arg6[%c9_499, %c3_500] : memref<16x8xf32, #tpu.memory_space<smem>>
    %1194 = vector.broadcast %1193 : f32 to vector<8x57xf32>
    %1195 = arith.mulf %1194, %605 : vector<8x57xf32>
    %1196 = arith.addf %1192, %1195 : vector<8x57xf32>
    %c9_501 = arith.constant 9 : index
    %c4_502 = arith.constant 4 : index
    %1197 = memref.load %arg6[%c9_501, %c4_502] : memref<16x8xf32, #tpu.memory_space<smem>>
    %1198 = vector.broadcast %1197 : f32 to vector<8x57xf32>
    %1199 = arith.mulf %1198, %654 : vector<8x57xf32>
    %1200 = arith.addf %1196, %1199 : vector<8x57xf32>
    %c9_503 = arith.constant 9 : index
    %c5_504 = arith.constant 5 : index
    %1201 = memref.load %arg6[%c9_503, %c5_504] : memref<16x8xf32, #tpu.memory_space<smem>>
    %1202 = vector.broadcast %1201 : f32 to vector<8x57xf32>
    %1203 = arith.mulf %1202, %703 : vector<8x57xf32>
    %1204 = arith.addf %1200, %1203 : vector<8x57xf32>
    %c9_505 = arith.constant 9 : index
    %c6_506 = arith.constant 6 : index
    %1205 = memref.load %arg6[%c9_505, %c6_506] : memref<16x8xf32, #tpu.memory_space<smem>>
    %1206 = vector.broadcast %1205 : f32 to vector<8x57xf32>
    %1207 = arith.mulf %1206, %752 : vector<8x57xf32>
    %1208 = arith.addf %1204, %1207 : vector<8x57xf32>
    %c9_507 = arith.constant 9 : index
    %c7_508 = arith.constant 7 : index
    %1209 = memref.load %arg6[%c9_507, %c7_508] : memref<16x8xf32, #tpu.memory_space<smem>>
    %1210 = vector.broadcast %1209 : f32 to vector<8x57xf32>
    %1211 = arith.mulf %1210, %801 : vector<8x57xf32>
    %1212 = arith.addf %1208, %1211 : vector<8x57xf32>
    %c9_509 = arith.constant 9 : index
    %1213 = memref.load %arg7[%c9_509] : memref<16xf32, #tpu.memory_space<smem>>
    %1214 = vector.broadcast %1213 : f32 to vector<8x57xf32>
    %1215 = arith.addf %1212, %1214 : vector<8x57xf32>
    %cst_510 = arith.constant 0.000000e+00 : f32
    %1216 = vector.broadcast %cst_510 : f32 to vector<8x57xf32>
    %1217 = arith.cmpf ogt, %1215, %1216 : vector<8x57xf32>
    %1218 = math.exp %1215 : vector<8x57xf32>
    %cst_511 = arith.constant 1.000000e+00 : f32
    %1219 = vector.broadcast %cst_511 : f32 to vector<8x57xf32>
    %1220 = arith.subf %1218, %1219 : vector<8x57xf32>
    %1221 = arith.select %1217, %1215, %1220 : vector<8x57xi1>, vector<8x57xf32>
    %cst_512 = arith.constant 0.000000e+00 : f32
    %1222 = vector.broadcast %cst_512 : f32 to vector<8x57xf32>
    %c10 = arith.constant 10 : index
    %c0_513 = arith.constant 0 : index
    %1223 = memref.load %arg6[%c10, %c0_513] : memref<16x8xf32, #tpu.memory_space<smem>>
    %1224 = vector.broadcast %1223 : f32 to vector<8x57xf32>
    %1225 = arith.mulf %1224, %458 : vector<8x57xf32>
    %1226 = arith.addf %1222, %1225 : vector<8x57xf32>
    %c10_514 = arith.constant 10 : index
    %c1_515 = arith.constant 1 : index
    %1227 = memref.load %arg6[%c10_514, %c1_515] : memref<16x8xf32, #tpu.memory_space<smem>>
    %1228 = vector.broadcast %1227 : f32 to vector<8x57xf32>
    %1229 = arith.mulf %1228, %507 : vector<8x57xf32>
    %1230 = arith.addf %1226, %1229 : vector<8x57xf32>
    %c10_516 = arith.constant 10 : index
    %c2_517 = arith.constant 2 : index
    %1231 = memref.load %arg6[%c10_516, %c2_517] : memref<16x8xf32, #tpu.memory_space<smem>>
    %1232 = vector.broadcast %1231 : f32 to vector<8x57xf32>
    %1233 = arith.mulf %1232, %556 : vector<8x57xf32>
    %1234 = arith.addf %1230, %1233 : vector<8x57xf32>
    %c10_518 = arith.constant 10 : index
    %c3_519 = arith.constant 3 : index
    %1235 = memref.load %arg6[%c10_518, %c3_519] : memref<16x8xf32, #tpu.memory_space<smem>>
    %1236 = vector.broadcast %1235 : f32 to vector<8x57xf32>
    %1237 = arith.mulf %1236, %605 : vector<8x57xf32>
    %1238 = arith.addf %1234, %1237 : vector<8x57xf32>
    %c10_520 = arith.constant 10 : index
    %c4_521 = arith.constant 4 : index
    %1239 = memref.load %arg6[%c10_520, %c4_521] : memref<16x8xf32, #tpu.memory_space<smem>>
    %1240 = vector.broadcast %1239 : f32 to vector<8x57xf32>
    %1241 = arith.mulf %1240, %654 : vector<8x57xf32>
    %1242 = arith.addf %1238, %1241 : vector<8x57xf32>
    %c10_522 = arith.constant 10 : index
    %c5_523 = arith.constant 5 : index
    %1243 = memref.load %arg6[%c10_522, %c5_523] : memref<16x8xf32, #tpu.memory_space<smem>>
    %1244 = vector.broadcast %1243 : f32 to vector<8x57xf32>
    %1245 = arith.mulf %1244, %703 : vector<8x57xf32>
    %1246 = arith.addf %1242, %1245 : vector<8x57xf32>
    %c10_524 = arith.constant 10 : index
    %c6_525 = arith.constant 6 : index
    %1247 = memref.load %arg6[%c10_524, %c6_525] : memref<16x8xf32, #tpu.memory_space<smem>>
    %1248 = vector.broadcast %1247 : f32 to vector<8x57xf32>
    %1249 = arith.mulf %1248, %752 : vector<8x57xf32>
    %1250 = arith.addf %1246, %1249 : vector<8x57xf32>
    %c10_526 = arith.constant 10 : index
    %c7_527 = arith.constant 7 : index
    %1251 = memref.load %arg6[%c10_526, %c7_527] : memref<16x8xf32, #tpu.memory_space<smem>>
    %1252 = vector.broadcast %1251 : f32 to vector<8x57xf32>
    %1253 = arith.mulf %1252, %801 : vector<8x57xf32>
    %1254 = arith.addf %1250, %1253 : vector<8x57xf32>
    %c10_528 = arith.constant 10 : index
    %1255 = memref.load %arg7[%c10_528] : memref<16xf32, #tpu.memory_space<smem>>
    %1256 = vector.broadcast %1255 : f32 to vector<8x57xf32>
    %1257 = arith.addf %1254, %1256 : vector<8x57xf32>
    %cst_529 = arith.constant 0.000000e+00 : f32
    %1258 = vector.broadcast %cst_529 : f32 to vector<8x57xf32>
    %1259 = arith.cmpf ogt, %1257, %1258 : vector<8x57xf32>
    %1260 = math.exp %1257 : vector<8x57xf32>
    %cst_530 = arith.constant 1.000000e+00 : f32
    %1261 = vector.broadcast %cst_530 : f32 to vector<8x57xf32>
    %1262 = arith.subf %1260, %1261 : vector<8x57xf32>
    %1263 = arith.select %1259, %1257, %1262 : vector<8x57xi1>, vector<8x57xf32>
    %cst_531 = arith.constant 0.000000e+00 : f32
    %1264 = vector.broadcast %cst_531 : f32 to vector<8x57xf32>
    %c11 = arith.constant 11 : index
    %c0_532 = arith.constant 0 : index
    %1265 = memref.load %arg6[%c11, %c0_532] : memref<16x8xf32, #tpu.memory_space<smem>>
    %1266 = vector.broadcast %1265 : f32 to vector<8x57xf32>
    %1267 = arith.mulf %1266, %458 : vector<8x57xf32>
    %1268 = arith.addf %1264, %1267 : vector<8x57xf32>
    %c11_533 = arith.constant 11 : index
    %c1_534 = arith.constant 1 : index
    %1269 = memref.load %arg6[%c11_533, %c1_534] : memref<16x8xf32, #tpu.memory_space<smem>>
    %1270 = vector.broadcast %1269 : f32 to vector<8x57xf32>
    %1271 = arith.mulf %1270, %507 : vector<8x57xf32>
    %1272 = arith.addf %1268, %1271 : vector<8x57xf32>
    %c11_535 = arith.constant 11 : index
    %c2_536 = arith.constant 2 : index
    %1273 = memref.load %arg6[%c11_535, %c2_536] : memref<16x8xf32, #tpu.memory_space<smem>>
    %1274 = vector.broadcast %1273 : f32 to vector<8x57xf32>
    %1275 = arith.mulf %1274, %556 : vector<8x57xf32>
    %1276 = arith.addf %1272, %1275 : vector<8x57xf32>
    %c11_537 = arith.constant 11 : index
    %c3_538 = arith.constant 3 : index
    %1277 = memref.load %arg6[%c11_537, %c3_538] : memref<16x8xf32, #tpu.memory_space<smem>>
    %1278 = vector.broadcast %1277 : f32 to vector<8x57xf32>
    %1279 = arith.mulf %1278, %605 : vector<8x57xf32>
    %1280 = arith.addf %1276, %1279 : vector<8x57xf32>
    %c11_539 = arith.constant 11 : index
    %c4_540 = arith.constant 4 : index
    %1281 = memref.load %arg6[%c11_539, %c4_540] : memref<16x8xf32, #tpu.memory_space<smem>>
    %1282 = vector.broadcast %1281 : f32 to vector<8x57xf32>
    %1283 = arith.mulf %1282, %654 : vector<8x57xf32>
    %1284 = arith.addf %1280, %1283 : vector<8x57xf32>
    %c11_541 = arith.constant 11 : index
    %c5_542 = arith.constant 5 : index
    %1285 = memref.load %arg6[%c11_541, %c5_542] : memref<16x8xf32, #tpu.memory_space<smem>>
    %1286 = vector.broadcast %1285 : f32 to vector<8x57xf32>
    %1287 = arith.mulf %1286, %703 : vector<8x57xf32>
    %1288 = arith.addf %1284, %1287 : vector<8x57xf32>
    %c11_543 = arith.constant 11 : index
    %c6_544 = arith.constant 6 : index
    %1289 = memref.load %arg6[%c11_543, %c6_544] : memref<16x8xf32, #tpu.memory_space<smem>>
    %1290 = vector.broadcast %1289 : f32 to vector<8x57xf32>
    %1291 = arith.mulf %1290, %752 : vector<8x57xf32>
    %1292 = arith.addf %1288, %1291 : vector<8x57xf32>
    %c11_545 = arith.constant 11 : index
    %c7_546 = arith.constant 7 : index
    %1293 = memref.load %arg6[%c11_545, %c7_546] : memref<16x8xf32, #tpu.memory_space<smem>>
    %1294 = vector.broadcast %1293 : f32 to vector<8x57xf32>
    %1295 = arith.mulf %1294, %801 : vector<8x57xf32>
    %1296 = arith.addf %1292, %1295 : vector<8x57xf32>
    %c11_547 = arith.constant 11 : index
    %1297 = memref.load %arg7[%c11_547] : memref<16xf32, #tpu.memory_space<smem>>
    %1298 = vector.broadcast %1297 : f32 to vector<8x57xf32>
    %1299 = arith.addf %1296, %1298 : vector<8x57xf32>
    %cst_548 = arith.constant 0.000000e+00 : f32
    %1300 = vector.broadcast %cst_548 : f32 to vector<8x57xf32>
    %1301 = arith.cmpf ogt, %1299, %1300 : vector<8x57xf32>
    %1302 = math.exp %1299 : vector<8x57xf32>
    %cst_549 = arith.constant 1.000000e+00 : f32
    %1303 = vector.broadcast %cst_549 : f32 to vector<8x57xf32>
    %1304 = arith.subf %1302, %1303 : vector<8x57xf32>
    %1305 = arith.select %1301, %1299, %1304 : vector<8x57xi1>, vector<8x57xf32>
    %cst_550 = arith.constant 0.000000e+00 : f32
    %1306 = vector.broadcast %cst_550 : f32 to vector<8x57xf32>
    %c12 = arith.constant 12 : index
    %c0_551 = arith.constant 0 : index
    %1307 = memref.load %arg6[%c12, %c0_551] : memref<16x8xf32, #tpu.memory_space<smem>>
    %1308 = vector.broadcast %1307 : f32 to vector<8x57xf32>
    %1309 = arith.mulf %1308, %458 : vector<8x57xf32>
    %1310 = arith.addf %1306, %1309 : vector<8x57xf32>
    %c12_552 = arith.constant 12 : index
    %c1_553 = arith.constant 1 : index
    %1311 = memref.load %arg6[%c12_552, %c1_553] : memref<16x8xf32, #tpu.memory_space<smem>>
    %1312 = vector.broadcast %1311 : f32 to vector<8x57xf32>
    %1313 = arith.mulf %1312, %507 : vector<8x57xf32>
    %1314 = arith.addf %1310, %1313 : vector<8x57xf32>
    %c12_554 = arith.constant 12 : index
    %c2_555 = arith.constant 2 : index
    %1315 = memref.load %arg6[%c12_554, %c2_555] : memref<16x8xf32, #tpu.memory_space<smem>>
    %1316 = vector.broadcast %1315 : f32 to vector<8x57xf32>
    %1317 = arith.mulf %1316, %556 : vector<8x57xf32>
    %1318 = arith.addf %1314, %1317 : vector<8x57xf32>
    %c12_556 = arith.constant 12 : index
    %c3_557 = arith.constant 3 : index
    %1319 = memref.load %arg6[%c12_556, %c3_557] : memref<16x8xf32, #tpu.memory_space<smem>>
    %1320 = vector.broadcast %1319 : f32 to vector<8x57xf32>
    %1321 = arith.mulf %1320, %605 : vector<8x57xf32>
    %1322 = arith.addf %1318, %1321 : vector<8x57xf32>
    %c12_558 = arith.constant 12 : index
    %c4_559 = arith.constant 4 : index
    %1323 = memref.load %arg6[%c12_558, %c4_559] : memref<16x8xf32, #tpu.memory_space<smem>>
    %1324 = vector.broadcast %1323 : f32 to vector<8x57xf32>
    %1325 = arith.mulf %1324, %654 : vector<8x57xf32>
    %1326 = arith.addf %1322, %1325 : vector<8x57xf32>
    %c12_560 = arith.constant 12 : index
    %c5_561 = arith.constant 5 : index
    %1327 = memref.load %arg6[%c12_560, %c5_561] : memref<16x8xf32, #tpu.memory_space<smem>>
    %1328 = vector.broadcast %1327 : f32 to vector<8x57xf32>
    %1329 = arith.mulf %1328, %703 : vector<8x57xf32>
    %1330 = arith.addf %1326, %1329 : vector<8x57xf32>
    %c12_562 = arith.constant 12 : index
    %c6_563 = arith.constant 6 : index
    %1331 = memref.load %arg6[%c12_562, %c6_563] : memref<16x8xf32, #tpu.memory_space<smem>>
    %1332 = vector.broadcast %1331 : f32 to vector<8x57xf32>
    %1333 = arith.mulf %1332, %752 : vector<8x57xf32>
    %1334 = arith.addf %1330, %1333 : vector<8x57xf32>
    %c12_564 = arith.constant 12 : index
    %c7_565 = arith.constant 7 : index
    %1335 = memref.load %arg6[%c12_564, %c7_565] : memref<16x8xf32, #tpu.memory_space<smem>>
    %1336 = vector.broadcast %1335 : f32 to vector<8x57xf32>
    %1337 = arith.mulf %1336, %801 : vector<8x57xf32>
    %1338 = arith.addf %1334, %1337 : vector<8x57xf32>
    %c12_566 = arith.constant 12 : index
    %1339 = memref.load %arg7[%c12_566] : memref<16xf32, #tpu.memory_space<smem>>
    %1340 = vector.broadcast %1339 : f32 to vector<8x57xf32>
    %1341 = arith.addf %1338, %1340 : vector<8x57xf32>
    %cst_567 = arith.constant 0.000000e+00 : f32
    %1342 = vector.broadcast %cst_567 : f32 to vector<8x57xf32>
    %1343 = arith.cmpf ogt, %1341, %1342 : vector<8x57xf32>
    %1344 = math.exp %1341 : vector<8x57xf32>
    %cst_568 = arith.constant 1.000000e+00 : f32
    %1345 = vector.broadcast %cst_568 : f32 to vector<8x57xf32>
    %1346 = arith.subf %1344, %1345 : vector<8x57xf32>
    %1347 = arith.select %1343, %1341, %1346 : vector<8x57xi1>, vector<8x57xf32>
    %cst_569 = arith.constant 0.000000e+00 : f32
    %1348 = vector.broadcast %cst_569 : f32 to vector<8x57xf32>
    %c13 = arith.constant 13 : index
    %c0_570 = arith.constant 0 : index
    %1349 = memref.load %arg6[%c13, %c0_570] : memref<16x8xf32, #tpu.memory_space<smem>>
    %1350 = vector.broadcast %1349 : f32 to vector<8x57xf32>
    %1351 = arith.mulf %1350, %458 : vector<8x57xf32>
    %1352 = arith.addf %1348, %1351 : vector<8x57xf32>
    %c13_571 = arith.constant 13 : index
    %c1_572 = arith.constant 1 : index
    %1353 = memref.load %arg6[%c13_571, %c1_572] : memref<16x8xf32, #tpu.memory_space<smem>>
    %1354 = vector.broadcast %1353 : f32 to vector<8x57xf32>
    %1355 = arith.mulf %1354, %507 : vector<8x57xf32>
    %1356 = arith.addf %1352, %1355 : vector<8x57xf32>
    %c13_573 = arith.constant 13 : index
    %c2_574 = arith.constant 2 : index
    %1357 = memref.load %arg6[%c13_573, %c2_574] : memref<16x8xf32, #tpu.memory_space<smem>>
    %1358 = vector.broadcast %1357 : f32 to vector<8x57xf32>
    %1359 = arith.mulf %1358, %556 : vector<8x57xf32>
    %1360 = arith.addf %1356, %1359 : vector<8x57xf32>
    %c13_575 = arith.constant 13 : index
    %c3_576 = arith.constant 3 : index
    %1361 = memref.load %arg6[%c13_575, %c3_576] : memref<16x8xf32, #tpu.memory_space<smem>>
    %1362 = vector.broadcast %1361 : f32 to vector<8x57xf32>
    %1363 = arith.mulf %1362, %605 : vector<8x57xf32>
    %1364 = arith.addf %1360, %1363 : vector<8x57xf32>
    %c13_577 = arith.constant 13 : index
    %c4_578 = arith.constant 4 : index
    %1365 = memref.load %arg6[%c13_577, %c4_578] : memref<16x8xf32, #tpu.memory_space<smem>>
    %1366 = vector.broadcast %1365 : f32 to vector<8x57xf32>
    %1367 = arith.mulf %1366, %654 : vector<8x57xf32>
    %1368 = arith.addf %1364, %1367 : vector<8x57xf32>
    %c13_579 = arith.constant 13 : index
    %c5_580 = arith.constant 5 : index
    %1369 = memref.load %arg6[%c13_579, %c5_580] : memref<16x8xf32, #tpu.memory_space<smem>>
    %1370 = vector.broadcast %1369 : f32 to vector<8x57xf32>
    %1371 = arith.mulf %1370, %703 : vector<8x57xf32>
    %1372 = arith.addf %1368, %1371 : vector<8x57xf32>
    %c13_581 = arith.constant 13 : index
    %c6_582 = arith.constant 6 : index
    %1373 = memref.load %arg6[%c13_581, %c6_582] : memref<16x8xf32, #tpu.memory_space<smem>>
    %1374 = vector.broadcast %1373 : f32 to vector<8x57xf32>
    %1375 = arith.mulf %1374, %752 : vector<8x57xf32>
    %1376 = arith.addf %1372, %1375 : vector<8x57xf32>
    %c13_583 = arith.constant 13 : index
    %c7_584 = arith.constant 7 : index
    %1377 = memref.load %arg6[%c13_583, %c7_584] : memref<16x8xf32, #tpu.memory_space<smem>>
    %1378 = vector.broadcast %1377 : f32 to vector<8x57xf32>
    %1379 = arith.mulf %1378, %801 : vector<8x57xf32>
    %1380 = arith.addf %1376, %1379 : vector<8x57xf32>
    %c13_585 = arith.constant 13 : index
    %1381 = memref.load %arg7[%c13_585] : memref<16xf32, #tpu.memory_space<smem>>
    %1382 = vector.broadcast %1381 : f32 to vector<8x57xf32>
    %1383 = arith.addf %1380, %1382 : vector<8x57xf32>
    %cst_586 = arith.constant 0.000000e+00 : f32
    %1384 = vector.broadcast %cst_586 : f32 to vector<8x57xf32>
    %1385 = arith.cmpf ogt, %1383, %1384 : vector<8x57xf32>
    %1386 = math.exp %1383 : vector<8x57xf32>
    %cst_587 = arith.constant 1.000000e+00 : f32
    %1387 = vector.broadcast %cst_587 : f32 to vector<8x57xf32>
    %1388 = arith.subf %1386, %1387 : vector<8x57xf32>
    %1389 = arith.select %1385, %1383, %1388 : vector<8x57xi1>, vector<8x57xf32>
    %cst_588 = arith.constant 0.000000e+00 : f32
    %1390 = vector.broadcast %cst_588 : f32 to vector<8x57xf32>
    %c14 = arith.constant 14 : index
    %c0_589 = arith.constant 0 : index
    %1391 = memref.load %arg6[%c14, %c0_589] : memref<16x8xf32, #tpu.memory_space<smem>>
    %1392 = vector.broadcast %1391 : f32 to vector<8x57xf32>
    %1393 = arith.mulf %1392, %458 : vector<8x57xf32>
    %1394 = arith.addf %1390, %1393 : vector<8x57xf32>
    %c14_590 = arith.constant 14 : index
    %c1_591 = arith.constant 1 : index
    %1395 = memref.load %arg6[%c14_590, %c1_591] : memref<16x8xf32, #tpu.memory_space<smem>>
    %1396 = vector.broadcast %1395 : f32 to vector<8x57xf32>
    %1397 = arith.mulf %1396, %507 : vector<8x57xf32>
    %1398 = arith.addf %1394, %1397 : vector<8x57xf32>
    %c14_592 = arith.constant 14 : index
    %c2_593 = arith.constant 2 : index
    %1399 = memref.load %arg6[%c14_592, %c2_593] : memref<16x8xf32, #tpu.memory_space<smem>>
    %1400 = vector.broadcast %1399 : f32 to vector<8x57xf32>
    %1401 = arith.mulf %1400, %556 : vector<8x57xf32>
    %1402 = arith.addf %1398, %1401 : vector<8x57xf32>
    %c14_594 = arith.constant 14 : index
    %c3_595 = arith.constant 3 : index
    %1403 = memref.load %arg6[%c14_594, %c3_595] : memref<16x8xf32, #tpu.memory_space<smem>>
    %1404 = vector.broadcast %1403 : f32 to vector<8x57xf32>
    %1405 = arith.mulf %1404, %605 : vector<8x57xf32>
    %1406 = arith.addf %1402, %1405 : vector<8x57xf32>
    %c14_596 = arith.constant 14 : index
    %c4_597 = arith.constant 4 : index
    %1407 = memref.load %arg6[%c14_596, %c4_597] : memref<16x8xf32, #tpu.memory_space<smem>>
    %1408 = vector.broadcast %1407 : f32 to vector<8x57xf32>
    %1409 = arith.mulf %1408, %654 : vector<8x57xf32>
    %1410 = arith.addf %1406, %1409 : vector<8x57xf32>
    %c14_598 = arith.constant 14 : index
    %c5_599 = arith.constant 5 : index
    %1411 = memref.load %arg6[%c14_598, %c5_599] : memref<16x8xf32, #tpu.memory_space<smem>>
    %1412 = vector.broadcast %1411 : f32 to vector<8x57xf32>
    %1413 = arith.mulf %1412, %703 : vector<8x57xf32>
    %1414 = arith.addf %1410, %1413 : vector<8x57xf32>
    %c14_600 = arith.constant 14 : index
    %c6_601 = arith.constant 6 : index
    %1415 = memref.load %arg6[%c14_600, %c6_601] : memref<16x8xf32, #tpu.memory_space<smem>>
    %1416 = vector.broadcast %1415 : f32 to vector<8x57xf32>
    %1417 = arith.mulf %1416, %752 : vector<8x57xf32>
    %1418 = arith.addf %1414, %1417 : vector<8x57xf32>
    %c14_602 = arith.constant 14 : index
    %c7_603 = arith.constant 7 : index
    %1419 = memref.load %arg6[%c14_602, %c7_603] : memref<16x8xf32, #tpu.memory_space<smem>>
    %1420 = vector.broadcast %1419 : f32 to vector<8x57xf32>
    %1421 = arith.mulf %1420, %801 : vector<8x57xf32>
    %1422 = arith.addf %1418, %1421 : vector<8x57xf32>
    %c14_604 = arith.constant 14 : index
    %1423 = memref.load %arg7[%c14_604] : memref<16xf32, #tpu.memory_space<smem>>
    %1424 = vector.broadcast %1423 : f32 to vector<8x57xf32>
    %1425 = arith.addf %1422, %1424 : vector<8x57xf32>
    %cst_605 = arith.constant 0.000000e+00 : f32
    %1426 = vector.broadcast %cst_605 : f32 to vector<8x57xf32>
    %1427 = arith.cmpf ogt, %1425, %1426 : vector<8x57xf32>
    %1428 = math.exp %1425 : vector<8x57xf32>
    %cst_606 = arith.constant 1.000000e+00 : f32
    %1429 = vector.broadcast %cst_606 : f32 to vector<8x57xf32>
    %1430 = arith.subf %1428, %1429 : vector<8x57xf32>
    %1431 = arith.select %1427, %1425, %1430 : vector<8x57xi1>, vector<8x57xf32>
    %cst_607 = arith.constant 0.000000e+00 : f32
    %1432 = vector.broadcast %cst_607 : f32 to vector<8x57xf32>
    %c15 = arith.constant 15 : index
    %c0_608 = arith.constant 0 : index
    %1433 = memref.load %arg6[%c15, %c0_608] : memref<16x8xf32, #tpu.memory_space<smem>>
    %1434 = vector.broadcast %1433 : f32 to vector<8x57xf32>
    %1435 = arith.mulf %1434, %458 : vector<8x57xf32>
    %1436 = arith.addf %1432, %1435 : vector<8x57xf32>
    %c15_609 = arith.constant 15 : index
    %c1_610 = arith.constant 1 : index
    %1437 = memref.load %arg6[%c15_609, %c1_610] : memref<16x8xf32, #tpu.memory_space<smem>>
    %1438 = vector.broadcast %1437 : f32 to vector<8x57xf32>
    %1439 = arith.mulf %1438, %507 : vector<8x57xf32>
    %1440 = arith.addf %1436, %1439 : vector<8x57xf32>
    %c15_611 = arith.constant 15 : index
    %c2_612 = arith.constant 2 : index
    %1441 = memref.load %arg6[%c15_611, %c2_612] : memref<16x8xf32, #tpu.memory_space<smem>>
    %1442 = vector.broadcast %1441 : f32 to vector<8x57xf32>
    %1443 = arith.mulf %1442, %556 : vector<8x57xf32>
    %1444 = arith.addf %1440, %1443 : vector<8x57xf32>
    %c15_613 = arith.constant 15 : index
    %c3_614 = arith.constant 3 : index
    %1445 = memref.load %arg6[%c15_613, %c3_614] : memref<16x8xf32, #tpu.memory_space<smem>>
    %1446 = vector.broadcast %1445 : f32 to vector<8x57xf32>
    %1447 = arith.mulf %1446, %605 : vector<8x57xf32>
    %1448 = arith.addf %1444, %1447 : vector<8x57xf32>
    %c15_615 = arith.constant 15 : index
    %c4_616 = arith.constant 4 : index
    %1449 = memref.load %arg6[%c15_615, %c4_616] : memref<16x8xf32, #tpu.memory_space<smem>>
    %1450 = vector.broadcast %1449 : f32 to vector<8x57xf32>
    %1451 = arith.mulf %1450, %654 : vector<8x57xf32>
    %1452 = arith.addf %1448, %1451 : vector<8x57xf32>
    %c15_617 = arith.constant 15 : index
    %c5_618 = arith.constant 5 : index
    %1453 = memref.load %arg6[%c15_617, %c5_618] : memref<16x8xf32, #tpu.memory_space<smem>>
    %1454 = vector.broadcast %1453 : f32 to vector<8x57xf32>
    %1455 = arith.mulf %1454, %703 : vector<8x57xf32>
    %1456 = arith.addf %1452, %1455 : vector<8x57xf32>
    %c15_619 = arith.constant 15 : index
    %c6_620 = arith.constant 6 : index
    %1457 = memref.load %arg6[%c15_619, %c6_620] : memref<16x8xf32, #tpu.memory_space<smem>>
    %1458 = vector.broadcast %1457 : f32 to vector<8x57xf32>
    %1459 = arith.mulf %1458, %752 : vector<8x57xf32>
    %1460 = arith.addf %1456, %1459 : vector<8x57xf32>
    %c15_621 = arith.constant 15 : index
    %c7_622 = arith.constant 7 : index
    %1461 = memref.load %arg6[%c15_621, %c7_622] : memref<16x8xf32, #tpu.memory_space<smem>>
    %1462 = vector.broadcast %1461 : f32 to vector<8x57xf32>
    %1463 = arith.mulf %1462, %801 : vector<8x57xf32>
    %1464 = arith.addf %1460, %1463 : vector<8x57xf32>
    %c15_623 = arith.constant 15 : index
    %1465 = memref.load %arg7[%c15_623] : memref<16xf32, #tpu.memory_space<smem>>
    %1466 = vector.broadcast %1465 : f32 to vector<8x57xf32>
    %1467 = arith.addf %1464, %1466 : vector<8x57xf32>
    %cst_624 = arith.constant 0.000000e+00 : f32
    %1468 = vector.broadcast %cst_624 : f32 to vector<8x57xf32>
    %1469 = arith.cmpf ogt, %1467, %1468 : vector<8x57xf32>
    %1470 = math.exp %1467 : vector<8x57xf32>
    %cst_625 = arith.constant 1.000000e+00 : f32
    %1471 = vector.broadcast %cst_625 : f32 to vector<8x57xf32>
    %1472 = arith.subf %1470, %1471 : vector<8x57xf32>
    %1473 = arith.select %1469, %1467, %1472 : vector<8x57xi1>, vector<8x57xf32>
    %cst_626 = arith.constant dense<0xFF800000> : vector<8xf32>
    %1474 = vector.multi_reduction <maximumf>, %843, %cst_626 [1] : vector<8x57xf32> to vector<8xf32>
    %1475 = vector.shape_cast %1474 : vector<8xf32> to vector<8x1xf32>
    %cst_627 = arith.constant dense<0xFF800000> : vector<8xf32>
    %1476 = vector.multi_reduction <maximumf>, %885, %cst_627 [1] : vector<8x57xf32> to vector<8xf32>
    %1477 = vector.shape_cast %1476 : vector<8xf32> to vector<8x1xf32>
    %cst_628 = arith.constant dense<0xFF800000> : vector<8xf32>
    %1478 = vector.multi_reduction <maximumf>, %927, %cst_628 [1] : vector<8x57xf32> to vector<8xf32>
    %1479 = vector.shape_cast %1478 : vector<8xf32> to vector<8x1xf32>
    %cst_629 = arith.constant dense<0xFF800000> : vector<8xf32>
    %1480 = vector.multi_reduction <maximumf>, %969, %cst_629 [1] : vector<8x57xf32> to vector<8xf32>
    %1481 = vector.shape_cast %1480 : vector<8xf32> to vector<8x1xf32>
    %cst_630 = arith.constant dense<0xFF800000> : vector<8xf32>
    %1482 = vector.multi_reduction <maximumf>, %1011, %cst_630 [1] : vector<8x57xf32> to vector<8xf32>
    %1483 = vector.shape_cast %1482 : vector<8xf32> to vector<8x1xf32>
    %cst_631 = arith.constant dense<0xFF800000> : vector<8xf32>
    %1484 = vector.multi_reduction <maximumf>, %1053, %cst_631 [1] : vector<8x57xf32> to vector<8xf32>
    %1485 = vector.shape_cast %1484 : vector<8xf32> to vector<8x1xf32>
    %cst_632 = arith.constant dense<0xFF800000> : vector<8xf32>
    %1486 = vector.multi_reduction <maximumf>, %1095, %cst_632 [1] : vector<8x57xf32> to vector<8xf32>
    %1487 = vector.shape_cast %1486 : vector<8xf32> to vector<8x1xf32>
    %cst_633 = arith.constant dense<0xFF800000> : vector<8xf32>
    %1488 = vector.multi_reduction <maximumf>, %1137, %cst_633 [1] : vector<8x57xf32> to vector<8xf32>
    %1489 = vector.shape_cast %1488 : vector<8xf32> to vector<8x1xf32>
    %cst_634 = arith.constant dense<0xFF800000> : vector<8xf32>
    %1490 = vector.multi_reduction <maximumf>, %1179, %cst_634 [1] : vector<8x57xf32> to vector<8xf32>
    %1491 = vector.shape_cast %1490 : vector<8xf32> to vector<8x1xf32>
    %cst_635 = arith.constant dense<0xFF800000> : vector<8xf32>
    %1492 = vector.multi_reduction <maximumf>, %1221, %cst_635 [1] : vector<8x57xf32> to vector<8xf32>
    %1493 = vector.shape_cast %1492 : vector<8xf32> to vector<8x1xf32>
    %cst_636 = arith.constant dense<0xFF800000> : vector<8xf32>
    %1494 = vector.multi_reduction <maximumf>, %1263, %cst_636 [1] : vector<8x57xf32> to vector<8xf32>
    %1495 = vector.shape_cast %1494 : vector<8xf32> to vector<8x1xf32>
    %cst_637 = arith.constant dense<0xFF800000> : vector<8xf32>
    %1496 = vector.multi_reduction <maximumf>, %1305, %cst_637 [1] : vector<8x57xf32> to vector<8xf32>
    %1497 = vector.shape_cast %1496 : vector<8xf32> to vector<8x1xf32>
    %cst_638 = arith.constant dense<0xFF800000> : vector<8xf32>
    %1498 = vector.multi_reduction <maximumf>, %1347, %cst_638 [1] : vector<8x57xf32> to vector<8xf32>
    %1499 = vector.shape_cast %1498 : vector<8xf32> to vector<8x1xf32>
    %cst_639 = arith.constant dense<0xFF800000> : vector<8xf32>
    %1500 = vector.multi_reduction <maximumf>, %1389, %cst_639 [1] : vector<8x57xf32> to vector<8xf32>
    %1501 = vector.shape_cast %1500 : vector<8xf32> to vector<8x1xf32>
    %cst_640 = arith.constant dense<0xFF800000> : vector<8xf32>
    %1502 = vector.multi_reduction <maximumf>, %1431, %cst_640 [1] : vector<8x57xf32> to vector<8xf32>
    %1503 = vector.shape_cast %1502 : vector<8xf32> to vector<8x1xf32>
    %cst_641 = arith.constant dense<0xFF800000> : vector<8xf32>
    %1504 = vector.multi_reduction <maximumf>, %1473, %cst_641 [1] : vector<8x57xf32> to vector<8xf32>
    %1505 = vector.shape_cast %1504 : vector<8xf32> to vector<8x1xf32>
    %1506 = tpu.concatenate %1475, %1477, %1479, %1481, %1483, %1485, %1487, %1489, %1491, %1493, %1495, %1497, %1499, %1501, %1503, %1505 in 1 : vector<8x1xf32>, vector<8x1xf32>, vector<8x1xf32>, vector<8x1xf32>, vector<8x1xf32>, vector<8x1xf32>, vector<8x1xf32>, vector<8x1xf32>, vector<8x1xf32>, vector<8x1xf32>, vector<8x1xf32>, vector<8x1xf32>, vector<8x1xf32>, vector<8x1xf32>, vector<8x1xf32>, vector<8x1xf32> -> vector<8x16xf32>
    %c0_642 = arith.constant 0 : index
    %c0_643 = arith.constant 0 : index
    %1507 = vector.load %arg8[%c0_642, %c0_643] : memref<8x16xf32, #tpu.memory_space<vmem>>, vector<8x16xf32>
    tpu.vector_store %arg8[%c0_642, %c0_643], %1506 {strides = array<i32>} : memref<8x16xf32, #tpu.memory_space<vmem>>, vector<8x16xf32>,
    return
  }
  func.func @transform_0(%arg0: i32) -> (i32, i32) {
    %c0_i32 = arith.constant 0 : i32
    %c0_i32_0 = arith.constant 0 : i32
    return %arg0, %c0_i32 : i32, i32
  }
  func.func @transform_1(%arg0: i32) -> (i32, i32) {
    %c0_i32 = arith.constant 0 : i32
    %c0_i32_0 = arith.constant 0 : i32
    %c0_i32_1 = arith.constant 0 : i32
    return %c0_i32, %c0_i32_0 : i32, i32
  }
  func.func @transform_2(%arg0: i32) -> i32 {
    %c0_i32 = arith.constant 0 : i32
    %c0_i32_0 = arith.constant 0 : i32
    return %c0_i32 : i32
  }
  func.func @transform_3(%arg0: i32) -> (i32, i32) {
    %c0_i32 = arith.constant 0 : i32
    %c0_i32_0 = arith.constant 0 : i32
    %c0_i32_1 = arith.constant 0 : i32
    return %c0_i32, %c0_i32_0 : i32, i32
  }
  func.func @transform_4(%arg0: i32) -> i32 {
    %c0_i32 = arith.constant 0 : i32
    %c0_i32_0 = arith.constant 0 : i32
    return %c0_i32 : i32
  }
  func.func @transform_5(%arg0: i32) -> (i32, i32) {
    %c0_i32 = arith.constant 0 : i32
    %c0_i32_0 = arith.constant 0 : i32
    %c0_i32_1 = arith.constant 0 : i32
    return %c0_i32, %c0_i32_0 : i32, i32
  }
  func.func @transform_6(%arg0: i32) -> i32 {
    %c0_i32 = arith.constant 0 : i32
    %c0_i32_0 = arith.constant 0 : i32
    return %c0_i32 : i32
  }
  func.func @transform_7(%arg0: i32) -> (i32, i32) {
    %c0_i32 = arith.constant 0 : i32
    %c0_i32_0 = arith.constant 0 : i32
    return %arg0, %c0_i32 : i32, i32
  }
}

</mosaic_0001>

<llo_original>
// kernel: tpu_custom_call.1
$region0: #{tpu_custom_call.1}
  #allocation0 [shape = 'u32[]', space=smem, size = 0x4, offset = 0x4, fixed_abs, tag = 'smem constant byte address 0x4 - core index']
  #allocation1 [shape = 'u32[144,128]{1,0:T(1,128)}', space=vmem, size = 0x12000, scoped, tag = 'internal scratch']
  %s0 = inlined_call_operand.vmem [shape: f32[16,64], index: 0, kind: input, shape index: {}]
  %s1 = inlined_call_operand.vmem [shape: f32[8,8], index: 1, kind: input, shape index: {}]
  %s2 = inlined_call_operand.vmem [shape: f32[8], index: 2, kind: input, shape index: {}]
  %s3 = inlined_call_operand.hbm [shape: f32[8,9], index: 3, kind: input, shape index: {}]
  %s4 = inlined_call_operand.hbm [shape: f32[8], index: 4, kind: input, shape index: {}]
  %s5 = inlined_call_operand.vmem [shape: f32[16,8], index: 5, kind: input, shape index: {}]
  %s6 = inlined_call_operand.vmem [shape: f32[16], index: 6, kind: input, shape index: {}]
  %s7 = inlined_call_operand.hbm [shape: f32[16,16], index: 7, kind: output, shape index: {}]
  %s8 = sld [smem:[#allocation0]]
  $region85: #{tpu_custom_call.1} parent=0
    _
  %s10 = ssub.s32 1, %s8
  %s11 = scalar_select 0, %s10, %s8
  $region1: #{tpu_custom_call.1} parent=0
    #allocation2 [shape = 'u8[4096]{0}', space=smem, size = 0x1000, scoped, tag = 'input window, operand 1, single buffered']
    #allocation3 [shape = 's32[2]{0}', space=sflag, size = 0x8, scoped, tag = 'scoped memory for tpu_custom_call.1']
    #allocation4 [shape = 's32[2]{0}', space=sflag, size = 0x8, scoped, tag = 'scoped memory for tpu_custom_call.1']
    #allocation5 [shape = 's32[2]{0}', space=sflag, size = 0x8, scoped, tag = 'scoped memory for tpu_custom_call.1']
    #allocation6 [shape = 'u8[512]{0}', space=smem, size = 0x200, scoped, tag = 'input window, operand 2, single buffered']
    #allocation7 [shape = 's32[1]{0}', space=sflag, size = 0x4, scoped, tag = 'scoped memory for tpu_custom_call.1']
    #allocation8 [shape = 'u8[4096]{0}', space=smem, size = 0x1000, scoped, tag = 'input window, operand 3, single buffered']
    #allocation9 [shape = 'u8[512]{0}', space=smem, size = 0x200, scoped, tag = 'input window, operand 4, single buffered']
    #allocation10 [shape = 's32[1]{0}', space=sflag, size = 0x4, scoped, tag = 'scoped memory for tpu_custom_call.1']
    #allocation11 [shape = 'u8[8192]{0}', space=smem, size = 0x2000, scoped, tag = 'input window, operand 5, single buffered']
    #allocation12 [shape = 'u8[512]{0}', space=smem, size = 0x200, scoped, tag = 'input window, operand 6, single buffered']
    #allocation13 [shape = 's32[1]{0}', space=sflag, size = 0x4, scoped, tag = 'scoped memory for tpu_custom_call.1']
    #allocation14 [shape = 'u8[8192]{0}', space=vmem, size = 0x2000, scoped, tag = 'output window, operand 0']
    %12 = vsyncpa [#allocation5], 0
    %13 = vsyncpa [#allocation7], 0
    %14 = vsyncpa [#allocation4], 0
    %15 = vsyncpa [#allocation10], 0
    %16 = vsyncpa [#allocation13], 0
    %17 = vsyncpa [#allocation3], 0
    %s18 = scalar_lea.sflag [#allocation3], 1
    %19 = vsyncpa %s18, 0
    loop: start=0, step=1, limit=4
    $region2: #{tpu_custom_call.1} parent=1 // loop_pre_header
      _
    $region3: #{tpu_custom_call.1} parent=1 // loop_header
      %s21 = sphi 0, %s25
      %p22 = scmp.ge.s32.totalorder %s21, 4
      %s31 = sphi 0, %s33
      %s34 = sphi 0, %s31
      %s35 = sphi 0, %s34
      %s51 = sphi 0, %s35
      %s55 = sphi 0, %s55
      %s57 = sphi 0, %s55
      %s58 = sphi 0, %s57
      %s72 = sphi 0, %s58
      %s76 = sphi 0, %s76
      %s78 = sphi 0, %s76
      %s79 = sphi 0, %s78
      %s93 = sphi 0, %s79
      %s97 = sphi 0, %s97
      %s99 = sphi 0, %s97
      %s100 = sphi 0, %s99
      %s114 = sphi 0, %s100
      %s118 = sphi 0, %s118
      %s120 = sphi 0, %s118
      %s121 = sphi 0, %s120
      %s135 = sphi 0, %s121
      %s139 = sphi 0, %s139
      %s141 = sphi 0, %s139
      %s142 = sphi 0, %s141
      %s156 = sphi 0, %s142
      %s160 = sphi 0, %s160
      %s162 = sphi 0, %s160
      %s163 = sphi 0, %s162
      %s177 = sphi 0, %s163
      %s183 = sphi 0, %s185
      %s186 = sphi 0, %s183
      %s187 = sphi 0, %s186
      %s203 = sphi 0, %s187
    $region4: #{tpu_custom_call.1} parent=1 // loop_header_branch
      %24 = sbr.rel (%p22) target = $region8
    $region5: #{tpu_custom_call.1} parent=1 // loop_body
      %s26 = ssub.s32 %s21, 1
      %s27 = ssub.s32 %s21, 2
      %s28 = sadd.s32 %s21, 1
      %s29 = ssub.s32 %s21, %s28
      %p30 = scmp.eq.s32.totalorder %s29, 0
      %s32 = sadd.s32 %s31, 1
      %s33 = scalar_select %p30, %s31, %s32
      %p36 = pneg %p30
      %p37 = scmp.eq.s32.totalorder %s21, 1
      %p38 = por %p36, %p37
      %p39 = scmp.ne.s32.totalorder %s31, %s34
      %p40 = scmp.eq.s32.totalorder %s21, 0
      %p41 = por %p39, %p40
      %p42 = scmp.ne.s32.totalorder %s31, %s34
      %p43 = scmp.eq.s32.totalorder %s26, 1
      %p44 = por %p42, %p43
      %p45 = scmp.ne.s32.totalorder %s34, %s35
      %p46 = scmp.eq.s32.totalorder %s26, 0
      %p47 = por %p45, %p46
      %p48 = scmp.ne.s32.totalorder %s34, %s35
      %p49 = scmp.eq.s32.totalorder %s27, 1
      %p50 = por %p48, %p49
      %p52 = scmp.ne.s32.totalorder %s35, %s51
      %p53 = scmp.eq.s32.totalorder %s27, 0
      %p54 = por %p52, %p53
      %s56 = sadd.s32 %s55, 1
      %p59 = scmp.eq.s32.totalorder %s21, 1
      %p60 = scmp.ne.s32.totalorder %s55, %s57
      %p61 = scmp.eq.s32.totalorder %s21, 0
      %p62 = por %p60, %p61
      %p63 = scmp.ne.s32.totalorder %s55, %s57
      %p64 = scmp.eq.s32.totalorder %s26, 1
      %p65 = por %p63, %p64
      %p66 = scmp.ne.s32.totalorder %s57, %s58
      %p67 = scmp.eq.s32.totalorder %s26, 0
      %p68 = por %p66, %p67
      %p69 = scmp.ne.s32.totalorder %s57, %s58
      %p70 = scmp.eq.s32.totalorder %s27, 1
      %p71 = por %p69, %p70
      %p73 = scmp.ne.s32.totalorder %s58, %s72
      %p74 = scmp.eq.s32.totalorder %s27, 0
      %p75 = por %p73, %p74
      %s77 = sadd.s32 %s76, 1
      %p80 = scmp.eq.s32.totalorder %s21, 1
      %p81 = scmp.ne.s32.totalorder %s76, %s78
      %p82 = scmp.eq.s32.totalorder %s21, 0
      %p83 = por %p81, %p82
      %p84 = scmp.ne.s32.totalorder %s76, %s78
      %p85 = scmp.eq.s32.totalorder %s26, 1
      %p86 = por %p84, %p85
      %p87 = scmp.ne.s32.totalorder %s78, %s79
      %p88 = scmp.eq.s32.totalorder %s26, 0
      %p89 = por %p87, %p88
      %p90 = scmp.ne.s32.totalorder %s78, %s79
      %p91 = scmp.eq.s32.totalorder %s27, 1
      %p92 = por %p90, %p91
      %p94 = scmp.ne.s32.totalorder %s79, %s93
      %p95 = scmp.eq.s32.totalorder %s27, 0
      %p96 = por %p94, %p95
      %s98 = sadd.s32 %s97, 1
      %p101 = scmp.eq.s32.totalorder %s21, 1
      %p102 = scmp.ne.s32.totalorder %s97, %s99
      %p103 = scmp.eq.s32.totalorder %s21, 0
      %p104 = por %p102, %p103
      %p105 = scmp.ne.s32.totalorder %s97, %s99
      %p106 = scmp.eq.s32.totalorder %s26, 1
      %p107 = por %p105, %p106
      %p108 = scmp.ne.s32.totalorder %s99, %s100
      %p109 = scmp.eq.s32.totalorder %s26, 0
      %p110 = por %p108, %p109
      %p111 = scmp.ne.s32.totalorder %s99, %s100
      %p112 = scmp.eq.s32.totalorder %s27, 1
      %p113 = por %p111, %p112
      %p115 = scmp.ne.s32.totalorder %s100, %s114
      %p116 = scmp.eq.s32.totalorder %s27, 0
      %p117 = por %p115, %p116
      %s119 = sadd.s32 %s118, 1
      %p122 = scmp.eq.s32.totalorder %s21, 1
      %p123 = scmp.ne.s32.totalorder %s118, %s120
      %p124 = scmp.eq.s32.totalorder %s21, 0
      %p125 = por %p123, %p124
      %p126 = scmp.ne.s32.totalorder %s118, %s120
      %p127 = scmp.eq.s32.totalorder %s26, 1
      %p128 = por %p126, %p127
      %p129 = scmp.ne.s32.totalorder %s120, %s121
      %p130 = scmp.eq.s32.totalorder %s26, 0
      %p131 = por %p129, %p130
      %p132 = scmp.ne.s32.totalorder %s120, %s121
      %p133 = scmp.eq.s32.totalorder %s27, 1
      %p134 = por %p132, %p133
      %p136 = scmp.ne.s32.totalorder %s121, %s135
      %p137 = scmp.eq.s32.totalorder %s27, 0
      %p138 = por %p136, %p137
      %s140 = sadd.s32 %s139, 1
      %p143 = scmp.eq.s32.totalorder %s21, 1
      %p144 = scmp.ne.s32.totalorder %s139, %s141
      %p145 = scmp.eq.s32.totalorder %s21, 0
      %p146 = por %p144, %p145
      %p147 = scmp.ne.s32.totalorder %s139, %s141
      %p148 = scmp.eq.s32.totalorder %s26, 1
      %p149 = por %p147, %p148
      %p150 = scmp.ne.s32.totalorder %s141, %s142
      %p151 = scmp.eq.s32.totalorder %s26, 0
      %p152 = por %p150, %p151
      %p153 = scmp.ne.s32.totalorder %s141, %s142
      %p154 = scmp.eq.s32.totalorder %s27, 1
      %p155 = por %p153, %p154
      %p157 = scmp.ne.s32.totalorder %s142, %s156
      %p158 = scmp.eq.s32.totalorder %s27, 0
      %p159 = por %p157, %p158
      %s161 = sadd.s32 %s160, 1
      %p164 = scmp.eq.s32.totalorder %s21, 1
      %p165 = scmp.ne.s32.totalorder %s160, %s162
      %p166 = scmp.eq.s32.totalorder %s21, 0
      %p167 = por %p165, %p166
      %p168 = scmp.ne.s32.totalorder %s160, %s162
      %p169 = scmp.eq.s32.totalorder %s26, 1
      %p170 = por %p168, %p169
      %p171 = scmp.ne.s32.totalorder %s162, %s163
      %p172 = scmp.eq.s32.totalorder %s26, 0
      %p173 = por %p171, %p172
      %p174 = scmp.ne.s32.totalorder %s162, %s163
      %p175 = scmp.eq.s32.totalorder %s27, 1
      %p176 = por %p174, %p175
      %p178 = scmp.ne.s32.totalorder %s163, %s177
      %p179 = scmp.eq.s32.totalorder %s27, 0
      %p180 = por %p178, %p179
      %s181 = ssub.s32 %s21, %s28
      %p182 = scmp.eq.s32.totalorder %s181, 0
      %s184 = sadd.s32 %s183, 1
      %s185 = scalar_select %p182, %s183, %s184
      %p188 = pneg %p182
      %p189 = scmp.eq.s32.totalorder %s21, 1
      %p190 = por %p188, %p189
      %p191 = scmp.ne.s32.totalorder %s183, %s186
      %p192 = scmp.eq.s32.totalorder %s21, 0
      %p193 = por %p191, %p192
      %p194 = scmp.ne.s32.totalorder %s183, %s186
      %p195 = scmp.eq.s32.totalorder %s26, 1
      %p196 = por %p194, %p195
      %p197 = scmp.ne.s32.totalorder %s186, %s187
      %p198 = scmp.eq.s32.totalorder %s26, 0
      %p199 = por %p197, %p198
      %p200 = scmp.ne.s32.totalorder %s186, %s187
      %p201 = scmp.eq.s32.totalorder %s27, 1
      %p202 = por %p200, %p201
      %p204 = scmp.ne.s32.totalorder %s187, %s203
      %p205 = scmp.eq.s32.totalorder %s27, 0
      %p206 = por %p204, %p205
      %p207 = scmp.le.s32.totalorder 1, %s21
      %p208 = scmp.lt.s32.totalorder %s21, 3
      %p209 = pnand %p207, %p208
      %p210 = pneg %p209
      // Predicated region
      $region9: #{tpu_custom_call.1} parent=5 // pred_check
        _
      $region10: #{tpu_custom_call.1} parent=5 // pred_check_branch
        %212 = sbr.rel (%p209) target = $region12
      $region11: #{tpu_custom_call.1} parent=5 // pred_region
        %s213 = ssub.s32 %s21, 1
        // Predicated region
        $region13: #{tpu_custom_call.1} parent=11 // pred_check
          %p214 = pneg %p68
        $region14: #{tpu_custom_call.1} parent=11 // pred_check_branch
          %216 = sbr.rel (%p214) target = $region16
        $region15: #{tpu_custom_call.1} parent=11 // pred_region
          %s218 = ssub.s32 128, 128
          %219 = vsyncadd [#allocation5], %s218
          %s221 = sshll.u32 %s1, 4
          %s222 = int_to_ptr.vmem [resolvable:$true] %s221
          %224 = dma.vmem_to_smem %s222, 128, [#allocation2], [#allocation5]
        $region16: #{tpu_custom_call.1} parent=11 // pred_fallthru
          _
        // Predicated region
        $region17: #{tpu_custom_call.1} parent=11 // pred_check
          %p225 = pneg %p89
        $region18: #{tpu_custom_call.1} parent=11 // pred_check_branch
          %227 = sbr.rel (%p225) target = $region20
        $region19: #{tpu_custom_call.1} parent=11 // pred_region
          %s229 = ssub.s32 16, 16
          %230 = vsyncadd [#allocation7], %s229
          %s232 = sshll.u32 %s2, 4
          %s233 = int_to_ptr.vmem [resolvable:$true] %s232
          %235 = dma.vmem_to_smem %s233, 16, [#allocation6], [#allocation7]
        $region20: #{tpu_custom_call.1} parent=11 // pred_fallthru
          _
        // Predicated region
        $region21: #{tpu_custom_call.1} parent=11 // pred_check
          %p236 = pneg %p110
        $region22: #{tpu_custom_call.1} parent=11 // pred_check_branch
          %238 = sbr.rel (%p236) target = $region24
        $region23: #{tpu_custom_call.1} parent=11 // pred_region
          %s240 = ssub.s32 128, 128
          %241 = vsyncadd [#allocation4], %s240
          %244 = dma.hbm_to_smem %s3, 128, [#allocation8], [#allocation4]
        $region24: #{tpu_custom_call.1} parent=11 // pred_fallthru
          _
        // Predicated region
        $region25: #{tpu_custom_call.1} parent=11 // pred_check
          %p245 = pneg %p131
        $region26: #{tpu_custom_call.1} parent=11 // pred_check_branch
          %247 = sbr.rel (%p245) target = $region28
        $region27: #{tpu_custom_call.1} parent=11 // pred_region
          %s249 = ssub.s32 16, 16
          %250 = vsyncadd [#allocation10], %s249
          %253 = dma.hbm_to_smem %s4, 16, [#allocation9], [#allocation10]
        $region28: #{tpu_custom_call.1} parent=11 // pred_fallthru
          _
        // Predicated region
        $region29: #{tpu_custom_call.1} parent=11 // pred_check
          %p254 = pneg %p152
        $region30: #{tpu_custom_call.1} parent=11 // pred_check_branch
          %256 = sbr.rel (%p254) target = $region32
        $region31: #{tpu_custom_call.1} parent=11 // pred_region
          %s258 = ssub.s32 256, 256
          %259 = vsyncadd [#allocation7], %s258
          %s260 = sshll.u32 %s5, 4
          %s261 = int_to_ptr.vmem [resolvable:$true] %s260
          %266 = dma.vmem_to_smem %s261, 256, [#allocation11], [#allocation7], 128, 128, 8
        $region32: #{tpu_custom_call.1} parent=11 // pred_fallthru
          _
        // Predicated region
        $region33: #{tpu_custom_call.1} parent=11 // pred_check
          %p267 = pneg %p173
        $region34: #{tpu_custom_call.1} parent=11 // pred_check_branch
          %269 = sbr.rel (%p267) target = $region36
        $region35: #{tpu_custom_call.1} parent=11 // pred_region
          %s271 = ssub.s32 16, 16
          %272 = vsyncadd [#allocation13], %s271
          %s274 = sshll.u32 %s6, 4
          %s275 = int_to_ptr.vmem [resolvable:$true] %s274
          %277 = dma.vmem_to_smem %s275, 16, [#allocation12], [#allocation13]
        $region36: #{tpu_custom_call.1} parent=11 // pred_fallthru
          _
      $region12: #{tpu_custom_call.1} parent=5 // pred_fallthru
        _
      %p278 = scmp.lt.s32.totalorder %s21, 2
      // Predicated region
      $region37: #{tpu_custom_call.1} parent=5 // pred_check
        %p279 = pneg %p278
      $region38: #{tpu_custom_call.1} parent=5 // pred_check_branch
        %281 = sbr.rel (%p279) target = $region40
      $region39: #{tpu_custom_call.1} parent=5 // pred_region
        // Predicated region
        $region41: #{tpu_custom_call.1} parent=39 // pred_check
          %p282 = pneg %p41
        $region42: #{tpu_custom_call.1} parent=39 // pred_check_branch
          %284 = sbr.rel (%p282) target = $region44
        $region43: #{tpu_custom_call.1} parent=39 // pred_region
          %p285 = scmp.lt.s32.totalorder %s21, 1
          %s286 = scalar_select %p285, %s21, 1
          %s287 = smul.addr %s286, 8
          %s288 = scalar_lea.vmem %s0, %s287
        $region44: #{tpu_custom_call.1} parent=39 // pred_fallthru
          _
      $region40: #{tpu_custom_call.1} parent=5 // pred_fallthru
        _
      %p289 = scmp.le.s32.totalorder 1, %s21
      %p290 = scmp.lt.s32.totalorder %s21, 3
      %p291 = pnand %p289, %p290
      %p292 = pneg %p291
      // Predicated region
      $region45: #{tpu_custom_call.1} parent=5 // pred_check
        _
      $region46: #{tpu_custom_call.1} parent=5 // pred_check_branch
        %294 = sbr.rel (%p291) target = $region48
      $region47: #{tpu_custom_call.1} parent=5 // pred_region
        %s295 = ssub.s32 %s21, 1
        // Predicated region
        $region49: #{tpu_custom_call.1} parent=47 // pred_check
          %p296 = pneg %p68
        $region50: #{tpu_custom_call.1} parent=47 // pred_check_branch
          %298 = sbr.rel (%p296) target = $region52
        $region51: #{tpu_custom_call.1} parent=47 // pred_region
          %299 = dma.done [#allocation5], 128
        $region52: #{tpu_custom_call.1} parent=47 // pred_fallthru
          _
        // Predicated region
        $region53: #{tpu_custom_call.1} parent=47 // pred_check
          %p300 = pneg %p89
        $region54: #{tpu_custom_call.1} parent=47 // pred_check_branch
          %302 = sbr.rel (%p300) target = $region56
        $region55: #{tpu_custom_call.1} parent=47 // pred_region
          %303 = dma.done [#allocation7], 16
        $region56: #{tpu_custom_call.1} parent=47 // pred_fallthru
          _
        // Predicated region
        $region57: #{tpu_custom_call.1} parent=47 // pred_check
          %p304 = pneg %p110
        $region58: #{tpu_custom_call.1} parent=47 // pred_check_branch
          %306 = sbr.rel (%p304) target = $region60
        $region59: #{tpu_custom_call.1} parent=47 // pred_region
          %307 = dma.done [#allocation4], 128
        $region60: #{tpu_custom_call.1} parent=47 // pred_fallthru
          _
        // Predicated region
        $region61: #{tpu_custom_call.1} parent=47 // pred_check
          %p308 = pneg %p131
        $region62: #{tpu_custom_call.1} parent=47 // pred_check_branch
          %310 = sbr.rel (%p308) target = $region64
        $region63: #{tpu_custom_call.1} parent=47 // pred_region
          %311 = dma.done [#allocation10], 16
        $region64: #{tpu_custom_call.1} parent=47 // pred_fallthru
          _
        // Predicated region
        $region65: #{tpu_custom_call.1} parent=47 // pred_check
          %p312 = pneg %p152
        $region66: #{tpu_custom_call.1} parent=47 // pred_check_branch
          %314 = sbr.rel (%p312) target = $region68
        $region67: #{tpu_custom_call.1} parent=47 // pred_region
          %315 = dma.done [#allocation7], 256
        $region68: #{tpu_custom_call.1} parent=47 // pred_fallthru
          _
        // Predicated region
        $region69: #{tpu_custom_call.1} parent=47 // pred_check
          %p316 = pneg %p173
        $region70: #{tpu_custom_call.1} parent=47 // pred_check_branch
          %318 = sbr.rel (%p316) target = $region72
        $region71: #{tpu_custom_call.1} parent=47 // pred_region
          %319 = dma.done [#allocation13], 16
        $region72: #{tpu_custom_call.1} parent=47 // pred_fallthru
          _
        %320 = sfence
        %p321 = scmp.lt.s32.totalorder %s26, 1
        %s322 = scalar_select %p321, %s26, 1
        %s323 = smul.addr %s322, 8
        %s324 = scalar_lea.vmem %s0, %s323
        %p325 = pneg %p47
        %p326 = pneg %p44
        %p327 = pneg %p68
        %p328 = pneg %p65
        %p329 = pneg %p89
        %p330 = pneg %p86
        %p331 = pneg %p110
        %p332 = pneg %p107
        %p333 = pneg %p131
        %p334 = pneg %p128
        %p335 = pneg %p152
        %p336 = pneg %p149
        %p337 = pneg %p173
        %p338 = pneg %p170
        %p339 = pneg %p199
        %p340 = pneg %p196
        %s341 = sand.u32 %s186, 1
        %s342 = scalar_lea.sflag [#allocation3], %s341
        %s343 = sand.u32 %s186, 1
        %s344 = smul.addr %s343, 8
        %s345 = scalar_lea.vmem [#allocation14], %s344
        %p346 = scmp.lt.s32.totalorder %s26, 1
        %s347 = scalar_select %p346, %s26, 1
        %s348 = smul.addr %s347, 8
        %s349 = scalar_lea.vmem %s0, %s348
        %v350 = vld [vmem:[%s349] sm:$0xff]
        %s351 = sld [smem:[#allocation2]]
        %v352 = vstv %s351
        %v353 = vmul.f32 %v352, %v350
        %v354 = vadd.f32 %v353, 0.0
        %s355 = sld [smem:[#allocation2 + $0x1]]
        %v356 = vstv %s355
        %v357 = vmul.f32 %v356, %v350
        %359 = vrot.lane.b32.xlu0 %v357, 127
        %v360 = vpop.permute.xlu0 %359
        %v362 = vadd.f32 %v354, %v360
        %s363 = sld [smem:[#allocation2 + $0x2]]
        %v364 = vstv %s363
        %v365 = vmul.f32 %v364, %v350
        %367 = vrot.lane.b32.xlu0 %v365, 126
        %v368 = vpop.permute.xlu0 %367
        %v370 = vadd.f32 %v362, %v368
        %s371 = sld [smem:[#allocation2 + $0x3]]
        %v372 = vstv %s371
        %v373 = vmul.f32 %v372, %v350
        %375 = vrot.lane.b32.xlu0 %v373, 125
        %v376 = vpop.permute.xlu0 %375
        %v378 = vadd.f32 %v370, %v376
        %s379 = sld [smem:[#allocation2 + $0x4]]
        %v380 = vstv %s379
        %v381 = vmul.f32 %v380, %v350
        %383 = vrot.lane.b32.xlu0 %v381, 124
        %v384 = vpop.permute.xlu0 %383
        %v386 = vadd.f32 %v378, %v384
        %s387 = sld [smem:[#allocation2 + $0x5]]
        %v388 = vstv %s387
        %v389 = vmul.f32 %v388, %v350
        %391 = vrot.lane.b32.xlu0 %v389, 123
        %v392 = vpop.permute.xlu0 %391
        %v394 = vadd.f32 %v386, %v392
        %s395 = sld [smem:[#allocation2 + $0x6]]
        %v396 = vstv %s395
        %v397 = vmul.f32 %v396, %v350
        %399 = vrot.lane.b32.xlu0 %v397, 122
        %v400 = vpop.permute.xlu0 %399
        %v402 = vadd.f32 %v394, %v400
        %s403 = sld [smem:[#allocation2 + $0x7]]
        %v404 = vstv %s403
        %v405 = vmul.f32 %v404, %v350
        %407 = vrot.lane.b32.xlu0 %v405, 121
        %v408 = vpop.permute.xlu0 %407
        %v410 = vadd.f32 %v402, %v408
        %s411 = sld [smem:[#allocation6]]
        %v412 = vstv %s411
        %v413 = vadd.f32 %v410, %v412
        %vm414 = vcmp.gt.f32.partialorder %v413, 0.0
        %v415 = vmul.f32 %v413, 1.442695
        %v416 = vpow.pop %v415
        %v417 = vsub.f32 %v416, 1.0
        %v418 = vsel %vm414, %v413, %v417
        %s419 = sld [smem:[#allocation2 + $0x80]]
        %v420 = vstv %s419
        %v421 = vmul.f32 %v420, %v350
        %v422 = vadd.f32 %v421, 0.0
        %s423 = sld [smem:[#allocation2 + $0x81]]
        %v424 = vstv %s423
        %v425 = vmul.f32 %v424, %v350
        %427 = vrot.lane.b32.xlu0 %v425, 127
        %v428 = vpop.permute.xlu0 %427
        %v430 = vadd.f32 %v422, %v428
        %s431 = sld [smem:[#allocation2 + $0x82]]
        %v432 = vstv %s431
        %v433 = vmul.f32 %v432, %v350
        %435 = vrot.lane.b32.xlu0 %v433, 126
        %v436 = vpop.permute.xlu0 %435
        %v438 = vadd.f32 %v430, %v436
        %s439 = sld [smem:[#allocation2 + $0x83]]
        %v440 = vstv %s439
        %v441 = vmul.f32 %v440, %v350
        %443 = vrot.lane.b32.xlu0 %v441, 125
        %v444 = vpop.permute.xlu0 %443
        %v446 = vadd.f32 %v438, %v444
        %s447 = sld [smem:[#allocation2 + $0x84]]
        %v448 = vstv %s447
        %v449 = vmul.f32 %v448, %v350
        %451 = vrot.lane.b32.xlu0 %v449, 124
        %v452 = vpop.permute.xlu0 %451
        %v454 = vadd.f32 %v446, %v452
        %s455 = sld [smem:[#allocation2 + $0x85]]
        %v456 = vstv %s455
        %v457 = vmul.f32 %v456, %v350
        %459 = vrot.lane.b32.xlu0 %v457, 123
        %v460 = vpop.permute.xlu0 %459
        %v462 = vadd.f32 %v454, %v460
        %s463 = sld [smem:[#allocation2 + $0x86]]
        %v464 = vstv %s463
        %v465 = vmul.f32 %v464, %v350
        %467 = vrot.lane.b32.xlu0 %v465, 122
        %v468 = vpop.permute.xlu0 %467
        %v470 = vadd.f32 %v462, %v468
        %s471 = sld [smem:[#allocation2 + $0x87]]
        %v472 = vstv %s471
        %v473 = vmul.f32 %v472, %v350
        %475 = vrot.lane.b32.xlu0 %v473, 121
        %v476 = vpop.permute.xlu0 %475
        %v478 = vadd.f32 %v470, %v476
        %s479 = sld [smem:[#allocation6 + $0x1]]
        %v480 = vstv %s479
        %v481 = vadd.f32 %v478, %v480
        %vm482 = vcmp.gt.f32.partialorder %v481, 0.0
        %v483 = vmul.f32 %v481, 1.442695
        %v484 = vpow.pop %v483
        %v485 = vsub.f32 %v484, 1.0
        %v486 = vsel %vm482, %v481, %v485
        %s487 = sld [smem:[#allocation2 + $0x100]]
        %v488 = vstv %s487
        %v489 = vmul.f32 %v488, %v350
        %v490 = vadd.f32 %v489, 0.0
        %s491 = sld [smem:[#allocation2 + $0x101]]
        %v492 = vstv %s491
        %v493 = vmul.f32 %v492, %v350
        %495 = vrot.lane.b32.xlu0 %v493, 127
        %v496 = vpop.permute.xlu0 %495
        %v498 = vadd.f32 %v490, %v496
        %s499 = sld [smem:[#allocation2 + $0x102]]
        %v500 = vstv %s499
        %v501 = vmul.f32 %v500, %v350
        %503 = vrot.lane.b32.xlu0 %v501, 126
        %v504 = vpop.permute.xlu0 %503
        %v506 = vadd.f32 %v498, %v504
        %s507 = sld [smem:[#allocation2 + $0x103]]
        %v508 = vstv %s507
        %v509 = vmul.f32 %v508, %v350
        %511 = vrot.lane.b32.xlu0 %v509, 125
        %v512 = vpop.permute.xlu0 %511
        %v514 = vadd.f32 %v506, %v512
        %s515 = sld [smem:[#allocation2 + $0x104]]
        %v516 = vstv %s515
        %v517 = vmul.f32 %v516, %v350
        %519 = vrot.lane.b32.xlu0 %v517, 124
        %v520 = vpop.permute.xlu0 %519
        %v522 = vadd.f32 %v514, %v520
        %s523 = sld [smem:[#allocation2 + $0x105]]
        %v524 = vstv %s523
        %v525 = vmul.f32 %v524, %v350
        %527 = vrot.lane.b32.xlu0 %v525, 123
        %v528 = vpop.permute.xlu0 %527
        %v530 = vadd.f32 %v522, %v528
        %s531 = sld [smem:[#allocation2 + $0x106]]
        %v532 = vstv %s531
        %v533 = vmul.f32 %v532, %v350
        %535 = vrot.lane.b32.xlu0 %v533, 122
        %v536 = vpop.permute.xlu0 %535
        %v538 = vadd.f32 %v530, %v536
        %s539 = sld [smem:[#allocation2 + $0x107]]
        %v540 = vstv %s539
        %v541 = vmul.f32 %v540, %v350
        %543 = vrot.lane.b32.xlu0 %v541, 121
        %v544 = vpop.permute.xlu0 %543
        %v546 = vadd.f32 %v538, %v544
        %s547 = sld [smem:[#allocation6 + $0x2]]
        %v548 = vstv %s547
        %v549 = vadd.f32 %v546, %v548
        %vm550 = vcmp.gt.f32.partialorder %v549, 0.0
        %v551 = vmul.f32 %v549, 1.442695
        %v552 = vpow.pop %v551
        %v553 = vsub.f32 %v552, 1.0
        %v554 = vsel %vm550, %v549, %v553
        %s555 = sld [smem:[#allocation2 + $0x180]]
        %v556 = vstv %s555
        %v557 = vmul.f32 %v556, %v350
        %v558 = vadd.f32 %v557, 0.0
        %s559 = sld [smem:[#allocation2 + $0x181]]
        %v560 = vstv %s559
        %v561 = vmul.f32 %v560, %v350
        %563 = vrot.lane.b32.xlu0 %v561, 127
        %v564 = vpop.permute.xlu0 %563
        %v566 = vadd.f32 %v558, %v564
        %s567 = sld [smem:[#allocation2 + $0x182]]
        %v568 = vstv %s567
        %v569 = vmul.f32 %v568, %v350
        %571 = vrot.lane.b32.xlu0 %v569, 126
        %v572 = vpop.permute.xlu0 %571
        %v574 = vadd.f32 %v566, %v572
        %s575 = sld [smem:[#allocation2 + $0x183]]
        %v576 = vstv %s575
        %v577 = vmul.f32 %v576, %v350
        %579 = vrot.lane.b32.xlu0 %v577, 125
        %v580 = vpop.permute.xlu0 %579
        %v582 = vadd.f32 %v574, %v580
        %s583 = sld [smem:[#allocation2 + $0x184]]
        %v584 = vstv %s583
        %v585 = vmul.f32 %v584, %v350
        %587 = vrot.lane.b32.xlu0 %v585, 124
        %v588 = vpop.permute.xlu0 %587
        %v590 = vadd.f32 %v582, %v588
        %s591 = sld [smem:[#allocation2 + $0x185]]
        %v592 = vstv %s591
        %v593 = vmul.f32 %v592, %v350
        %595 = vrot.lane.b32.xlu0 %v593, 123
        %v596 = vpop.permute.xlu0 %595
        %v598 = vadd.f32 %v590, %v596
        %s599 = sld [smem:[#allocation2 + $0x186]]
        %v600 = vstv %s599
        %v601 = vmul.f32 %v600, %v350
        %603 = vrot.lane.b32.xlu0 %v601, 122
        %v604 = vpop.permute.xlu0 %603
        %v606 = vadd.f32 %v598, %v604
        %s607 = sld [smem:[#allocation2 + $0x187]]
        %v608 = vstv %s607
        %v609 = vmul.f32 %v608, %v350
        %611 = vrot.lane.b32.xlu0 %v609, 121
        %v612 = vpop.permute.xlu0 %611
        %v614 = vadd.f32 %v606, %v612
        %s615 = sld [smem:[#allocation6 + $0x3]]
        %v616 = vstv %s615
        %v617 = vadd.f32 %v614, %v616
        %vm618 = vcmp.gt.f32.partialorder %v617, 0.0
        %v619 = vmul.f32 %v617, 1.442695
        %v620 = vpow.pop %v619
        %v621 = vsub.f32 %v620, 1.0
        %v622 = vsel %vm618, %v617, %v621
        %s623 = sld [smem:[#allocation2 + $0x200]]
        %v624 = vstv %s623
        %v625 = vmul.f32 %v624, %v350
        %v626 = vadd.f32 %v625, 0.0
        %s627 = sld [smem:[#allocation2 + $0x201]]
        %v628 = vstv %s627
        %v629 = vmul.f32 %v628, %v350
        %631 = vrot.lane.b32.xlu0 %v629, 127
        %v632 = vpop.permute.xlu0 %631
        %v634 = vadd.f32 %v626, %v632
        %s635 = sld [smem:[#allocation2 + $0x202]]
        %v636 = vstv %s635
        %v637 = vmul.f32 %v636, %v350
        %639 = vrot.lane.b32.xlu0 %v637, 126
        %v640 = vpop.permute.xlu0 %639
        %v642 = vadd.f32 %v634, %v640
        %s643 = sld [smem:[#allocation2 + $0x203]]
        %v644 = vstv %s643
        %v645 = vmul.f32 %v644, %v350
        %647 = vrot.lane.b32.xlu0 %v645, 125
        %v648 = vpop.permute.xlu0 %647
        %v650 = vadd.f32 %v642, %v648
        %s651 = sld [smem:[#allocation2 + $0x204]]
        %v652 = vstv %s651
        %v653 = vmul.f32 %v652, %v350
        %655 = vrot.lane.b32.xlu0 %v653, 124
        %v656 = vpop.permute.xlu0 %655
        %v658 = vadd.f32 %v650, %v656
        %s659 = sld [smem:[#allocation2 + $0x205]]
        %v660 = vstv %s659
        %v661 = vmul.f32 %v660, %v350
        %663 = vrot.lane.b32.xlu0 %v661, 123
        %v664 = vpop.permute.xlu0 %663
        %v666 = vadd.f32 %v658, %v664
        %s667 = sld [smem:[#allocation2 + $0x206]]
        %v668 = vstv %s667
        %v669 = vmul.f32 %v668, %v350
        %671 = vrot.lane.b32.xlu0 %v669, 122
        %v672 = vpop.permute.xlu0 %671
        %v674 = vadd.f32 %v666, %v672
        %s675 = sld [smem:[#allocation2 + $0x207]]
        %v676 = vstv %s675
        %v677 = vmul.f32 %v676, %v350
        %679 = vrot.lane.b32.xlu0 %v677, 121
        %v680 = vpop.permute.xlu0 %679
        %v682 = vadd.f32 %v674, %v680
        %s683 = sld [smem:[#allocation6 + $0x4]]
        %v684 = vstv %s683
        %v685 = vadd.f32 %v682, %v684
        %vm686 = vcmp.gt.f32.partialorder %v685, 0.0
        %v687 = vmul.f32 %v685, 1.442695
        %v688 = vpow.pop %v687
        %v689 = vsub.f32 %v688, 1.0
        %v690 = vsel %vm686, %v685, %v689
        %s691 = sld [smem:[#allocation2 + $0x280]]
        %v692 = vstv %s691
        %v693 = vmul.f32 %v692, %v350
        %v694 = vadd.f32 %v693, 0.0
        %s695 = sld [smem:[#allocation2 + $0x281]]
        %v696 = vstv %s695
        %v697 = vmul.f32 %v696, %v350
        %699 = vrot.lane.b32.xlu0 %v697, 127
        %v700 = vpop.permute.xlu0 %699
        %v702 = vadd.f32 %v694, %v700
        %s703 = sld [smem:[#allocation2 + $0x282]]
        %v704 = vstv %s703
        %v705 = vmul.f32 %v704, %v350
        %707 = vrot.lane.b32.xlu0 %v705, 126
        %v708 = vpop.permute.xlu0 %707
        %v710 = vadd.f32 %v702, %v708
        %s711 = sld [smem:[#allocation2 + $0x283]]
        %v712 = vstv %s711
        %v713 = vmul.f32 %v712, %v350
        %715 = vrot.lane.b32.xlu0 %v713, 125
        %v716 = vpop.permute.xlu0 %715
        %v718 = vadd.f32 %v710, %v716
        %s719 = sld [smem:[#allocation2 + $0x284]]
        %v720 = vstv %s719
        %v721 = vmul.f32 %v720, %v350
        %723 = vrot.lane.b32.xlu0 %v721, 124
        %v724 = vpop.permute.xlu0 %723
        %v726 = vadd.f32 %v718, %v724
        %s727 = sld [smem:[#allocation2 + $0x285]]
        %v728 = vstv %s727
        %v729 = vmul.f32 %v728, %v350
        %731 = vrot.lane.b32.xlu0 %v729, 123
        %v732 = vpop.permute.xlu0 %731
        %v734 = vadd.f32 %v726, %v732
        %s735 = sld [smem:[#allocation2 + $0x286]]
        %v736 = vstv %s735
        %v737 = vmul.f32 %v736, %v350
        %739 = vrot.lane.b32.xlu0 %v737, 122
        %v740 = vpop.permute.xlu0 %739
        %v742 = vadd.f32 %v734, %v740
        %s743 = sld [smem:[#allocation2 + $0x287]]
        %v744 = vstv %s743
        %v745 = vmul.f32 %v744, %v350
        %747 = vrot.lane.b32.xlu0 %v745, 121
        %v748 = vpop.permute.xlu0 %747
        %v750 = vadd.f32 %v742, %v748
        %s751 = sld [smem:[#allocation6 + $0x5]]
        %v752 = vstv %s751
        %v753 = vadd.f32 %v750, %v752
        %vm754 = vcmp.gt.f32.partialorder %v753, 0.0
        %v755 = vmul.f32 %v753, 1.442695
        %v756 = vpow.pop %v755
        %v757 = vsub.f32 %v756, 1.0
        %v758 = vsel %vm754, %v753, %v757
        %s759 = sld [smem:[#allocation2 + $0x300]]
        %v760 = vstv %s759
        %v761 = vmul.f32 %v760, %v350
        %v762 = vadd.f32 %v761, 0.0
        %s763 = sld [smem:[#allocation2 + $0x301]]
        %v764 = vstv %s763
        %v765 = vmul.f32 %v764, %v350
        %767 = vrot.lane.b32.xlu0 %v765, 127
        %v768 = vpop.permute.xlu0 %767
        %v770 = vadd.f32 %v762, %v768
        %s771 = sld [smem:[#allocation2 + $0x302]]
        %v772 = vstv %s771
        %v773 = vmul.f32 %v772, %v350
        %775 = vrot.lane.b32.xlu0 %v773, 126
        %v776 = vpop.permute.xlu0 %775
        %v778 = vadd.f32 %v770, %v776
        %s779 = sld [smem:[#allocation2 + $0x303]]
        %v780 = vstv %s779
        %v781 = vmul.f32 %v780, %v350
        %783 = vrot.lane.b32.xlu0 %v781, 125
        %v784 = vpop.permute.xlu0 %783
        %v786 = vadd.f32 %v778, %v784
        %s787 = sld [smem:[#allocation2 + $0x304]]
        %v788 = vstv %s787
        %v789 = vmul.f32 %v788, %v350
        %791 = vrot.lane.b32.xlu0 %v789, 124
        %v792 = vpop.permute.xlu0 %791
        %v794 = vadd.f32 %v786, %v792
        %s795 = sld [smem:[#allocation2 + $0x305]]
        %v796 = vstv %s795
        %v797 = vmul.f32 %v796, %v350
        %799 = vrot.lane.b32.xlu0 %v797, 123
        %v800 = vpop.permute.xlu0 %799
        %v802 = vadd.f32 %v794, %v800
        %s803 = sld [smem:[#allocation2 + $0x306]]
        %v804 = vstv %s803
        %v805 = vmul.f32 %v804, %v350
        %807 = vrot.lane.b32.xlu0 %v805, 122
        %v808 = vpop.permute.xlu0 %807
        %v810 = vadd.f32 %v802, %v808
        %s811 = sld [smem:[#allocation2 + $0x307]]
        %v812 = vstv %s811
        %v813 = vmul.f32 %v812, %v350
        %815 = vrot.lane.b32.xlu0 %v813, 121
        %v816 = vpop.permute.xlu0 %815
        %v818 = vadd.f32 %v810, %v816
        %s819 = sld [smem:[#allocation6 + $0x6]]
        %v820 = vstv %s819
        %v821 = vadd.f32 %v818, %v820
        %vm822 = vcmp.gt.f32.partialorder %v821, 0.0
        %v823 = vmul.f32 %v821, 1.442695
        %v824 = vpow.pop %v823
        %v825 = vsub.f32 %v824, 1.0
        %v826 = vsel %vm822, %v821, %v825
        %s827 = sld [smem:[#allocation2 + $0x380]]
        %v828 = vstv %s827
        %v829 = vmul.f32 %v828, %v350
        %v830 = vadd.f32 %v829, 0.0
        %s831 = sld [smem:[#allocation2 + $0x381]]
        %v832 = vstv %s831
        %v833 = vmul.f32 %v832, %v350
        %835 = vrot.lane.b32.xlu0 %v833, 127
        %v836 = vpop.permute.xlu0 %835
        %v838 = vadd.f32 %v830, %v836
        %s839 = sld [smem:[#allocation2 + $0x382]]
        %v840 = vstv %s839
        %v841 = vmul.f32 %v840, %v350
        %843 = vrot.lane.b32.xlu0 %v841, 126
        %v844 = vpop.permute.xlu0 %843
        %v846 = vadd.f32 %v838, %v844
        %s847 = sld [smem:[#allocation2 + $0x383]]
        %v848 = vstv %s847
        %v849 = vmul.f32 %v848, %v350
        %851 = vrot.lane.b32.xlu0 %v849, 125
        %v852 = vpop.permute.xlu0 %851
        %v854 = vadd.f32 %v846, %v852
        %s855 = sld [smem:[#allocation2 + $0x384]]
        %v856 = vstv %s855
        %v857 = vmul.f32 %v856, %v350
        %859 = vrot.lane.b32.xlu0 %v857, 124
        %v860 = vpop.permute.xlu0 %859
        %v862 = vadd.f32 %v854, %v860
        %s863 = sld [smem:[#allocation2 + $0x385]]
        %v864 = vstv %s863
        %v865 = vmul.f32 %v864, %v350
        %867 = vrot.lane.b32.xlu0 %v865, 123
        %v868 = vpop.permute.xlu0 %867
        %v870 = vadd.f32 %v862, %v868
        %s871 = sld [smem:[#allocation2 + $0x386]]
        %v872 = vstv %s871
        %v873 = vmul.f32 %v872, %v350
        %875 = vrot.lane.b32.xlu0 %v873, 122
        %v876 = vpop.permute.xlu0 %875
        %v878 = vadd.f32 %v870, %v876
        %s879 = sld [smem:[#allocation2 + $0x387]]
        %v880 = vstv %s879
        %v881 = vmul.f32 %v880, %v350
        %883 = vrot.lane.b32.xlu0 %v881, 121
        %v884 = vpop.permute.xlu0 %883
        %v886 = vadd.f32 %v878, %v884
        %s887 = sld [smem:[#allocation6 + $0x7]]
        %v888 = vstv %s887
        %v889 = vadd.f32 %v886, %v888
        %vm890 = vcmp.gt.f32.partialorder %v889, 0.0
        %v891 = vmul.f32 %v889, 1.442695
        %v892 = vpow.pop %v891
        %v893 = vsub.f32 %v892, 1.0
        %v894 = vsel %vm890, %v889, %v893
        %896 = vrot.lane.b32.xlu0 %v418, 4
        %v897 = vpop.permute.xlu0 %896
        %vm899 = vcmask 31744
        %v900 = vsel %vm899, 0.0, %v897
        %vm901 = vcmask 498688
        %v902 = vsel %vm901, %v900, 0.0
        %904 = vrot.lane.b32.xlu0 %v486, 4
        %v905 = vpop.permute.xlu0 %904
        %v907 = vsel %vm899, 0.0, %v905
        %v908 = vsel %vm901, %v907, 0.0
        %910 = vrot.lane.b32.xlu0 %v554, 4
        %v911 = vpop.permute.xlu0 %910
        %v913 = vsel %vm899, 0.0, %v911
        %v914 = vsel %vm901, %v913, 0.0
        %916 = vrot.lane.b32.xlu0 %v622, 4
        %v917 = vpop.permute.xlu0 %916
        %v919 = vsel %vm899, 0.0, %v917
        %v920 = vsel %vm901, %v919, 0.0
        %922 = vrot.lane.b32.xlu0 %v690, 4
        %v923 = vpop.permute.xlu0 %922
        %v925 = vsel %vm899, 0.0, %v923
        %v926 = vsel %vm901, %v925, 0.0
        %928 = vrot.lane.b32.xlu0 %v758, 4
        %v929 = vpop.permute.xlu0 %928
        %v931 = vsel %vm899, 0.0, %v929
        %v932 = vsel %vm901, %v931, 0.0
        %934 = vrot.lane.b32.xlu0 %v826, 4
        %v935 = vpop.permute.xlu0 %934
        %v937 = vsel %vm899, 0.0, %v935
        %v938 = vsel %vm901, %v937, 0.0
        %940 = vrot.lane.b32.xlu0 %v894, 4
        %v941 = vpop.permute.xlu0 %940
        %v943 = vsel %vm899, 0.0, %v941
        %v944 = vsel %vm901, %v943, 0.0
        %s945 = sld [smem:[#allocation8]]
        %v946 = vstv %s945
        %v947 = vmul.f32 %v946, %v902
        %v948 = vadd.f32 %v947, 0.0
        %s949 = sld [smem:[#allocation8 + $0x1]]
        %v950 = vstv %s949
        %v951 = vmul.f32 %v950, %v902
        %953 = vrot.lane.b32.xlu0 %v951, 127
        %v954 = vpop.permute.xlu0 %953
        %v956 = vadd.f32 %v948, %v954
        %s957 = sld [smem:[#allocation8 + $0x2]]
        %v958 = vstv %s957
        %v959 = vmul.f32 %v958, %v902
        %961 = vrot.lane.b32.xlu0 %v959, 126
        %v962 = vpop.permute.xlu0 %961
        %v964 = vadd.f32 %v956, %v962
        %s965 = sld [smem:[#allocation8 + $0x3]]
        %v966 = vstv %s965
        %v967 = vmul.f32 %v966, %v902
        %969 = vrot.lane.b32.xlu0 %v967, 125
        %v970 = vpop.permute.xlu0 %969
        %v972 = vadd.f32 %v964, %v970
        %s973 = sld [smem:[#allocation8 + $0x4]]
        %v974 = vstv %s973
        %v975 = vmul.f32 %v974, %v902
        %977 = vrot.lane.b32.xlu0 %v975, 124
        %v978 = vpop.permute.xlu0 %977
        %v980 = vadd.f32 %v972, %v978
        %s981 = sld [smem:[#allocation8 + $0x5]]
        %v982 = vstv %s981
        %v983 = vmul.f32 %v982, %v902
        %985 = vrot.lane.b32.xlu0 %v983, 123
        %v986 = vpop.permute.xlu0 %985
        %v988 = vadd.f32 %v980, %v986
        %s989 = sld [smem:[#allocation8 + $0x6]]
        %v990 = vstv %s989
        %v991 = vmul.f32 %v990, %v902
        %993 = vrot.lane.b32.xlu0 %v991, 122
        %v994 = vpop.permute.xlu0 %993
        %v996 = vadd.f32 %v988, %v994
        %s997 = sld [smem:[#allocation8 + $0x7]]
        %v998 = vstv %s997
        %v999 = vmul.f32 %v998, %v902
        %1001 = vrot.lane.b32.xlu0 %v999, 121
        %v1002 = vpop.permute.xlu0 %1001
        %v1004 = vadd.f32 %v996, %v1002
        %s1005 = sld [smem:[#allocation8 + $0x8]]
        %v1006 = vstv %s1005
        %v1007 = vmul.f32 %v1006, %v902
        %1009 = vrot.lane.b32.xlu0 %v1007, 120
        %v1010 = vpop.permute.xlu0 %1009
        %v1012 = vadd.f32 %v1004, %v1010
        %s1013 = sld [smem:[#allocation9]]
        %v1014 = vstv %s1013
        %v1015 = vadd.f32 %v1012, %v1014
        %s1016 = sld [smem:[#allocation8 + $0x80]]
        %v1017 = vstv %s1016
        %v1018 = vmul.f32 %v1017, %v908
        %v1019 = vadd.f32 %v1018, 0.0
        %s1020 = sld [smem:[#allocation8 + $0x81]]
        %v1021 = vstv %s1020
        %v1022 = vmul.f32 %v1021, %v908
        %1024 = vrot.lane.b32.xlu0 %v1022, 127
        %v1025 = vpop.permute.xlu0 %1024
        %v1027 = vadd.f32 %v1019, %v1025
        %s1028 = sld [smem:[#allocation8 + $0x82]]
        %v1029 = vstv %s1028
        %v1030 = vmul.f32 %v1029, %v908
        %1032 = vrot.lane.b32.xlu0 %v1030, 126
        %v1033 = vpop.permute.xlu0 %1032
        %v1035 = vadd.f32 %v1027, %v1033
        %s1036 = sld [smem:[#allocation8 + $0x83]]
        %v1037 = vstv %s1036
        %v1038 = vmul.f32 %v1037, %v908
        %1040 = vrot.lane.b32.xlu0 %v1038, 125
        %v1041 = vpop.permute.xlu0 %1040
        %v1043 = vadd.f32 %v1035, %v1041
        %s1044 = sld [smem:[#allocation8 + $0x84]]
        %v1045 = vstv %s1044
        %v1046 = vmul.f32 %v1045, %v908
        %1048 = vrot.lane.b32.xlu0 %v1046, 124
        %v1049 = vpop.permute.xlu0 %1048
        %v1051 = vadd.f32 %v1043, %v1049
        %s1052 = sld [smem:[#allocation8 + $0x85]]
        %v1053 = vstv %s1052
        %v1054 = vmul.f32 %v1053, %v908
        %1056 = vrot.lane.b32.xlu0 %v1054, 123
        %v1057 = vpop.permute.xlu0 %1056
        %v1059 = vadd.f32 %v1051, %v1057
        %s1060 = sld [smem:[#allocation8 + $0x86]]
        %v1061 = vstv %s1060
        %v1062 = vmul.f32 %v1061, %v908
        %1064 = vrot.lane.b32.xlu0 %v1062, 122
        %v1065 = vpop.permute.xlu0 %1064
        %v1067 = vadd.f32 %v1059, %v1065
        %s1068 = sld [smem:[#allocation8 + $0x87]]
        %v1069 = vstv %s1068
        %v1070 = vmul.f32 %v1069, %v908
        %1072 = vrot.lane.b32.xlu0 %v1070, 121
        %v1073 = vpop.permute.xlu0 %1072
        %v1075 = vadd.f32 %v1067, %v1073
        %s1076 = sld [smem:[#allocation8 + $0x88]]
        %v1077 = vstv %s1076
        %v1078 = vmul.f32 %v1077, %v908
        %1080 = vrot.lane.b32.xlu0 %v1078, 120
        %v1081 = vpop.permute.xlu0 %1080
        %v1083 = vadd.f32 %v1075, %v1081
        %s1084 = sld [smem:[#allocation9 + $0x1]]
        %v1085 = vstv %s1084
        %v1086 = vadd.f32 %v1083, %v1085
        %s1087 = sld [smem:[#allocation8 + $0x100]]
        %v1088 = vstv %s1087
        %v1089 = vmul.f32 %v1088, %v914
        %v1090 = vadd.f32 %v1089, 0.0
        %s1091 = sld [smem:[#allocation8 + $0x101]]
        %v1092 = vstv %s1091
        %v1093 = vmul.f32 %v1092, %v914
        %1095 = vrot.lane.b32.xlu0 %v1093, 127
        %v1096 = vpop.permute.xlu0 %1095
        %v1098 = vadd.f32 %v1090, %v1096
        %s1099 = sld [smem:[#allocation8 + $0x102]]
        %v1100 = vstv %s1099
        %v1101 = vmul.f32 %v1100, %v914
        %1103 = vrot.lane.b32.xlu0 %v1101, 126
        %v1104 = vpop.permute.xlu0 %1103
        %v1106 = vadd.f32 %v1098, %v1104
        %s1107 = sld [smem:[#allocation8 + $0x103]]
        %v1108 = vstv %s1107
        %v1109 = vmul.f32 %v1108, %v914
        %1111 = vrot.lane.b32.xlu0 %v1109, 125
        %v1112 = vpop.permute.xlu0 %1111
        %v1114 = vadd.f32 %v1106, %v1112
        %s1115 = sld [smem:[#allocation8 + $0x104]]
        %v1116 = vstv %s1115
        %v1117 = vmul.f32 %v1116, %v914
        %1119 = vrot.lane.b32.xlu0 %v1117, 124
        %v1120 = vpop.permute.xlu0 %1119
        %v1122 = vadd.f32 %v1114, %v1120
        %s1123 = sld [smem:[#allocation8 + $0x105]]
        %v1124 = vstv %s1123
        %v1125 = vmul.f32 %v1124, %v914
        %1127 = vrot.lane.b32.xlu0 %v1125, 123
        %v1128 = vpop.permute.xlu0 %1127
        %v1130 = vadd.f32 %v1122, %v1128
        %s1131 = sld [smem:[#allocation8 + $0x106]]
        %v1132 = vstv %s1131
        %v1133 = vmul.f32 %v1132, %v914
        %1135 = vrot.lane.b32.xlu0 %v1133, 122
        %v1136 = vpop.permute.xlu0 %1135
        %v1138 = vadd.f32 %v1130, %v1136
        %s1139 = sld [smem:[#allocation8 + $0x107]]
        %v1140 = vstv %s1139
        %v1141 = vmul.f32 %v1140, %v914
        %1143 = vrot.lane.b32.xlu0 %v1141, 121
        %v1144 = vpop.permute.xlu0 %1143
        %v1146 = vadd.f32 %v1138, %v1144
        %s1147 = sld [smem:[#allocation8 + $0x108]]
        %v1148 = vstv %s1147
        %v1149 = vmul.f32 %v1148, %v914
        %1151 = vrot.lane.b32.xlu0 %v1149, 120
        %v1152 = vpop.permute.xlu0 %1151
        %v1154 = vadd.f32 %v1146, %v1152
        %s1155 = sld [smem:[#allocation9 + $0x2]]
        %v1156 = vstv %s1155
        %v1157 = vadd.f32 %v1154, %v1156
        %s1158 = sld [smem:[#allocation8 + $0x180]]
        %v1159 = vstv %s1158
        %v1160 = vmul.f32 %v1159, %v920
        %v1161 = vadd.f32 %v1160, 0.0
        %s1162 = sld [smem:[#allocation8 + $0x181]]
        %v1163 = vstv %s1162
        %v1164 = vmul.f32 %v1163, %v920
        %1166 = vrot.lane.b32.xlu0 %v1164, 127
        %v1167 = vpop.permute.xlu0 %1166
        %v1169 = vadd.f32 %v1161, %v1167
        %s1170 = sld [smem:[#allocation8 + $0x182]]
        %v1171 = vstv %s1170
        %v1172 = vmul.f32 %v1171, %v920
        %1174 = vrot.lane.b32.xlu0 %v1172, 126
        %v1175 = vpop.permute.xlu0 %1174
        %v1177 = vadd.f32 %v1169, %v1175
        %s1178 = sld [smem:[#allocation8 + $0x183]]
        %v1179 = vstv %s1178
        %v1180 = vmul.f32 %v1179, %v920
        %1182 = vrot.lane.b32.xlu0 %v1180, 125
        %v1183 = vpop.permute.xlu0 %1182
        %v1185 = vadd.f32 %v1177, %v1183
        %s1186 = sld [smem:[#allocation8 + $0x184]]
        %v1187 = vstv %s1186
        %v1188 = vmul.f32 %v1187, %v920
        %1190 = vrot.lane.b32.xlu0 %v1188, 124
        %v1191 = vpop.permute.xlu0 %1190
        %v1193 = vadd.f32 %v1185, %v1191
        %s1194 = sld [smem:[#allocation8 + $0x185]]
        %v1195 = vstv %s1194
        %v1196 = vmul.f32 %v1195, %v920
        %1198 = vrot.lane.b32.xlu0 %v1196, 123
        %v1199 = vpop.permute.xlu0 %1198
        %v1201 = vadd.f32 %v1193, %v1199
        %s1202 = sld [smem:[#allocation8 + $0x186]]
        %v1203 = vstv %s1202
        %v1204 = vmul.f32 %v1203, %v920
        %1206 = vrot.lane.b32.xlu0 %v1204, 122
        %v1207 = vpop.permute.xlu0 %1206
        %v1209 = vadd.f32 %v1201, %v1207
        %s1210 = sld [smem:[#allocation8 + $0x187]]
        %v1211 = vstv %s1210
        %v1212 = vmul.f32 %v1211, %v920
        %1214 = vrot.lane.b32.xlu0 %v1212, 121
        %v1215 = vpop.permute.xlu0 %1214
        %v1217 = vadd.f32 %v1209, %v1215
        %s1218 = sld [smem:[#allocation8 + $0x188]]
        %v1219 = vstv %s1218
        %v1220 = vmul.f32 %v1219, %v920
        %1222 = vrot.lane.b32.xlu0 %v1220, 120
        %v1223 = vpop.permute.xlu0 %1222
        %v1225 = vadd.f32 %v1217, %v1223
        %s1226 = sld [smem:[#allocation9 + $0x3]]
        %v1227 = vstv %s1226
        %v1228 = vadd.f32 %v1225, %v1227
        %s1229 = sld [smem:[#allocation8 + $0x200]]
        %v1230 = vstv %s1229
        %v1231 = vmul.f32 %v1230, %v926
        %v1232 = vadd.f32 %v1231, 0.0
        %s1233 = sld [smem:[#allocation8 + $0x201]]
        %v1234 = vstv %s1233
        %v1235 = vmul.f32 %v1234, %v926
        %1237 = vrot.lane.b32.xlu0 %v1235, 127
        %v1238 = vpop.permute.xlu0 %1237
        %v1240 = vadd.f32 %v1232, %v1238
        %s1241 = sld [smem:[#allocation8 + $0x202]]
        %v1242 = vstv %s1241
        %v1243 = vmul.f32 %v1242, %v926
        %1245 = vrot.lane.b32.xlu0 %v1243, 126
        %v1246 = vpop.permute.xlu0 %1245
        %v1248 = vadd.f32 %v1240, %v1246
        %s1249 = sld [smem:[#allocation8 + $0x203]]
        %v1250 = vstv %s1249
        %v1251 = vmul.f32 %v1250, %v926
        %1253 = vrot.lane.b32.xlu0 %v1251, 125
        %v1254 = vpop.permute.xlu0 %1253
        %v1256 = vadd.f32 %v1248, %v1254
        %s1257 = sld [smem:[#allocation8 + $0x204]]
        %v1258 = vstv %s1257
        %v1259 = vmul.f32 %v1258, %v926
        %1261 = vrot.lane.b32.xlu0 %v1259, 124
        %v1262 = vpop.permute.xlu0 %1261
        %v1264 = vadd.f32 %v1256, %v1262
        %s1265 = sld [smem:[#allocation8 + $0x205]]
        %v1266 = vstv %s1265
        %v1267 = vmul.f32 %v1266, %v926
        %1269 = vrot.lane.b32.xlu0 %v1267, 123
        %v1270 = vpop.permute.xlu0 %1269
        %v1272 = vadd.f32 %v1264, %v1270
        %s1273 = sld [smem:[#allocation8 + $0x206]]
        %v1274 = vstv %s1273
        %v1275 = vmul.f32 %v1274, %v926
        %1277 = vrot.lane.b32.xlu0 %v1275, 122
        %v1278 = vpop.permute.xlu0 %1277
        %v1280 = vadd.f32 %v1272, %v1278
        %s1281 = sld [smem:[#allocation8 + $0x207]]
        %v1282 = vstv %s1281
        %v1283 = vmul.f32 %v1282, %v926
        %1285 = vrot.lane.b32.xlu0 %v1283, 121
        %v1286 = vpop.permute.xlu0 %1285
        %v1288 = vadd.f32 %v1280, %v1286
        %s1289 = sld [smem:[#allocation8 + $0x208]]
        %v1290 = vstv %s1289
        %v1291 = vmul.f32 %v1290, %v926
        %1293 = vrot.lane.b32.xlu0 %v1291, 120
        %v1294 = vpop.permute.xlu0 %1293
        %v1296 = vadd.f32 %v1288, %v1294
        %s1297 = sld [smem:[#allocation9 + $0x4]]
        %v1298 = vstv %s1297
        %v1299 = vadd.f32 %v1296, %v1298
        %s1300 = sld [smem:[#allocation8 + $0x280]]
        %v1301 = vstv %s1300
        %v1302 = vmul.f32 %v1301, %v932
        %v1303 = vadd.f32 %v1302, 0.0
        %s1304 = sld [smem:[#allocation8 + $0x281]]
        %v1305 = vstv %s1304
        %v1306 = vmul.f32 %v1305, %v932
        %1308 = vrot.lane.b32.xlu0 %v1306, 127
        %v1309 = vpop.permute.xlu0 %1308
        %v1311 = vadd.f32 %v1303, %v1309
        %s1312 = sld [smem:[#allocation8 + $0x282]]
        %v1313 = vstv %s1312
        %v1314 = vmul.f32 %v1313, %v932
        %1316 = vrot.lane.b32.xlu0 %v1314, 126
        %v1317 = vpop.permute.xlu0 %1316
        %v1319 = vadd.f32 %v1311, %v1317
        %s1320 = sld [smem:[#allocation8 + $0x283]]
        %v1321 = vstv %s1320
        %v1322 = vmul.f32 %v1321, %v932
        %1324 = vrot.lane.b32.xlu0 %v1322, 125
        %v1325 = vpop.permute.xlu0 %1324
        %v1327 = vadd.f32 %v1319, %v1325
        %s1328 = sld [smem:[#allocation8 + $0x284]]
        %v1329 = vstv %s1328
        %v1330 = vmul.f32 %v1329, %v932
        %1332 = vrot.lane.b32.xlu0 %v1330, 124
        %v1333 = vpop.permute.xlu0 %1332
        %v1335 = vadd.f32 %v1327, %v1333
        %s1336 = sld [smem:[#allocation8 + $0x285]]
        %v1337 = vstv %s1336
        %v1338 = vmul.f32 %v1337, %v932
        %1340 = vrot.lane.b32.xlu0 %v1338, 123
        %v1341 = vpop.permute.xlu0 %1340
        %v1343 = vadd.f32 %v1335, %v1341
        %s1344 = sld [smem:[#allocation8 + $0x286]]
        %v1345 = vstv %s1344
        %v1346 = vmul.f32 %v1345, %v932
        %1348 = vrot.lane.b32.xlu0 %v1346, 122
        %v1349 = vpop.permute.xlu0 %1348
        %v1351 = vadd.f32 %v1343, %v1349
        %s1352 = sld [smem:[#allocation8 + $0x287]]
        %v1353 = vstv %s1352
        %v1354 = vmul.f32 %v1353, %v932
        %1356 = vrot.lane.b32.xlu0 %v1354, 121
        %v1357 = vpop.permute.xlu0 %1356
        %v1359 = vadd.f32 %v1351, %v1357
        %s1360 = sld [smem:[#allocation8 + $0x288]]
        %v1361 = vstv %s1360
        %v1362 = vmul.f32 %v1361, %v932
        %1364 = vrot.lane.b32.xlu0 %v1362, 120
        %v1365 = vpop.permute.xlu0 %1364
        %v1367 = vadd.f32 %v1359, %v1365
        %s1368 = sld [smem:[#allocation9 + $0x5]]
        %v1369 = vstv %s1368
        %v1370 = vadd.f32 %v1367, %v1369
        %s1371 = sld [smem:[#allocation8 + $0x300]]
        %v1372 = vstv %s1371
        %v1373 = vmul.f32 %v1372, %v938
        %v1374 = vadd.f32 %v1373, 0.0
        %s1375 = sld [smem:[#allocation8 + $0x301]]
        %v1376 = vstv %s1375
        %v1377 = vmul.f32 %v1376, %v938
        %1379 = vrot.lane.b32.xlu0 %v1377, 127
        %v1380 = vpop.permute.xlu0 %1379
        %v1382 = vadd.f32 %v1374, %v1380
        %s1383 = sld [smem:[#allocation8 + $0x302]]
        %v1384 = vstv %s1383
        %v1385 = vmul.f32 %v1384, %v938
        %1387 = vrot.lane.b32.xlu0 %v1385, 126
        %v1388 = vpop.permute.xlu0 %1387
        %v1390 = vadd.f32 %v1382, %v1388
        %s1391 = sld [smem:[#allocation8 + $0x303]]
        %v1392 = vstv %s1391
        %v1393 = vmul.f32 %v1392, %v938
        %1395 = vrot.lane.b32.xlu0 %v1393, 125
        %v1396 = vpop.permute.xlu0 %1395
        %v1398 = vadd.f32 %v1390, %v1396
        %s1399 = sld [smem:[#allocation8 + $0x304]]
        %v1400 = vstv %s1399
        %v1401 = vmul.f32 %v1400, %v938
        %1403 = vrot.lane.b32.xlu0 %v1401, 124
        %v1404 = vpop.permute.xlu0 %1403
        %v1406 = vadd.f32 %v1398, %v1404
        %s1407 = sld [smem:[#allocation8 + $0x305]]
        %v1408 = vstv %s1407
        %v1409 = vmul.f32 %v1408, %v938
        %1411 = vrot.lane.b32.xlu0 %v1409, 123
        %v1412 = vpop.permute.xlu0 %1411
        %v1414 = vadd.f32 %v1406, %v1412
        %s1415 = sld [smem:[#allocation8 + $0x306]]
        %v1416 = vstv %s1415
        %v1417 = vmul.f32 %v1416, %v938
        %1419 = vrot.lane.b32.xlu0 %v1417, 122
        %v1420 = vpop.permute.xlu0 %1419
        %v1422 = vadd.f32 %v1414, %v1420
        %s1423 = sld [smem:[#allocation8 + $0x307]]
        %v1424 = vstv %s1423
        %v1425 = vmul.f32 %v1424, %v938
        %1427 = vrot.lane.b32.xlu0 %v1425, 121
        %v1428 = vpop.permute.xlu0 %1427
        %v1430 = vadd.f32 %v1422, %v1428
        %s1431 = sld [smem:[#allocation8 + $0x308]]
        %v1432 = vstv %s1431
        %v1433 = vmul.f32 %v1432, %v938
        %1435 = vrot.lane.b32.xlu0 %v1433, 120
        %v1436 = vpop.permute.xlu0 %1435
        %v1438 = vadd.f32 %v1430, %v1436
        %s1439 = sld [smem:[#allocation9 + $0x6]]
        %v1440 = vstv %s1439
        %v1441 = vadd.f32 %v1438, %v1440
        %s1442 = sld [smem:[#allocation8 + $0x380]]
        %v1443 = vstv %s1442
        %v1444 = vmul.f32 %v1443, %v944
        %v1445 = vadd.f32 %v1444, 0.0
        %s1446 = sld [smem:[#allocation8 + $0x381]]
        %v1447 = vstv %s1446
        %v1448 = vmul.f32 %v1447, %v944
        %1450 = vrot.lane.b32.xlu0 %v1448, 127
        %v1451 = vpop.permute.xlu0 %1450
        %v1453 = vadd.f32 %v1445, %v1451
        %s1454 = sld [smem:[#allocation8 + $0x382]]
        %v1455 = vstv %s1454
        %v1456 = vmul.f32 %v1455, %v944
        %1458 = vrot.lane.b32.xlu0 %v1456, 126
        %v1459 = vpop.permute.xlu0 %1458
        %v1461 = vadd.f32 %v1453, %v1459
        %s1462 = sld [smem:[#allocation8 + $0x383]]
        %v1463 = vstv %s1462
        %v1464 = vmul.f32 %v1463, %v944
        %1466 = vrot.lane.b32.xlu0 %v1464, 125
        %v1467 = vpop.permute.xlu0 %1466
        %v1469 = vadd.f32 %v1461, %v1467
        %s1470 = sld [smem:[#allocation8 + $0x384]]
        %v1471 = vstv %s1470
        %v1472 = vmul.f32 %v1471, %v944
        %1474 = vrot.lane.b32.xlu0 %v1472, 124
        %v1475 = vpop.permute.xlu0 %1474
        %v1477 = vadd.f32 %v1469, %v1475
        %s1478 = sld [smem:[#allocation8 + $0x385]]
        %v1479 = vstv %s1478
        %v1480 = vmul.f32 %v1479, %v944
        %1482 = vrot.lane.b32.xlu0 %v1480, 123
        %v1483 = vpop.permute.xlu0 %1482
        %v1485 = vadd.f32 %v1477, %v1483
        %s1486 = sld [smem:[#allocation8 + $0x386]]
        %v1487 = vstv %s1486
        %v1488 = vmul.f32 %v1487, %v944
        %1490 = vrot.lane.b32.xlu0 %v1488, 122
        %v1491 = vpop.permute.xlu0 %1490
        %v1493 = vadd.f32 %v1485, %v1491
        %s1494 = sld [smem:[#allocation8 + $0x387]]
        %v1495 = vstv %s1494
        %v1496 = vmul.f32 %v1495, %v944
        %1498 = vrot.lane.b32.xlu0 %v1496, 121
        %v1499 = vpop.permute.xlu0 %1498
        %v1501 = vadd.f32 %v1493, %v1499
        %s1502 = sld [smem:[#allocation8 + $0x388]]
        %v1503 = vstv %s1502
        %v1504 = vmul.f32 %v1503, %v944
        %1506 = vrot.lane.b32.xlu0 %v1504, 120
        %v1507 = vpop.permute.xlu0 %1506
        %v1509 = vadd.f32 %v1501, %v1507
        %s1510 = sld [smem:[#allocation9 + $0x7]]
        %v1511 = vstv %s1510
        %v1512 = vadd.f32 %v1509, %v1511
        %s1513 = sld [smem:[#allocation11]]
        %v1514 = vstv %s1513
        %v1515 = vmul.f32 %v1514, %v1015
        %v1516 = vadd.f32 %v1515, 0.0
        %s1517 = sld [smem:[#allocation11 + $0x1]]
        %v1518 = vstv %s1517
        %v1519 = vmul.f32 %v1518, %v1086
        %v1520 = vadd.f32 %v1516, %v1519
        %s1521 = sld [smem:[#allocation11 + $0x2]]
        %v1522 = vstv %s1521
        %v1523 = vmul.f32 %v1522, %v1157
        %v1524 = vadd.f32 %v1520, %v1523
        %s1525 = sld [smem:[#allocation11 + $0x3]]
        %v1526 = vstv %s1525
        %v1527 = vmul.f32 %v1526, %v1228
        %v1528 = vadd.f32 %v1524, %v1527
        %s1529 = sld [smem:[#allocation11 + $0x4]]
        %v1530 = vstv %s1529
        %v1531 = vmul.f32 %v1530, %v1299
        %v1532 = vadd.f32 %v1528, %v1531
        %s1533 = sld [smem:[#allocation11 + $0x5]]
        %v1534 = vstv %s1533
        %v1535 = vmul.f32 %v1534, %v1370
        %v1536 = vadd.f32 %v1532, %v1535
        %s1537 = sld [smem:[#allocation11 + $0x6]]
        %v1538 = vstv %s1537
        %v1539 = vmul.f32 %v1538, %v1441
        %v1540 = vadd.f32 %v1536, %v1539
        %s1541 = sld [smem:[#allocation11 + $0x7]]
        %v1542 = vstv %s1541
        %v1543 = vmul.f32 %v1542, %v1512
        %v1544 = vadd.f32 %v1540, %v1543
        %s1545 = sld [smem:[#allocation12]]
        %v1546 = vstv %s1545
        %v1547 = vadd.f32 %v1544, %v1546
        %vm1548 = vcmp.gt.f32.partialorder %v1547, 0.0
        %v1549 = vmul.f32 %v1547, 1.442695
        %v1550 = vpow.pop %v1549
        %v1551 = vsub.f32 %v1550, 1.0
        %v1552 = vsel %vm1548, %v1547, %v1551
        %s1553 = sld [smem:[#allocation11 + $0x80]]
        %v1554 = vstv %s1553
        %v1555 = vmul.f32 %v1554, %v1015
        %v1556 = vadd.f32 %v1555, 0.0
        %s1557 = sld [smem:[#allocation11 + $0x81]]
        %v1558 = vstv %s1557
        %v1559 = vmul.f32 %v1558, %v1086
        %v1560 = vadd.f32 %v1556, %v1559
        %s1561 = sld [smem:[#allocation11 + $0x82]]
        %v1562 = vstv %s1561
        %v1563 = vmul.f32 %v1562, %v1157
        %v1564 = vadd.f32 %v1560, %v1563
        %s1565 = sld [smem:[#allocation11 + $0x83]]
        %v1566 = vstv %s1565
        %v1567 = vmul.f32 %v1566, %v1228
        %v1568 = vadd.f32 %v1564, %v1567
        %s1569 = sld [smem:[#allocation11 + $0x84]]
        %v1570 = vstv %s1569
        %v1571 = vmul.f32 %v1570, %v1299
        %v1572 = vadd.f32 %v1568, %v1571
        %s1573 = sld [smem:[#allocation11 + $0x85]]
        %v1574 = vstv %s1573
        %v1575 = vmul.f32 %v1574, %v1370
        %v1576 = vadd.f32 %v1572, %v1575
        %s1577 = sld [smem:[#allocation11 + $0x86]]
        %v1578 = vstv %s1577
        %v1579 = vmul.f32 %v1578, %v1441
        %v1580 = vadd.f32 %v1576, %v1579
        %s1581 = sld [smem:[#allocation11 + $0x87]]
        %v1582 = vstv %s1581
        %v1583 = vmul.f32 %v1582, %v1512
        %v1584 = vadd.f32 %v1580, %v1583
        %s1585 = sld [smem:[#allocation12 + $0x1]]
        %v1586 = vstv %s1585
        %v1587 = vadd.f32 %v1584, %v1586
        %vm1588 = vcmp.gt.f32.partialorder %v1587, 0.0
        %v1589 = vmul.f32 %v1587, 1.442695
        %v1590 = vpow.pop %v1589
        %v1591 = vsub.f32 %v1590, 1.0
        %v1592 = vsel %vm1588, %v1587, %v1591
        %s1593 = sld [smem:[#allocation11 + $0x100]]
        %v1594 = vstv %s1593
        %v1595 = vmul.f32 %v1594, %v1015
        %v1596 = vadd.f32 %v1595, 0.0
        %s1597 = sld [smem:[#allocation11 + $0x101]]
        %v1598 = vstv %s1597
        %v1599 = vmul.f32 %v1598, %v1086
        %v1600 = vadd.f32 %v1596, %v1599
        %s1601 = sld [smem:[#allocation11 + $0x102]]
        %v1602 = vstv %s1601
        %v1603 = vmul.f32 %v1602, %v1157
        %v1604 = vadd.f32 %v1600, %v1603
        %s1605 = sld [smem:[#allocation11 + $0x103]]
        %v1606 = vstv %s1605
        %v1607 = vmul.f32 %v1606, %v1228
        %v1608 = vadd.f32 %v1604, %v1607
        %s1609 = sld [smem:[#allocation11 + $0x104]]
        %v1610 = vstv %s1609
        %v1611 = vmul.f32 %v1610, %v1299
        %v1612 = vadd.f32 %v1608, %v1611
        %s1613 = sld [smem:[#allocation11 + $0x105]]
        %v1614 = vstv %s1613
        %v1615 = vmul.f32 %v1614, %v1370
        %v1616 = vadd.f32 %v1612, %v1615
        %s1617 = sld [smem:[#allocation11 + $0x106]]
        %v1618 = vstv %s1617
        %v1619 = vmul.f32 %v1618, %v1441
        %v1620 = vadd.f32 %v1616, %v1619
        %s1621 = sld [smem:[#allocation11 + $0x107]]
        %v1622 = vstv %s1621
        %v1623 = vmul.f32 %v1622, %v1512
        %v1624 = vadd.f32 %v1620, %v1623
        %s1625 = sld [smem:[#allocation12 + $0x2]]
        %v1626 = vstv %s1625
        %v1627 = vadd.f32 %v1624, %v1626
        %vm1628 = vcmp.gt.f32.partialorder %v1627, 0.0
        %v1629 = vmul.f32 %v1627, 1.442695
        %v1630 = vpow.pop %v1629
        %v1631 = vsub.f32 %v1630, 1.0
        %v1632 = vsel %vm1628, %v1627, %v1631
        %s1633 = sld [smem:[#allocation11 + $0x180]]
        %v1634 = vstv %s1633
        %v1635 = vmul.f32 %v1634, %v1015
        %v1636 = vadd.f32 %v1635, 0.0
        %s1637 = sld [smem:[#allocation11 + $0x181]]
        %v1638 = vstv %s1637
        %v1639 = vmul.f32 %v1638, %v1086
        %v1640 = vadd.f32 %v1636, %v1639
        %s1641 = sld [smem:[#allocation11 + $0x182]]
        %v1642 = vstv %s1641
        %v1643 = vmul.f32 %v1642, %v1157
        %v1644 = vadd.f32 %v1640, %v1643
        %s1645 = sld [smem:[#allocation11 + $0x183]]
        %v1646 = vstv %s1645
        %v1647 = vmul.f32 %v1646, %v1228
        %v1648 = vadd.f32 %v1644, %v1647
        %s1649 = sld [smem:[#allocation11 + $0x184]]
        %v1650 = vstv %s1649
        %v1651 = vmul.f32 %v1650, %v1299
        %v1652 = vadd.f32 %v1648, %v1651
        %s1653 = sld [smem:[#allocation11 + $0x185]]
        %v1654 = vstv %s1653
        %v1655 = vmul.f32 %v1654, %v1370
        %v1656 = vadd.f32 %v1652, %v1655
        %s1657 = sld [smem:[#allocation11 + $0x186]]
        %v1658 = vstv %s1657
        %v1659 = vmul.f32 %v1658, %v1441
        %v1660 = vadd.f32 %v1656, %v1659
        %s1661 = sld [smem:[#allocation11 + $0x187]]
        %v1662 = vstv %s1661
        %v1663 = vmul.f32 %v1662, %v1512
        %v1664 = vadd.f32 %v1660, %v1663
        %s1665 = sld [smem:[#allocation12 + $0x3]]
        %v1666 = vstv %s1665
        %v1667 = vadd.f32 %v1664, %v1666
        %vm1668 = vcmp.gt.f32.partialorder %v1667, 0.0
        %v1669 = vmul.f32 %v1667, 1.442695
        %v1670 = vpow.pop %v1669
        %v1671 = vsub.f32 %v1670, 1.0
        %v1672 = vsel %vm1668, %v1667, %v1671
        %s1673 = sld [smem:[#allocation11 + $0x200]]
        %v1674 = vstv %s1673
        %v1675 = vmul.f32 %v1674, %v1015
        %v1676 = vadd.f32 %v1675, 0.0
        %s1677 = sld [smem:[#allocation11 + $0x201]]
        %v1678 = vstv %s1677
        %v1679 = vmul.f32 %v1678, %v1086
        %v1680 = vadd.f32 %v1676, %v1679
        %s1681 = sld [smem:[#allocation11 + $0x202]]
        %v1682 = vstv %s1681
        %v1683 = vmul.f32 %v1682, %v1157
        %v1684 = vadd.f32 %v1680, %v1683
        %s1685 = sld [smem:[#allocation11 + $0x203]]
        %v1686 = vstv %s1685
        %v1687 = vmul.f32 %v1686, %v1228
        %v1688 = vadd.f32 %v1684, %v1687
        %s1689 = sld [smem:[#allocation11 + $0x204]]
        %v1690 = vstv %s1689
        %v1691 = vmul.f32 %v1690, %v1299
        %v1692 = vadd.f32 %v1688, %v1691
        %s1693 = sld [smem:[#allocation11 + $0x205]]
        %v1694 = vstv %s1693
        %v1695 = vmul.f32 %v1694, %v1370
        %v1696 = vadd.f32 %v1692, %v1695
        %s1697 = sld [smem:[#allocation11 + $0x206]]
        %v1698 = vstv %s1697
        %v1699 = vmul.f32 %v1698, %v1441
        %v1700 = vadd.f32 %v1696, %v1699
        %s1701 = sld [smem:[#allocation11 + $0x207]]
        %v1702 = vstv %s1701
        %v1703 = vmul.f32 %v1702, %v1512
        %v1704 = vadd.f32 %v1700, %v1703
        %s1705 = sld [smem:[#allocation12 + $0x4]]
        %v1706 = vstv %s1705
        %v1707 = vadd.f32 %v1704, %v1706
        %vm1708 = vcmp.gt.f32.partialorder %v1707, 0.0
        %v1709 = vmul.f32 %v1707, 1.442695
        %v1710 = vpow.pop %v1709
        %v1711 = vsub.f32 %v1710, 1.0
        %v1712 = vsel %vm1708, %v1707, %v1711
        %s1713 = sld [smem:[#allocation11 + $0x280]]
        %v1714 = vstv %s1713
        %v1715 = vmul.f32 %v1714, %v1015
        %v1716 = vadd.f32 %v1715, 0.0
        %s1717 = sld [smem:[#allocation11 + $0x281]]
        %v1718 = vstv %s1717
        %v1719 = vmul.f32 %v1718, %v1086
        %v1720 = vadd.f32 %v1716, %v1719
        %s1721 = sld [smem:[#allocation11 + $0x282]]
        %v1722 = vstv %s1721
        %v1723 = vmul.f32 %v1722, %v1157
        %v1724 = vadd.f32 %v1720, %v1723
        %s1725 = sld [smem:[#allocation11 + $0x283]]
        %v1726 = vstv %s1725
        %v1727 = vmul.f32 %v1726, %v1228
        %v1728 = vadd.f32 %v1724, %v1727
        %s1729 = sld [smem:[#allocation11 + $0x284]]
        %v1730 = vstv %s1729
        %v1731 = vmul.f32 %v1730, %v1299
        %v1732 = vadd.f32 %v1728, %v1731
        %s1733 = sld [smem:[#allocation11 + $0x285]]
        %v1734 = vstv %s1733
        %v1735 = vmul.f32 %v1734, %v1370
        %v1736 = vadd.f32 %v1732, %v1735
        %s1737 = sld [smem:[#allocation11 + $0x286]]
        %v1738 = vstv %s1737
        %v1739 = vmul.f32 %v1738, %v1441
        %v1740 = vadd.f32 %v1736, %v1739
        %s1741 = sld [smem:[#allocation11 + $0x287]]
        %v1742 = vstv %s1741
        %v1743 = vmul.f32 %v1742, %v1512
        %v1744 = vadd.f32 %v1740, %v1743
        %s1745 = sld [smem:[#allocation12 + $0x5]]
        %v1746 = vstv %s1745
        %v1747 = vadd.f32 %v1744, %v1746
        %vm1748 = vcmp.gt.f32.partialorder %v1747, 0.0
        %v1749 = vmul.f32 %v1747, 1.442695
        %v1750 = vpow.pop %v1749
        %v1751 = vsub.f32 %v1750, 1.0
        %v1752 = vsel %vm1748, %v1747, %v1751
        %s1753 = sld [smem:[#allocation11 + $0x300]]
        %v1754 = vstv %s1753
        %v1755 = vmul.f32 %v1754, %v1015
        %v1756 = vadd.f32 %v1755, 0.0
        %s1757 = sld [smem:[#allocation11 + $0x301]]
        %v1758 = vstv %s1757
        %v1759 = vmul.f32 %v1758, %v1086
        %v1760 = vadd.f32 %v1756, %v1759
        %s1761 = sld [smem:[#allocation11 + $0x302]]
        %v1762 = vstv %s1761
        %v1763 = vmul.f32 %v1762, %v1157
        %v1764 = vadd.f32 %v1760, %v1763
        %s1765 = sld [smem:[#allocation11 + $0x303]]
        %v1766 = vstv %s1765
        %v1767 = vmul.f32 %v1766, %v1228
        %v1768 = vadd.f32 %v1764, %v1767
        %s1769 = sld [smem:[#allocation11 + $0x304]]
        %v1770 = vstv %s1769
        %v1771 = vmul.f32 %v1770, %v1299
        %v1772 = vadd.f32 %v1768, %v1771
        %s1773 = sld [smem:[#allocation11 + $0x305]]
        %v1774 = vstv %s1773
        %v1775 = vmul.f32 %v1774, %v1370
        %v1776 = vadd.f32 %v1772, %v1775
        %s1777 = sld [smem:[#allocation11 + $0x306]]
        %v1778 = vstv %s1777
        %v1779 = vmul.f32 %v1778, %v1441
        %v1780 = vadd.f32 %v1776, %v1779
        %s1781 = sld [smem:[#allocation11 + $0x307]]
        %v1782 = vstv %s1781
        %v1783 = vmul.f32 %v1782, %v1512
        %v1784 = vadd.f32 %v1780, %v1783
        %s1785 = sld [smem:[#allocation12 + $0x6]]
        %v1786 = vstv %s1785
        %v1787 = vadd.f32 %v1784, %v1786
        %vm1788 = vcmp.gt.f32.partialorder %v1787, 0.0
        %v1789 = vmul.f32 %v1787, 1.442695
        %v1790 = vpow.pop %v1789
        %v1791 = vsub.f32 %v1790, 1.0
        %v1792 = vsel %vm1788, %v1787, %v1791
        %s1793 = sld [smem:[#allocation11 + $0x380]]
        %v1794 = vstv %s1793
        %v1795 = vmul.f32 %v1794, %v1015
        %v1796 = vadd.f32 %v1795, 0.0
        %s1797 = sld [smem:[#allocation11 + $0x381]]
        %v1798 = vstv %s1797
        %v1799 = vmul.f32 %v1798, %v1086
        %v1800 = vadd.f32 %v1796, %v1799
        %s1801 = sld [smem:[#allocation11 + $0x382]]
        %v1802 = vstv %s1801
        %v1803 = vmul.f32 %v1802, %v1157
        %v1804 = vadd.f32 %v1800, %v1803
        %s1805 = sld [smem:[#allocation11 + $0x383]]
        %v1806 = vstv %s1805
        %v1807 = vmul.f32 %v1806, %v1228
        %v1808 = vadd.f32 %v1804, %v1807
        %s1809 = sld [smem:[#allocation11 + $0x384]]
        %v1810 = vstv %s1809
        %v1811 = vmul.f32 %v1810, %v1299
        %v1812 = vadd.f32 %v1808, %v1811
        %s1813 = sld [smem:[#allocation11 + $0x385]]
        %v1814 = vstv %s1813
        %v1815 = vmul.f32 %v1814, %v1370
        %v1816 = vadd.f32 %v1812, %v1815
        %s1817 = sld [smem:[#allocation11 + $0x386]]
        %v1818 = vstv %s1817
        %v1819 = vmul.f32 %v1818, %v1441
        %v1820 = vadd.f32 %v1816, %v1819
        %s1821 = sld [smem:[#allocation11 + $0x387]]
        %v1822 = vstv %s1821
        %v1823 = vmul.f32 %v1822, %v1512
        %v1824 = vadd.f32 %v1820, %v1823
        %s1825 = sld [smem:[#allocation12 + $0x7]]
        %v1826 = vstv %s1825
        %v1827 = vadd.f32 %v1824, %v1826
        %vm1828 = vcmp.gt.f32.partialorder %v1827, 0.0
        %v1829 = vmul.f32 %v1827, 1.442695
        %v1830 = vpow.pop %v1829
        %v1831 = vsub.f32 %v1830, 1.0
        %v1832 = vsel %vm1828, %v1827, %v1831
        %s1833 = sld [smem:[#allocation11 + $0x400]]
        %v1834 = vstv %s1833
        %v1835 = vmul.f32 %v1834, %v1015
        %v1836 = vadd.f32 %v1835, 0.0
        %s1837 = sld [smem:[#allocation11 + $0x401]]
        %v1838 = vstv %s1837
        %v1839 = vmul.f32 %v1838, %v1086
        %v1840 = vadd.f32 %v1836, %v1839
        %s1841 = sld [smem:[#allocation11 + $0x402]]
        %v1842 = vstv %s1841
        %v1843 = vmul.f32 %v1842, %v1157
        %v1844 = vadd.f32 %v1840, %v1843
        %s1845 = sld [smem:[#allocation11 + $0x403]]
        %v1846 = vstv %s1845
        %v1847 = vmul.f32 %v1846, %v1228
        %v1848 = vadd.f32 %v1844, %v1847
        %s1849 = sld [smem:[#allocation11 + $0x404]]
        %v1850 = vstv %s1849
        %v1851 = vmul.f32 %v1850, %v1299
        %v1852 = vadd.f32 %v1848, %v1851
        %s1853 = sld [smem:[#allocation11 + $0x405]]
        %v1854 = vstv %s1853
        %v1855 = vmul.f32 %v1854, %v1370
        %v1856 = vadd.f32 %v1852, %v1855
        %s1857 = sld [smem:[#allocation11 + $0x406]]
        %v1858 = vstv %s1857
        %v1859 = vmul.f32 %v1858, %v1441
        %v1860 = vadd.f32 %v1856, %v1859
        %s1861 = sld [smem:[#allocation11 + $0x407]]
        %v1862 = vstv %s1861
        %v1863 = vmul.f32 %v1862, %v1512
        %v1864 = vadd.f32 %v1860, %v1863
        %s1865 = sld [smem:[#allocation12 + $0x8]]
        %v1866 = vstv %s1865
        %v1867 = vadd.f32 %v1864, %v1866
        %vm1868 = vcmp.gt.f32.partialorder %v1867, 0.0
        %v1869 = vmul.f32 %v1867, 1.442695
        %v1870 = vpow.pop %v1869
        %v1871 = vsub.f32 %v1870, 1.0
        %v1872 = vsel %vm1868, %v1867, %v1871
        %s1873 = sld [smem:[#allocation11 + $0x480]]
        %v1874 = vstv %s1873
        %v1875 = vmul.f32 %v1874, %v1015
        %v1876 = vadd.f32 %v1875, 0.0
        %s1877 = sld [smem:[#allocation11 + $0x481]]
        %v1878 = vstv %s1877
        %v1879 = vmul.f32 %v1878, %v1086
        %v1880 = vadd.f32 %v1876, %v1879
        %s1881 = sld [smem:[#allocation11 + $0x482]]
        %v1882 = vstv %s1881
        %v1883 = vmul.f32 %v1882, %v1157
        %v1884 = vadd.f32 %v1880, %v1883
        %s1885 = sld [smem:[#allocation11 + $0x483]]
        %v1886 = vstv %s1885
        %v1887 = vmul.f32 %v1886, %v1228
        %v1888 = vadd.f32 %v1884, %v1887
        %s1889 = sld [smem:[#allocation11 + $0x484]]
        %v1890 = vstv %s1889
        %v1891 = vmul.f32 %v1890, %v1299
        %v1892 = vadd.f32 %v1888, %v1891
        %s1893 = sld [smem:[#allocation11 + $0x485]]
        %v1894 = vstv %s1893
        %v1895 = vmul.f32 %v1894, %v1370
        %v1896 = vadd.f32 %v1892, %v1895
        %s1897 = sld [smem:[#allocation11 + $0x486]]
        %v1898 = vstv %s1897
        %v1899 = vmul.f32 %v1898, %v1441
        %v1900 = vadd.f32 %v1896, %v1899
        %s1901 = sld [smem:[#allocation11 + $0x487]]
        %v1902 = vstv %s1901
        %v1903 = vmul.f32 %v1902, %v1512
        %v1904 = vadd.f32 %v1900, %v1903
        %s1905 = sld [smem:[#allocation12 + $0x9]]
        %v1906 = vstv %s1905
        %v1907 = vadd.f32 %v1904, %v1906
        %vm1908 = vcmp.gt.f32.partialorder %v1907, 0.0
        %v1909 = vmul.f32 %v1907, 1.442695
        %v1910 = vpow.pop %v1909
        %v1911 = vsub.f32 %v1910, 1.0
        %v1912 = vsel %vm1908, %v1907, %v1911
        %s1913 = sld [smem:[#allocation11 + $0x500]]
        %v1914 = vstv %s1913
        %v1915 = vmul.f32 %v1914, %v1015
        %v1916 = vadd.f32 %v1915, 0.0
        %s1917 = sld [smem:[#allocation11 + $0x501]]
        %v1918 = vstv %s1917
        %v1919 = vmul.f32 %v1918, %v1086
        %v1920 = vadd.f32 %v1916, %v1919
        %s1921 = sld [smem:[#allocation11 + $0x502]]
        %v1922 = vstv %s1921
        %v1923 = vmul.f32 %v1922, %v1157
        %v1924 = vadd.f32 %v1920, %v1923
        %s1925 = sld [smem:[#allocation11 + $0x503]]
        %v1926 = vstv %s1925
        %v1927 = vmul.f32 %v1926, %v1228
        %v1928 = vadd.f32 %v1924, %v1927
        %s1929 = sld [smem:[#allocation11 + $0x504]]
        %v1930 = vstv %s1929
        %v1931 = vmul.f32 %v1930, %v1299
        %v1932 = vadd.f32 %v1928, %v1931
        %s1933 = sld [smem:[#allocation11 + $0x505]]
        %v1934 = vstv %s1933
        %v1935 = vmul.f32 %v1934, %v1370
        %v1936 = vadd.f32 %v1932, %v1935
        %s1937 = sld [smem:[#allocation11 + $0x506]]
        %v1938 = vstv %s1937
        %v1939 = vmul.f32 %v1938, %v1441
        %v1940 = vadd.f32 %v1936, %v1939
        %s1941 = sld [smem:[#allocation11 + $0x507]]
        %v1942 = vstv %s1941
        %v1943 = vmul.f32 %v1942, %v1512
        %v1944 = vadd.f32 %v1940, %v1943
        %s1945 = sld [smem:[#allocation12 + $0xa]]
        %v1946 = vstv %s1945
        %v1947 = vadd.f32 %v1944, %v1946
        %vm1948 = vcmp.gt.f32.partialorder %v1947, 0.0
        %v1949 = vmul.f32 %v1947, 1.442695
        %v1950 = vpow.pop %v1949
        %v1951 = vsub.f32 %v1950, 1.0
        %v1952 = vsel %vm1948, %v1947, %v1951
        %s1953 = sld [smem:[#allocation11 + $0x580]]
        %v1954 = vstv %s1953
        %v1955 = vmul.f32 %v1954, %v1015
        %v1956 = vadd.f32 %v1955, 0.0
        %s1957 = sld [smem:[#allocation11 + $0x581]]
        %v1958 = vstv %s1957
        %v1959 = vmul.f32 %v1958, %v1086
        %v1960 = vadd.f32 %v1956, %v1959
        %s1961 = sld [smem:[#allocation11 + $0x582]]
        %v1962 = vstv %s1961
        %v1963 = vmul.f32 %v1962, %v1157
        %v1964 = vadd.f32 %v1960, %v1963
        %s1965 = sld [smem:[#allocation11 + $0x583]]
        %v1966 = vstv %s1965
        %v1967 = vmul.f32 %v1966, %v1228
        %v1968 = vadd.f32 %v1964, %v1967
        %s1969 = sld [smem:[#allocation11 + $0x584]]
        %v1970 = vstv %s1969
        %v1971 = vmul.f32 %v1970, %v1299
        %v1972 = vadd.f32 %v1968, %v1971
        %s1973 = sld [smem:[#allocation11 + $0x585]]
        %v1974 = vstv %s1973
        %v1975 = vmul.f32 %v1974, %v1370
        %v1976 = vadd.f32 %v1972, %v1975
        %s1977 = sld [smem:[#allocation11 + $0x586]]
        %v1978 = vstv %s1977
        %v1979 = vmul.f32 %v1978, %v1441
        %v1980 = vadd.f32 %v1976, %v1979
        %s1981 = sld [smem:[#allocation11 + $0x587]]
        %v1982 = vstv %s1981
        %v1983 = vmul.f32 %v1982, %v1512
        %v1984 = vadd.f32 %v1980, %v1983
        %s1985 = sld [smem:[#allocation12 + $0xb]]
        %v1986 = vstv %s1985
        %v1987 = vadd.f32 %v1984, %v1986
        %vm1988 = vcmp.gt.f32.partialorder %v1987, 0.0
        %v1989 = vmul.f32 %v1987, 1.442695
        %v1990 = vpow.pop %v1989
        %v1991 = vsub.f32 %v1990, 1.0
        %v1992 = vsel %vm1988, %v1987, %v1991
        %s1993 = sld [smem:[#allocation11 + $0x600]]
        %v1994 = vstv %s1993
        %v1995 = vmul.f32 %v1994, %v1015
        %v1996 = vadd.f32 %v1995, 0.0
        %s1997 = sld [smem:[#allocation11 + $0x601]]
        %v1998 = vstv %s1997
        %v1999 = vmul.f32 %v1998, %v1086
        %v2000 = vadd.f32 %v1996, %v1999
        %s2001 = sld [smem:[#allocation11 + $0x602]]
        %v2002 = vstv %s2001
        %v2003 = vmul.f32 %v2002, %v1157
        %v2004 = vadd.f32 %v2000, %v2003
        %s2005 = sld [smem:[#allocation11 + $0x603]]
        %v2006 = vstv %s2005
        %v2007 = vmul.f32 %v2006, %v1228
        %v2008 = vadd.f32 %v2004, %v2007
        %s2009 = sld [smem:[#allocation11 + $0x604]]
        %v2010 = vstv %s2009
        %v2011 = vmul.f32 %v2010, %v1299
        %v2012 = vadd.f32 %v2008, %v2011
        %s2013 = sld [smem:[#allocation11 + $0x605]]
        %v2014 = vstv %s2013
        %v2015 = vmul.f32 %v2014, %v1370
        %v2016 = vadd.f32 %v2012, %v2015
        %s2017 = sld [smem:[#allocation11 + $0x606]]
        %v2018 = vstv %s2017
        %v2019 = vmul.f32 %v2018, %v1441
        %v2020 = vadd.f32 %v2016, %v2019
        %s2021 = sld [smem:[#allocation11 + $0x607]]
        %v2022 = vstv %s2021
        %v2023 = vmul.f32 %v2022, %v1512
        %v2024 = vadd.f32 %v2020, %v2023
        %s2025 = sld [smem:[#allocation12 + $0xc]]
        %v2026 = vstv %s2025
        %v2027 = vadd.f32 %v2024, %v2026
        %vm2028 = vcmp.gt.f32.partialorder %v2027, 0.0
        %v2029 = vmul.f32 %v2027, 1.442695
        %v2030 = vpow.pop %v2029
        %v2031 = vsub.f32 %v2030, 1.0
        %v2032 = vsel %vm2028, %v2027, %v2031
        %s2033 = sld [smem:[#allocation11 + $0x680]]
        %v2034 = vstv %s2033
        %v2035 = vmul.f32 %v2034, %v1015
        %v2036 = vadd.f32 %v2035, 0.0
        %s2037 = sld [smem:[#allocation11 + $0x681]]
        %v2038 = vstv %s2037
        %v2039 = vmul.f32 %v2038, %v1086
        %v2040 = vadd.f32 %v2036, %v2039
        %s2041 = sld [smem:[#allocation11 + $0x682]]
        %v2042 = vstv %s2041
        %v2043 = vmul.f32 %v2042, %v1157
        %v2044 = vadd.f32 %v2040, %v2043
        %s2045 = sld [smem:[#allocation11 + $0x683]]
        %v2046 = vstv %s2045
        %v2047 = vmul.f32 %v2046, %v1228
        %v2048 = vadd.f32 %v2044, %v2047
        %s2049 = sld [smem:[#allocation11 + $0x684]]
        %v2050 = vstv %s2049
        %v2051 = vmul.f32 %v2050, %v1299
        %v2052 = vadd.f32 %v2048, %v2051
        %s2053 = sld [smem:[#allocation11 + $0x685]]
        %v2054 = vstv %s2053
        %v2055 = vmul.f32 %v2054, %v1370
        %v2056 = vadd.f32 %v2052, %v2055
        %s2057 = sld [smem:[#allocation11 + $0x686]]
        %v2058 = vstv %s2057
        %v2059 = vmul.f32 %v2058, %v1441
        %v2060 = vadd.f32 %v2056, %v2059
        %s2061 = sld [smem:[#allocation11 + $0x687]]
        %v2062 = vstv %s2061
        %v2063 = vmul.f32 %v2062, %v1512
        %v2064 = vadd.f32 %v2060, %v2063
        %s2065 = sld [smem:[#allocation12 + $0xd]]
        %v2066 = vstv %s2065
        %v2067 = vadd.f32 %v2064, %v2066
        %vm2068 = vcmp.gt.f32.partialorder %v2067, 0.0
        %v2069 = vmul.f32 %v2067, 1.442695
        %v2070 = vpow.pop %v2069
        %v2071 = vsub.f32 %v2070, 1.0
        %v2072 = vsel %vm2068, %v2067, %v2071
        %s2073 = sld [smem:[#allocation11 + $0x700]]
        %v2074 = vstv %s2073
        %v2075 = vmul.f32 %v2074, %v1015
        %v2076 = vadd.f32 %v2075, 0.0
        %s2077 = sld [smem:[#allocation11 + $0x701]]
        %v2078 = vstv %s2077
        %v2079 = vmul.f32 %v2078, %v1086
        %v2080 = vadd.f32 %v2076, %v2079
        %s2081 = sld [smem:[#allocation11 + $0x702]]
        %v2082 = vstv %s2081
        %v2083 = vmul.f32 %v2082, %v1157
        %v2084 = vadd.f32 %v2080, %v2083
        %s2085 = sld [smem:[#allocation11 + $0x703]]
        %v2086 = vstv %s2085
        %v2087 = vmul.f32 %v2086, %v1228
        %v2088 = vadd.f32 %v2084, %v2087
        %s2089 = sld [smem:[#allocation11 + $0x704]]
        %v2090 = vstv %s2089
        %v2091 = vmul.f32 %v2090, %v1299
        %v2092 = vadd.f32 %v2088, %v2091
        %s2093 = sld [smem:[#allocation11 + $0x705]]
        %v2094 = vstv %s2093
        %v2095 = vmul.f32 %v2094, %v1370
        %v2096 = vadd.f32 %v2092, %v2095
        %s2097 = sld [smem:[#allocation11 + $0x706]]
        %v2098 = vstv %s2097
        %v2099 = vmul.f32 %v2098, %v1441
        %v2100 = vadd.f32 %v2096, %v2099
        %s2101 = sld [smem:[#allocation11 + $0x707]]
        %v2102 = vstv %s2101
        %v2103 = vmul.f32 %v2102, %v1512
        %v2104 = vadd.f32 %v2100, %v2103
        %s2105 = sld [smem:[#allocation12 + $0xe]]
        %v2106 = vstv %s2105
        %v2107 = vadd.f32 %v2104, %v2106
        %vm2108 = vcmp.gt.f32.partialorder %v2107, 0.0
        %v2109 = vmul.f32 %v2107, 1.442695
        %v2110 = vpow.pop %v2109
        %v2111 = vsub.f32 %v2110, 1.0
        %v2112 = vsel %vm2108, %v2107, %v2111
        %s2113 = sld [smem:[#allocation11 + $0x780]]
        %v2114 = vstv %s2113
        %v2115 = vmul.f32 %v2114, %v1015
        %v2116 = vadd.f32 %v2115, 0.0
        %s2117 = sld [smem:[#allocation11 + $0x781]]
        %v2118 = vstv %s2117
        %v2119 = vmul.f32 %v2118, %v1086
        %v2120 = vadd.f32 %v2116, %v2119
        %s2121 = sld [smem:[#allocation11 + $0x782]]
        %v2122 = vstv %s2121
        %v2123 = vmul.f32 %v2122, %v1157
        %v2124 = vadd.f32 %v2120, %v2123
        %s2125 = sld [smem:[#allocation11 + $0x783]]
        %v2126 = vstv %s2125
        %v2127 = vmul.f32 %v2126, %v1228
        %v2128 = vadd.f32 %v2124, %v2127
        %s2129 = sld [smem:[#allocation11 + $0x784]]
        %v2130 = vstv %s2129
        %v2131 = vmul.f32 %v2130, %v1299
        %v2132 = vadd.f32 %v2128, %v2131
        %s2133 = sld [smem:[#allocation11 + $0x785]]
        %v2134 = vstv %s2133
        %v2135 = vmul.f32 %v2134, %v1370
        %v2136 = vadd.f32 %v2132, %v2135
        %s2137 = sld [smem:[#allocation11 + $0x786]]
        %v2138 = vstv %s2137
        %v2139 = vmul.f32 %v2138, %v1441
        %v2140 = vadd.f32 %v2136, %v2139
        %s2141 = sld [smem:[#allocation11 + $0x787]]
        %v2142 = vstv %s2141
        %v2143 = vmul.f32 %v2142, %v1512
        %v2144 = vadd.f32 %v2140, %v2143
        %s2145 = sld [smem:[#allocation12 + $0xf]]
        %v2146 = vstv %s2145
        %v2147 = vadd.f32 %v2144, %v2146
        %vm2148 = vcmp.gt.f32.partialorder %v2147, 0.0
        %v2149 = vmul.f32 %v2147, 1.442695
        %v2150 = vpow.pop %v2149
        %v2151 = vsub.f32 %v2150, 1.0
        %v2152 = vsel %vm2148, %v2147, %v2151
        %vm2153 = vcmask 465920
        %v2154 = vsel %vm2153, %v1552, -inf
        %2155 = vmax.xlane.f32.xlu0 %v2154
        %v2156 = vpop.xlane.xlu0 %2155
        %v2157 = vsel %vm2153, %v1592, -inf
        %2158 = vmax.xlane.f32.xlu0 %v2157
        %v2159 = vpop.xlane.xlu0 %2158
        %v2160 = vsel %vm2153, %v1632, -inf
        %2161 = vmax.xlane.f32.xlu0 %v2160
        %v2162 = vpop.xlane.xlu0 %2161
        %v2163 = vsel %vm2153, %v1672, -inf
        %2164 = vmax.xlane.f32.xlu0 %v2163
        %v2165 = vpop.xlane.xlu0 %2164
        %v2166 = vsel %vm2153, %v1712, -inf
        %2167 = vmax.xlane.f32.xlu0 %v2166
        %v2168 = vpop.xlane.xlu0 %2167
        %v2169 = vsel %vm2153, %v1752, -inf
        %2170 = vmax.xlane.f32.xlu0 %v2169
        %v2171 = vpop.xlane.xlu0 %2170
        %v2172 = vsel %vm2153, %v1792, -inf
        %2173 = vmax.xlane.f32.xlu0 %v2172
        %v2174 = vpop.xlane.xlu0 %2173
        %v2175 = vsel %vm2153, %v1832, -inf
        %2176 = vmax.xlane.f32.xlu0 %v2175
        %v2177 = vpop.xlane.xlu0 %2176
        %v2178 = vsel %vm2153, %v1872, -inf
        %2179 = vmax.xlane.f32.xlu0 %v2178
        %v2180 = vpop.xlane.xlu0 %2179
        %v2181 = vsel %vm2153, %v1912, -inf
        %2182 = vmax.xlane.f32.xlu0 %v2181
        %v2183 = vpop.xlane.xlu0 %2182
        %v2184 = vsel %vm2153, %v1952, -inf
        %2185 = vmax.xlane.f32.xlu0 %v2184
        %v2186 = vpop.xlane.xlu0 %2185
        %v2187 = vsel %vm2153, %v1992, -inf
        %2188 = vmax.xlane.f32.xlu0 %v2187
        %v2189 = vpop.xlane.xlu0 %2188
        %v2190 = vsel %vm2153, %v2032, -inf
        %2191 = vmax.xlane.f32.xlu0 %v2190
        %v2192 = vpop.xlane.xlu0 %2191
        %v2193 = vsel %vm2153, %v2072, -inf
        %2194 = vmax.xlane.f32.xlu0 %v2193
        %v2195 = vpop.xlane.xlu0 %2194
        %v2196 = vsel %vm2153, %v2112, -inf
        %2197 = vmax.xlane.f32.xlu0 %v2196
        %v2198 = vpop.xlane.xlu0 %2197
        %v2199 = vsel %vm2153, %v2152, -inf
        %2200 = vmax.xlane.f32.xlu0 %v2199
        %v2201 = vpop.xlane.xlu0 %2200
        %vm2202 = vcmask 7168
        %v2203 = vsel %vm2202, %v2156, %v2159
        %vm2204 = vcmask 15360
        %v2205 = vsel %vm2204, %v2203, %v2162
        %vm2206 = vcmask 23552
        %v2207 = vsel %vm2206, %v2205, %v2165
        %v2208 = vsel %vm899, %v2207, %v2168
        %vm2209 = vcmask 39936
        %v2210 = vsel %vm2209, %v2208, %v2171
        %vm2211 = vcmask 48128
        %v2212 = vsel %vm2211, %v2210, %v2174
        %vm2213 = vcmask 56320
        %v2214 = vsel %vm2213, %v2212, %v2177
        %vm2215 = vcmask 64512
        %v2216 = vsel %vm2215, %v2214, %v2180
        %vm2217 = vcmask 72704
        %v2218 = vsel %vm2217, %v2216, %v2183
        %vm2219 = vcmask 80896
        %v2220 = vsel %vm2219, %v2218, %v2186
        %vm2221 = vcmask 89088
        %v2222 = vsel %vm2221, %v2220, %v2189
        %vm2223 = vcmask 97280
        %v2224 = vsel %vm2223, %v2222, %v2192
        %vm2225 = vcmask 105472
        %v2226 = vsel %vm2225, %v2224, %v2195
        %vm2227 = vcmask 113664
        %v2228 = vsel %vm2227, %v2226, %v2198
        %vm2229 = vcmask 121856
        %v2230 = vsel %vm2229, %v2228, %v2201
        %vm2231 = vcmask 130048
        %2232 = vst.msk [vmem:[%s345] sm:$0xff] %vm2231, %v2230
        %s2233 = sand.u32 %s186, 1
        %s2234 = scalar_lea.sflag [#allocation3], %s2233
        %s2235 = sand.u32 %s186, 1
        %s2236 = smul.addr %s2235, 8
        %s2237 = scalar_lea.vmem [#allocation14], %s2236
        // Predicated region
        $region73: #{tpu_custom_call.1} parent=47 // pred_check
          %p2238 = pneg %p196
        $region74: #{tpu_custom_call.1} parent=47 // pred_check_branch
          %2240 = sbr.rel (%p2238) target = $region76
        $region75: #{tpu_custom_call.1} parent=47 // pred_region
          %s2242 = ssub.s32 128, 128
          %2243 = vsyncadd %s2234, %s2242
          %s2244 = smul.addr %s26, 128
          %s2245 = scalar_lea.hbm %s7, %s2244
          %s2247 = sshll.u32 %s2237, 4
          %s2248 = int_to_ptr.vmem [resolvable:$true] %s2247
          %2250 = dma.vmem_to_hbm [thread:$0]  %s2248, 128, %s2245, %s2234
        $region76: #{tpu_custom_call.1} parent=47 // pred_fallthru
          _
      $region48: #{tpu_custom_call.1} parent=5 // pred_fallthru
        _
      %p2251 = scmp.le.s32.totalorder 2, %s21
      // Predicated region
      $region77: #{tpu_custom_call.1} parent=5 // pred_check
        %p2252 = pneg %p2251
      $region78: #{tpu_custom_call.1} parent=5 // pred_check_branch
        %2254 = sbr.rel (%p2252) target = $region80
      $region79: #{tpu_custom_call.1} parent=5 // pred_region
        %s2255 = ssub.s32 %s21, 2
        // Predicated region
        $region81: #{tpu_custom_call.1} parent=79 // pred_check
          %p2256 = pneg %p202
        $region82: #{tpu_custom_call.1} parent=79 // pred_check_branch
          %2258 = sbr.rel (%p2256) target = $region84
        $region83: #{tpu_custom_call.1} parent=79 // pred_region
          %s2259 = sand.u32 %s187, 1
          %s2260 = scalar_lea.sflag [#allocation3], %s2259
          %s2261 = sand.u32 %s187, 1
          %s2262 = smul.addr %s2261, 8
          %s2263 = scalar_lea.vmem [#allocation14], %s2262
          %2264 = dma.done %s2260, 128
        $region84: #{tpu_custom_call.1} parent=79 // pred_fallthru
          _
      $region80: #{tpu_custom_call.1} parent=5 // pred_fallthru
        _
    $region6: #{tpu_custom_call.1} parent=1 // loop_footer
      %s25 = sadd.s32 1, %s21
    $region7: #{tpu_custom_call.1} parent=1 // loop_footer_branch
      %20 = sbr.rel target = $region3
    $region8: #{tpu_custom_call.1} parent=1 // loop_exit
      _
    %2265 = vsyncpa [#allocation3], 1
    %s2266 = scalar_lea.sflag [#allocation3], 1
    %2267 = vsyncpa %s2266, 1
    %2268 = vsyncpa [#allocation4], 1
    %s2269 = scalar_lea.sflag [#allocation4], 1
    %2270 = vsyncpa %s2269, 1
    %2271 = vsyncpa [#allocation10], 1
    %2272 = vsyncpa [#allocation5], 1
    %s2273 = scalar_lea.sflag [#allocation5], 1
    %2274 = vsyncpa %s2273, 1
    %2275 = vsyncpa [#allocation7], 1
    %2276 = vsyncpa [#allocation13], 1

</llo_original>
